<compile_context>
chip_gen: v6e
topology: v6e:2x2x1
jax: 0.10.0
libtpu: 0.0.40
codegen_flags: <defaults>
</compile_context>

<pallas_src>
import functools

import jax
import jax.numpy as jnp
from jax import lax
from jax.experimental import pallas as pl
from jax.experimental.pallas import tpu as pltpu

LEAKY_SLOPE = 0.01   # nn.LeakyReLU default
BN_EPS = 1e-5        # nn.BatchNorm2d default


def _leaky(y):
    return jnp.where(y >= 0, y, LEAKY_SLOPE * y)


# -----------------------------------------------------------------------------
# Fused SSConv kernel (lane-interleaved layout: row = h, lane = w*C + c)
#   x_ref   : (B, H, W*Cin)        input images
#   wpt_ref : (W*Cin, W*Cout)      kron(I_W, BN-folded pointwise weight)
#   bpt_ref : (1, W*Cout)          BN-folded pointwise bias, tiled over W
#   wdt_ref : (K, W*Cout, W*Cout)  per-kh depthwise lane-mixing matrices
#                                  (taps + kw shifts + W-boundary masks)
#   bdt_ref : (1, W*Cout)          depthwise bias, tiled over W
#   o_ref   : (B, H, W*Cout)       output images
#   ypad_ref: (B, H+2*pad, W*Cout) VMEM scratch (H-halo padded intermediate)
# -----------------------------------------------------------------------------
def ssconv_kernel(x_ref, wpt_ref, bpt_ref, wdt_ref, bdt_ref, o_ref, ypad_ref,
                  *, H, K, B):
    pad = K // 2
    WCin = x_ref.shape[-1]
    WC = o_ref.shape[-1]

    # ---- Stage 1: (BN-folded) 1x1 conv as one MXU matmul + LeakyReLU --------
    x2d = x_ref[...].reshape(B * H, WCin)             # free leading-dim merge
    y2d = jnp.dot(x2d, wpt_ref[...],
                  preferred_element_type=jnp.float32,
                  precision=lax.Precision.HIGHEST)
    y2d = _leaky(y2d + bpt_ref[...])

    # ---- Stage 2: H-halo padding in VMEM; zero ONLY the halo row strips -----
    # (interior is fully overwritten below; no pl.when(step==0) so it stays
    #  correct when the parallel grid axis is megacore-sharded on v7x)
    halo = jnp.zeros((B, pad, WC), jnp.float32)
    ypad_ref[:, pl.ds(0, pad), :] = halo
    ypad_ref[:, pl.ds(pad + H, pad), :] = halo
    ypad_ref[:, pl.ds(pad, H), :] = y2d.reshape(B, H, WC)

    # ---- Stage 3: KxK depthwise conv as K lane-mixing MXU matmuls -----------
    # All kw shifts, W-boundary masks and per-channel taps were folded into
    # wdt outside the kernel: 5 sublane-offset reads + 5 matmuls replace the
    # 25 shifted window reads of the previous version.
    acc = jnp.zeros((B * H, WC), jnp.float32)
    for kh in range(K):
        win = ypad_ref[:, pl.ds(kh, H), :].reshape(B * H, WC)
        acc = acc + jnp.dot(win, wdt_ref[kh],
                            preferred_element_type=jnp.float32,
                            precision=lax.Precision.HIGHEST)
    o_ref[...] = _leaky(acc + bdt_ref[...]).reshape(B, H, WC)


def ssconv_fused(x_il, wpt, bpt, wdt, bdt, *, H, W, K, cout):
    N = x_il.shape[0]
    WCin = x_il.shape[-1]
    WC = W * cout
    pad = K // 2
    Hp = H + 2 * pad

    def step_bytes(b):
        blocks = 2 * b * H * WCin + 2 * b * H * WC          # double-buffered I/O
        scratch = b * Hp * WC
        weights = 2 * (WCin * WC + K * WC * WC + 2 * WC)    # double-buffered
        live = 4 * b * H * WC                               # values/accumulator
        return 4 * (blocks + scratch + weights + live)

    budget = 24 * 2 ** 20     # conservative: fits v7x's 32 MiB scoped VMEM
    if step_bytes(1) > budget:
        # TODO(synk): add an H-tile grid axis with a (K-1)-row halo (also a
        # second "parallel" axis so both v7x TensorCores get work at small N).
        raise ValueError("per-image working set exceeds the VMEM budget; "
                         "H-halo tiling required")

    # Images per grid step: amortize the ~0.35us/step fixed cost but keep
    # >= 2 steps so pipelining / v7x megacore sharding still have work.
    b_blk = 1
    for b in range(1, N + 1):
        if N % b:
            continue
        if step_bytes(b) > budget:
            break
        if N // b >= 2 or N == 1:
            b_blk = b

    kern = functools.partial(ssconv_kernel, H=H, K=K, B=b_blk)
    return pl.pallas_call(
        kern,
        out_shape=jax.ShapeDtypeStruct((N, H, WC), jnp.float32),
        grid=(N // b_blk,),
        in_specs=[
            pl.BlockSpec((b_blk, H, WCin), lambda n: (n, 0, 0)),
            pl.BlockSpec((WCin, WC), lambda n: (0, 0)),
            pl.BlockSpec((1, WC), lambda n: (0, 0)),
            pl.BlockSpec((K, WC, WC), lambda n: (0, 0, 0)),
            pl.BlockSpec((1, WC), lambda n: (0, 0)),
        ],
        out_specs=pl.BlockSpec((b_blk, H, WC), lambda n: (n, 0, 0)),
        scratch_shapes=[pltpu.VMEM((b_blk, Hp, WC), jnp.float32)],
        compiler_params=pltpu.CompilerParams(
            dimension_semantics=("parallel",),
            vmem_limit_bytes=32 * 1024 * 1024),
    )(x_il, wpt, bpt, wdt, bdt)


# -----------------------------------------------------------------------------
# SSConv forward (NCHW in / NCHW out, matching the PyTorch module)
# -----------------------------------------------------------------------------
def ssconv_forward(x_nchw, params):
    gamma = params["bn_gamma"].astype(jnp.float32)
    beta = params["bn_beta"].astype(jnp.float32)
    wp = params["point_w"].astype(jnp.float32)     # (Cout, Cin, 1, 1)
    bp = params["point_b"].astype(jnp.float32)     # (Cout,)
    wd = params["depth_w"].astype(jnp.float32)     # (Cout, 1, K, K)
    bd = params["depth_b"].astype(jnp.float32)     # (Cout,)

    N, Cin, H, W = x_nchw.shape
    Cout = wp.shape[0]
    K = wd.shape[-1]
    pad = K // 2
    WC = W * Cout

    if WC > 512:
        # TODO(synk): for large W*Cout the dense lane-mixing depthwise matrices
        # blow up; switch stage 3 to pltpu.roll + per-tap VPU FMAs instead.
        raise ValueError("W*Cout too large for the dense lane-mixing "
                         "depthwise formulation")

    x32 = x_nchw.astype(jnp.float32)

    # --- BatchNorm2d batch statistics (training-mode forward), one fused pass.
    # TODO(synk): compute these in the producer (or a tiny reduction kernel) to
    # avoid the extra full read of x.  Eval-mode running stats not handled.
    cnt = N * H * W
    s1 = jnp.sum(x32, axis=(0, 2, 3))
    s2 = jnp.sum(x32 * x32, axis=(0, 2, 3))
    mean = s1 / cnt
    var = jnp.maximum(s2 / cnt - mean * mean, 0.0)   # clamp: cancellation-safe
    inv_std = lax.rsqrt(var + BN_EPS)
    scale = gamma * inv_std                          # (Cin,)
    shift = beta - mean * scale                      # (Cin,)

    # --- Fold BN into the pointwise conv (affine absorbed by the 1x1) --------
    wp_mat = wp[:, :, 0, 0].T                        # (Cin, Cout)
    wfold = scale[:, None] * wp_mat                  # (Cin, Cout)
    bfold = bp + shift @ wp_mat                      # (Cout,)

    # --- Pack weights for the lane-interleaved layout -------------------------
    wpt = jnp.kron(jnp.eye(W, dtype=jnp.float32), wfold)     # (W*Cin, W*Cout)
    bpt = jnp.tile(bfold, W).reshape(1, WC)

    wd_k = wd[:, 0, :, :]                            # (Cout, K, K)
    lane_w = jnp.repeat(jnp.arange(W), Cout)         # w of each lane
    lane_c = jnp.tile(jnp.arange(Cout), W)           # c of each lane
    eye_wc = jnp.eye(WC, dtype=jnp.float32)
    rows = []
    for kh in range(K):
        m = jnp.zeros((WC, WC), jnp.float32)
        for kw in range(K):
            dw = kw - pad
            taps = wd_k[:, kh, kw][lane_c]                        # per-dst-lane tap
            valid = ((lane_w + dw >= 0) & (lane_w + dw < W)).astype(jnp.float32)
            shiftm = jnp.roll(eye_wc, dw * Cout, axis=0)          # src = dst + dw*C
            m = m + shiftm * (taps * valid)[None, :]
        rows.append(m)
    wdt = jnp.stack(rows)                            # (K, WC, WC)
    bdt = jnp.tile(bd, W).reshape(1, WC)

    # --- NCHW -> lane-interleaved NHWC boundary relayout (XLA glue) ----------
    # TODO(synk): keep the surrounding model NHWC / lane-interleaved so this
    # transpose and the one on the output (each a full HBM pass) disappear.
    x_il = jnp.transpose(x32, (0, 2, 3, 1)).reshape(N, H, W * Cin)

    z_il = ssconv_fused(x_il, wpt, bpt, wdt, bdt, H=H, W=W, K=K, cout=Cout)

    return jnp.transpose(z_il.reshape(N, H, W, Cout), (0, 3, 1, 2))


# -----------------------------------------------------------------------------
# Pure-JAX reference (mirrors the PyTorch forward) for a sanity check
# -----------------------------------------------------------------------------
def ssconv_reference(x, params):
    gamma, beta = params["bn_gamma"], params["bn_beta"]
    wp, bp = params["point_w"], params["point_b"]
    wd, bd = params["depth_w"], params["depth_b"]
    Cout = wp.shape[0]

    mean = jnp.mean(x, axis=(0, 2, 3), keepdims=True)
    var = jnp.mean((x - mean) ** 2, axis=(0, 2, 3), keepdims=True)
    xbn = (x - mean) / jnp.sqrt(var + BN_EPS) * gamma.reshape(1, -1, 1, 1) \
          + beta.reshape(1, -1, 1, 1)

    y = lax.conv_general_dilated(xbn, wp, (1, 1), "VALID",
                                 dimension_numbers=("NCHW", "OIHW", "NCHW"),
                                 precision=lax.Precision.HIGHEST)
    y = _leaky(y + bp.reshape(1, -1, 1, 1))
    z = lax.conv_general_dilated(y, wd, (1, 1), "SAME",
                                 feature_group_count=Cout,
                                 dimension_numbers=("NCHW", "OIHW", "NCHW"),
                                 precision=lax.Precision.HIGHEST)
    z = _leaky(z + bd.reshape(1, -1, 1, 1))
    return z


if __name__ == "__main__":
    in_ch, out_ch, ksize = 4, 8, 5
    N, H, W = 2, 16, 16

    key = jax.random.PRNGKey(0)
    kx, kwp, kbp, kwd, kbd, kg, kb = jax.random.split(key, 7)

    x = jax.random.normal(kx, (N, in_ch, H, W), jnp.float32)

    params = {
        "bn_gamma": 1.0 + 0.1 * jax.random.normal(kg, (in_ch,), jnp.float32),
        "bn_beta": 0.1 * jax.random.normal(kb, (in_ch,), jnp.float32),
        "point_w": 0.2 * jax.random.normal(kwp, (out_ch, in_ch, 1, 1), jnp.float32),
        "point_b": 0.1 * jax.random.normal(kbp, (out_ch,), jnp.float32),
        "depth_w": 0.2 * jax.random.normal(kwd, (out_ch, 1, ksize, ksize), jnp.float32),
        "depth_b": 0.1 * jax.random.normal(kbd, (out_ch,), jnp.float32),
    }

    fwd = jax.jit(ssconv_forward)
    out = jax.block_until_ready(fwd(x, params))
    ref = jax.block_until_ready(ssconv_reference(x, params))

    assert out.shape == (N, out_ch, H, W), out.shape
    max_err = float(jnp.max(jnp.abs(out - ref)))
    assert jnp.allclose(out, ref, atol=1e-4, rtol=1e-4), max_err

    print("KERNEL_OK")
</pallas_src>

<mosaic_0001>
module attributes {stable_mosaic.version = 11 : i64} {
  func.func @ssconv_kernel(%arg0: i32, %arg1: memref<1x16x64xf32, #tpu.memory_space<vmem>>, %arg2: memref<64x128xf32, #tpu.memory_space<vmem>>, %arg3: memref<1x128xf32, #tpu.memory_space<vmem>>, %arg4: memref<5x128x128xf32, #tpu.memory_space<vmem>>, %arg5: memref<1x128xf32, #tpu.memory_space<vmem>>, %arg6: memref<1x16x128xf32, #tpu.memory_space<vmem>>, %arg7: memref<1x20x128xf32, #tpu.memory_space<vmem>>) attributes {dimension_semantics = [#tpu.dimension_semantics<parallel>], iteration_bounds = array<i64: 2>, scalar_prefetch = 0 : i64, scratch_operands = 1 : i64, tpu.core_type = #tpu.core_type<tc>, window_params = [{transform_indices = @transform_0, window_bounds = array<i64: 1, 16, 64>}, {pipeline_mode = #tpu.pipeline_mode<synchronous>, transform_indices = @transform_1, window_bounds = array<i64: 64, 128>}, {pipeline_mode = #tpu.pipeline_mode<synchronous>, transform_indices = @transform_2, window_bounds = array<i64: 1, 128>}, {pipeline_mode = #tpu.pipeline_mode<synchronous>, transform_indices = @transform_3, window_bounds = array<i64: 5, 128, 128>}, {pipeline_mode = #tpu.pipeline_mode<synchronous>, transform_indices = @transform_4, window_bounds = array<i64: 1, 128>}, {transform_indices = @transform_5, window_bounds = array<i64: 1, 16, 128>}]} {
    %c0 = arith.constant 0 : index
    %c0_0 = arith.constant 0 : index
    %c0_1 = arith.constant 0 : index
    %0 = vector.load %arg1[%c0, %c0_0, %c0_1] : memref<1x16x64xf32, #tpu.memory_space<vmem>>, vector<1x16x64xf32>
    %1 = vector.shape_cast %0 : vector<1x16x64xf32> to vector<16x64xf32>
    %c0_2 = arith.constant 0 : index
    %c0_3 = arith.constant 0 : index
    %2 = vector.load %arg2[%c0_2, %c0_3] : memref<64x128xf32, #tpu.memory_space<vmem>>, vector<64x128xf32>
    %cst = arith.constant dense<0.000000e+00> : vector<16x128xf32>
    %3 = tpu.matmul %1, %2, %cst {dimension_numbers = #tpu.dot_dimension_numbers<[1], [0], [0], [1], [0, 0, 1, 1], [], []>, precision = #tpu.contract_precision<fp32>} : vector<16x64xf32>, vector<64x128xf32>, vector<16x128xf32> -> vector<16x128xf32>
    %c0_4 = arith.constant 0 : index
    %c0_5 = arith.constant 0 : index
    %4 = vector.load %arg3[%c0_4, %c0_5] : memref<1x128xf32, #tpu.memory_space<vmem>>, vector<1x128xf32>
    %5 = vector.broadcast %4 : vector<1x128xf32> to vector<16x128xf32>
    %6 = arith.addf %3, %5 : vector<16x128xf32>
    %cst_6 = arith.constant 0.000000e+00 : f32
    %7 = vector.broadcast %cst_6 : f32 to vector<16x128xf32>
    %8 = arith.cmpf oge, %6, %7 : vector<16x128xf32>
    %cst_7 = arith.constant 0.00999999977 : f32
    %9 = vector.broadcast %cst_7 : f32 to vector<16x128xf32>
    %10 = arith.mulf %9, %6 : vector<16x128xf32>
    %11 = arith.select %8, %6, %10 : vector<16x128xi1>, vector<16x128xf32>
    %cst_8 = arith.constant 0.000000e+00 : f32
    %12 = vector.broadcast %cst_8 : f32 to vector<1x2x128xf32>
    %c0_9 = arith.constant 0 : index
    %c0_10 = arith.constant 0 : index
    %c0_11 = arith.constant 0 : index
    %13 = vector.load %arg7[%c0_9, %c0_10, %c0_11] : memref<1x20x128xf32, #tpu.memory_space<vmem>>, vector<1x2x128xf32>
    tpu.vector_store %arg7[%c0_9, %c0_10, %c0_11], %12 {strides = array<i32>} : memref<1x20x128xf32, #tpu.memory_space<vmem>>, vector<1x2x128xf32>,
    %c0_12 = arith.constant 0 : index
    %c18 = arith.constant 18 : index
    %c0_13 = arith.constant 0 : index
    %14 = vector.load %arg7[%c0_12, %c18, %c0_13] : memref<1x20x128xf32, #tpu.memory_space<vmem>>, vector<1x2x128xf32>
    tpu.vector_store %arg7[%c0_12, %c18, %c0_13], %12 {strides = array<i32>} : memref<1x20x128xf32, #tpu.memory_space<vmem>>, vector<1x2x128xf32>,
    %15 = vector.shape_cast %11 : vector<16x128xf32> to vector<1x16x128xf32>
    %c0_14 = arith.constant 0 : index
    %c2 = arith.constant 2 : index
    %c0_15 = arith.constant 0 : index
    %16 = vector.load %arg7[%c0_14, %c2, %c0_15] : memref<1x20x128xf32, #tpu.memory_space<vmem>>, vector<1x16x128xf32>
    tpu.vector_store %arg7[%c0_14, %c2, %c0_15], %15 {strides = array<i32>} : memref<1x20x128xf32, #tpu.memory_space<vmem>>, vector<1x16x128xf32>,
    %cst_16 = arith.constant 0.000000e+00 : f32
    %17 = vector.broadcast %cst_16 : f32 to vector<16x128xf32>
    %c0_17 = arith.constant 0 : index
    %c0_18 = arith.constant 0 : index
    %c0_19 = arith.constant 0 : index
    %18 = vector.load %arg7[%c0_17, %c0_18, %c0_19] : memref<1x20x128xf32, #tpu.memory_space<vmem>>, vector<1x16x128xf32>
    %19 = vector.shape_cast %18 : vector<1x16x128xf32> to vector<16x128xf32>
    %c0_20 = arith.constant 0 : index
    %c0_21 = arith.constant 0 : index
    %c0_22 = arith.constant 0 : index
    %20 = vector.load %arg4[%c0_20, %c0_21, %c0_22] : memref<5x128x128xf32, #tpu.memory_space<vmem>>, vector<1x128x128xf32>
    %21 = vector.shape_cast %20 : vector<1x128x128xf32> to vector<128x128xf32>
    %cst_23 = arith.constant dense<0.000000e+00> : vector<16x128xf32>
    %22 = tpu.matmul %19, %21, %cst_23 {dimension_numbers = #tpu.dot_dimension_numbers<[1], [0], [0], [1], [0, 0, 1, 1], [], []>, precision = #tpu.contract_precision<fp32>} : vector<16x128xf32>, vector<128x128xf32>, vector<16x128xf32> -> vector<16x128xf32>
    %23 = arith.addf %17, %22 : vector<16x128xf32>
    %c0_24 = arith.constant 0 : index
    %c1 = arith.constant 1 : index
    %c0_25 = arith.constant 0 : index
    %24 = vector.load %arg7[%c0_24, %c1, %c0_25] : memref<1x20x128xf32, #tpu.memory_space<vmem>>, vector<1x16x128xf32>
    %25 = vector.shape_cast %24 : vector<1x16x128xf32> to vector<16x128xf32>
    %c1_26 = arith.constant 1 : index
    %c0_27 = arith.constant 0 : index
    %c0_28 = arith.constant 0 : index
    %26 = vector.load %arg4[%c1_26, %c0_27, %c0_28] : memref<5x128x128xf32, #tpu.memory_space<vmem>>, vector<1x128x128xf32>
    %27 = vector.shape_cast %26 : vector<1x128x128xf32> to vector<128x128xf32>
    %cst_29 = arith.constant dense<0.000000e+00> : vector<16x128xf32>
    %28 = tpu.matmul %25, %27, %cst_29 {dimension_numbers = #tpu.dot_dimension_numbers<[1], [0], [0], [1], [0, 0, 1, 1], [], []>, precision = #tpu.contract_precision<fp32>} : vector<16x128xf32>, vector<128x128xf32>, vector<16x128xf32> -> vector<16x128xf32>
    %29 = arith.addf %23, %28 : vector<16x128xf32>
    %c0_30 = arith.constant 0 : index
    %c2_31 = arith.constant 2 : index
    %c0_32 = arith.constant 0 : index
    %30 = vector.load %arg7[%c0_30, %c2_31, %c0_32] : memref<1x20x128xf32, #tpu.memory_space<vmem>>, vector<1x16x128xf32>
    %31 = vector.shape_cast %30 : vector<1x16x128xf32> to vector<16x128xf32>
    %c2_33 = arith.constant 2 : index
    %c0_34 = arith.constant 0 : index
    %c0_35 = arith.constant 0 : index
    %32 = vector.load %arg4[%c2_33, %c0_34, %c0_35] : memref<5x128x128xf32, #tpu.memory_space<vmem>>, vector<1x128x128xf32>
    %33 = vector.shape_cast %32 : vector<1x128x128xf32> to vector<128x128xf32>
    %cst_36 = arith.constant dense<0.000000e+00> : vector<16x128xf32>
    %34 = tpu.matmul %31, %33, %cst_36 {dimension_numbers = #tpu.dot_dimension_numbers<[1], [0], [0], [1], [0, 0, 1, 1], [], []>, precision = #tpu.contract_precision<fp32>} : vector<16x128xf32>, vector<128x128xf32>, vector<16x128xf32> -> vector<16x128xf32>
    %35 = arith.addf %29, %34 : vector<16x128xf32>
    %c0_37 = arith.constant 0 : index
    %c3 = arith.constant 3 : index
    %c0_38 = arith.constant 0 : index
    %36 = vector.load %arg7[%c0_37, %c3, %c0_38] : memref<1x20x128xf32, #tpu.memory_space<vmem>>, vector<1x16x128xf32>
    %37 = vector.shape_cast %36 : vector<1x16x128xf32> to vector<16x128xf32>
    %c3_39 = arith.constant 3 : index
    %c0_40 = arith.constant 0 : index
    %c0_41 = arith.constant 0 : index
    %38 = vector.load %arg4[%c3_39, %c0_40, %c0_41] : memref<5x128x128xf32, #tpu.memory_space<vmem>>, vector<1x128x128xf32>
    %39 = vector.shape_cast %38 : vector<1x128x128xf32> to vector<128x128xf32>
    %cst_42 = arith.constant dense<0.000000e+00> : vector<16x128xf32>
    %40 = tpu.matmul %37, %39, %cst_42 {dimension_numbers = #tpu.dot_dimension_numbers<[1], [0], [0], [1], [0, 0, 1, 1], [], []>, precision = #tpu.contract_precision<fp32>} : vector<16x128xf32>, vector<128x128xf32>, vector<16x128xf32> -> vector<16x128xf32>
    %41 = arith.addf %35, %40 : vector<16x128xf32>
    %c0_43 = arith.constant 0 : index
    %c4 = arith.constant 4 : index
    %c0_44 = arith.constant 0 : index
    %42 = vector.load %arg7[%c0_43, %c4, %c0_44] : memref<1x20x128xf32, #tpu.memory_space<vmem>>, vector<1x16x128xf32>
    %43 = vector.shape_cast %42 : vector<1x16x128xf32> to vector<16x128xf32>
    %c4_45 = arith.constant 4 : index
    %c0_46 = arith.constant 0 : index
    %c0_47 = arith.constant 0 : index
    %44 = vector.load %arg4[%c4_45, %c0_46, %c0_47] : memref<5x128x128xf32, #tpu.memory_space<vmem>>, vector<1x128x128xf32>
    %45 = vector.shape_cast %44 : vector<1x128x128xf32> to vector<128x128xf32>
    %cst_48 = arith.constant dense<0.000000e+00> : vector<16x128xf32>
    %46 = tpu.matmul %43, %45, %cst_48 {dimension_numbers = #tpu.dot_dimension_numbers<[1], [0], [0], [1], [0, 0, 1, 1], [], []>, precision = #tpu.contract_precision<fp32>} : vector<16x128xf32>, vector<128x128xf32>, vector<16x128xf32> -> vector<16x128xf32>
    %47 = arith.addf %41, %46 : vector<16x128xf32>
    %c0_49 = arith.constant 0 : index
    %c0_50 = arith.constant 0 : index
    %48 = vector.load %arg5[%c0_49, %c0_50] : memref<1x128xf32, #tpu.memory_space<vmem>>, vector<1x128xf32>
    %49 = vector.broadcast %48 : vector<1x128xf32> to vector<16x128xf32>
    %50 = arith.addf %47, %49 : vector<16x128xf32>
    %cst_51 = arith.constant 0.000000e+00 : f32
    %51 = vector.broadcast %cst_51 : f32 to vector<16x128xf32>
    %52 = arith.cmpf oge, %50, %51 : vector<16x128xf32>
    %cst_52 = arith.constant 0.00999999977 : f32
    %53 = vector.broadcast %cst_52 : f32 to vector<16x128xf32>
    %54 = arith.mulf %53, %50 : vector<16x128xf32>
    %55 = arith.select %52, %50, %54 : vector<16x128xi1>, vector<16x128xf32>
    %56 = vector.shape_cast %55 : vector<16x128xf32> to vector<1x16x128xf32>
    %c0_53 = arith.constant 0 : index
    %c0_54 = arith.constant 0 : index
    %c0_55 = arith.constant 0 : index
    %57 = vector.load %arg6[%c0_53, %c0_54, %c0_55] : memref<1x16x128xf32, #tpu.memory_space<vmem>>, vector<1x16x128xf32>
    tpu.vector_store %arg6[%c0_53, %c0_54, %c0_55], %56 {strides = array<i32>} : memref<1x16x128xf32, #tpu.memory_space<vmem>>, vector<1x16x128xf32>,
    return
  }
  func.func @transform_0(%arg0: i32) -> (i32, i32, i32) {
    %c0_i32 = arith.constant 0 : i32
    %c0_i32_0 = arith.constant 0 : i32
    %c0_i32_1 = arith.constant 0 : i32
    return %arg0, %c0_i32, %c0_i32_0 : i32, i32, i32
  }
  func.func @transform_1(%arg0: i32) -> (i32, i32) {
    %c0_i32 = arith.constant 0 : i32
    %c0_i32_0 = arith.constant 0 : i32
    %c0_i32_1 = arith.constant 0 : i32
    return %c0_i32, %c0_i32_0 : i32, i32
  }
  func.func @transform_2(%arg0: i32) -> (i32, i32) {
    %c0_i32 = arith.constant 0 : i32
    %c0_i32_0 = arith.constant 0 : i32
    %c0_i32_1 = arith.constant 0 : i32
    return %c0_i32, %c0_i32_0 : i32, i32
  }
  func.func @transform_3(%arg0: i32) -> (i32, i32, i32) {
    %c0_i32 = arith.constant 0 : i32
    %c0_i32_0 = arith.constant 0 : i32
    %c0_i32_1 = arith.constant 0 : i32
    %c0_i32_2 = arith.constant 0 : i32
    return %c0_i32, %c0_i32_0, %c0_i32_1 : i32, i32, i32
  }
  func.func @transform_4(%arg0: i32) -> (i32, i32) {
    %c0_i32 = arith.constant 0 : i32
    %c0_i32_0 = arith.constant 0 : i32
    %c0_i32_1 = arith.constant 0 : i32
    return %c0_i32, %c0_i32_0 : i32, i32
  }
  func.func @transform_5(%arg0: i32) -> (i32, i32, i32) {
    %c0_i32 = arith.constant 0 : i32
    %c0_i32_0 = arith.constant 0 : i32
    %c0_i32_1 = arith.constant 0 : i32
    return %arg0, %c0_i32, %c0_i32_0 : i32, i32, i32
  }
}

</mosaic_0001>

<llo_original>
// kernel: tile.18
$region0: #{tile.18}
  #allocation0 [shape = 's32[1]{0}', space=sflag, size = 0x4, scoped, tag = 'scoped memory for tile.18']
  %s0 = inlined_call_operand.vmem [shape: f32[8], index: 0, kind: input, shape index: {}]
  %s1 = inlined_call_operand.vmem [shape: f32[16,8], index: 1, kind: output, shape index: {}]
  // Predicated region
  $region2: #{tile.18} parent=0 // pred_check
    _
  $region3: #{tile.18} parent=0 // pred_check_branch
    %3 = sbr.rel (0) target = $region5
  $region4: #{tile.18} parent=0 // pred_region
    _
  $region5: #{tile.18} parent=0 // pred_fallthru
    _
  %v4 = vld [vmem:[%s0] ss:$0 sm:$0xff]
  %5 = vst [vmem:[%s1] sm:$0xff] %v4
  %s6 = scalar_lea.vmem %s1, 8
  %7 = vst [vmem:[%s6] sm:$0xff] %v4

// kernel: tile.19
$region0: #{tile.19}
  %s0 = inlined_call_operand.vmem [shape: f32[16,8], index: 0, kind: input, shape index: {}]
  %s1 = inlined_call_operand.vmem [shape: f32[1,128], index: 1, kind: output, shape index: {}]
  $region1: #{tile.19} parent=0
    #allocation0 [shape = 'u8[4096]{0}', space=vmem, size = 0x1000, scoped, tag = 'scoped mem for output reshape']
    %v2 = vld [vmem:[%s0] sm:$0x1]
    %vm3 = vcmask 64512
    %4 = vst.msk [vmem:[#allocation0] sm:$0x1] %vm3, %v2
    %s5 = scalar_lea.vmem %s0, 15
    %v6 = vld [vmem:[%s5] sm:$0x1]
    %7 = vrot.lane.b32.xlu0 %v6, 120
    %v8 = vpop.permute.xlu0 %7
    %vm9 = vcmask 1048512
    %10 = vst.msk [vmem:[#allocation0] sm:$0x1] %vm9, %v8
    %s11 = scalar_lea.vmem %s0, 14
    %v12 = vld [vmem:[%s11] sm:$0x1]
    %13 = vrot.lane.b32.xlu0 %v12, 112
    %v14 = vpop.permute.xlu0 %13
    %vm15 = vcmask 982912
    %16 = vst.msk [vmem:[#allocation0] sm:$0x1] %vm15, %v14
    %s17 = scalar_lea.vmem %s0, 13
    %v18 = vld [vmem:[%s17] sm:$0x1]
    %19 = vrot.lane.b32.xlu0 %v18, 104
    %v20 = vpop.permute.xlu0 %19
    %vm21 = vcmask 917312
    %22 = vst.msk [vmem:[#allocation0] sm:$0x1] %vm21, %v20
    %s23 = scalar_lea.vmem %s0, 12
    %v24 = vld [vmem:[%s23] sm:$0x1]
    %25 = vrot.lane.b32.xlu0 %v24, 96
    %v26 = vpop.permute.xlu0 %25
    %vm27 = vcmask 851712
    %28 = vst.msk [vmem:[#allocation0] sm:$0x1] %vm27, %v26
    %s29 = scalar_lea.vmem %s0, 11
    %v30 = vld [vmem:[%s29] sm:$0x1]
    %31 = vrot.lane.b32.xlu0 %v30, 88
    %v32 = vpop.permute.xlu0 %31
    %vm33 = vcmask 786112
    %34 = vst.msk [vmem:[#allocation0] sm:$0x1] %vm33, %v32
    %s35 = scalar_lea.vmem %s0, 10
    %v36 = vld [vmem:[%s35] sm:$0x1]
    %37 = vrot.lane.b32.xlu0 %v36, 80
    %v38 = vpop.permute.xlu0 %37
    %vm39 = vcmask 720512
    %40 = vst.msk [vmem:[#allocation0] sm:$0x1] %vm39, %v38
    %s41 = scalar_lea.vmem %s0, 9
    %v42 = vld [vmem:[%s41] sm:$0x1]
    %43 = vrot.lane.b32.xlu0 %v42, 72
    %v44 = vpop.permute.xlu0 %43
    %vm45 = vcmask 654912
    %46 = vst.msk [vmem:[#allocation0] sm:$0x1] %vm45, %v44
    %s47 = scalar_lea.vmem %s0, 8
    %v48 = vld [vmem:[%s47] sm:$0x1]
    %49 = vrot.lane.b32.xlu0 %v48, 64
    %v50 = vpop.permute.xlu0 %49
    %vm51 = vcmask 589312
    %52 = vst.msk [vmem:[#allocation0] sm:$0x1] %vm51, %v50
    %s53 = scalar_lea.vmem %s0, 7
    %v54 = vld [vmem:[%s53] sm:$0x1]
    %55 = vrot.lane.b32.xlu0 %v54, 56
    %v56 = vpop.permute.xlu0 %55
    %vm57 = vcmask 523712
    %58 = vst.msk [vmem:[#allocation0] sm:$0x1] %vm57, %v56
    %s59 = scalar_lea.vmem %s0, 6
    %v60 = vld [vmem:[%s59] sm:$0x1]
    %61 = vrot.lane.b32.xlu0 %v60, 48
    %v62 = vpop.permute.xlu0 %61
    %vm63 = vcmask 458112
    %64 = vst.msk [vmem:[#allocation0] sm:$0x1] %vm63, %v62
    %s65 = scalar_lea.vmem %s0, 5
    %v66 = vld [vmem:[%s65] sm:$0x1]
    %67 = vrot.lane.b32.xlu0 %v66, 40
    %v68 = vpop.permute.xlu0 %67
    %vm69 = vcmask 392512
    %70 = vst.msk [vmem:[#allocation0] sm:$0x1] %vm69, %v68
    %s71 = scalar_lea.vmem %s0, 4
    %v72 = vld [vmem:[%s71] sm:$0x1]
    %73 = vrot.lane.b32.xlu0 %v72, 32
    %v74 = vpop.permute.xlu0 %73
    %vm75 = vcmask 326912
    %76 = vst.msk [vmem:[#allocation0] sm:$0x1] %vm75, %v74
    %s77 = scalar_lea.vmem %s0, 3
    %v78 = vld [vmem:[%s77] sm:$0x1]
    %79 = vrot.lane.b32.xlu0 %v78, 24
    %v80 = vpop.permute.xlu0 %79
    %vm81 = vcmask 261312
    %82 = vst.msk [vmem:[#allocation0] sm:$0x1] %vm81, %v80
    %s83 = scalar_lea.vmem %s0, 2
    %v84 = vld [vmem:[%s83] sm:$0x1]
    %85 = vrot.lane.b32.xlu0 %v84, 16
    %v86 = vpop.permute.xlu0 %85
    %vm87 = vcmask 195712
    %88 = vst.msk [vmem:[#allocation0] sm:$0x1] %vm87, %v86
    %s89 = scalar_lea.vmem %s0, 1
    %v90 = vld [vmem:[%s89] sm:$0x1]
    %91 = vrot.lane.b32.xlu0 %v90, 8
    %v92 = vpop.permute.xlu0 %91
    %vm93 = vcmask 130112
    %94 = vst.msk [vmem:[#allocation0] sm:$0x1] %vm93, %v92
    %s96 = sshll.u32 1, 1
    %s97 = ssub.s32 %s96, 1
    %v99 = vld [vmem:[#allocation0] sm:%s97]
    %s100 = sshll.u32 1, 1
    %s101 = ssub.s32 %s100, 1
    %102 = vst [vmem:[%s1] sm:%s101] %v99

// kernel: ssconv_forward.1
$region0: #{ssconv_forward.1}
  #allocation0 [shape = 'u32[]', space=smem, size = 0x4, offset = 0x4, fixed_abs, tag = 'smem constant byte address 0x4 - core index']
  #allocation1 [shape = 'u32[144,128]{1,0:T(1,128)}', space=vmem, size = 0x12000, scoped, tag = 'internal scratch']
  #allocation2 [shape = 'f32[1,20,128]{2,1,0:T(8,128)}', space=vmem, size = 0x3000, scoped, tag = 'scratch operand']
  %s0 = inlined_call_operand.vmem [shape: f32[2,16,64], index: 0, kind: input, shape index: {}]
  %s1 = inlined_call_operand.vmem [shape: f32[64,128], index: 1, kind: input, shape index: {}]
  %s2 = inlined_call_operand.vmem [shape: f32[1,128], index: 2, kind: input, shape index: {}]
  %s3 = inlined_call_operand.vmem [shape: f32[5,128,128], index: 3, kind: input, shape index: {}]
  %s4 = inlined_call_operand.vmem [shape: f32[1,128], index: 4, kind: input, shape index: {}]
  %s5 = inlined_call_operand.vmem [shape: f32[2,16,128], index: 5, kind: output, shape index: {}]
  %s6 = sld [smem:[#allocation0]]
  $region53: #{ssconv_forward.1} parent=0
    _
  %s8 = ssub.s32 1, %s6
  %s9 = scalar_select 0, %s8, %s6
  loop: start=0, step=1, limit=4
  $region2: #{ssconv_forward.1} parent=0 // loop_pre_header
    _
  $region3: #{ssconv_forward.1} parent=0 // loop_header
    %s11 = sphi 0, %s15
    %p12 = scmp.ge.s32.totalorder %s11, 4
    %s21 = sphi 0, %s23
    %s24 = sphi 0, %s21
    %s25 = sphi 0, %s24
    %s41 = sphi 0, %s25
    %s45 = sphi 0, %s45
    %s47 = sphi 0, %s45
    %s48 = sphi 0, %s47
    %s62 = sphi 0, %s48
    %s66 = sphi 0, %s66
    %s68 = sphi 0, %s66
    %s69 = sphi 0, %s68
    %s83 = sphi 0, %s69
    %s87 = sphi 0, %s87
    %s89 = sphi 0, %s87
    %s90 = sphi 0, %s89
    %s104 = sphi 0, %s90
    %s108 = sphi 0, %s108
    %s110 = sphi 0, %s108
    %s111 = sphi 0, %s110
    %s125 = sphi 0, %s111
    %s131 = sphi 0, %s133
    %s134 = sphi 0, %s131
    %s135 = sphi 0, %s134
    %s151 = sphi 0, %s135
  $region4: #{ssconv_forward.1} parent=0 // loop_header_branch
    %14 = sbr.rel (%p12) target = $region8
  $region5: #{ssconv_forward.1} parent=0 // loop_body
    %s16 = ssub.s32 %s11, 1
    %s17 = ssub.s32 %s11, 2
    %s18 = sadd.s32 %s11, 1
    %s19 = ssub.s32 %s11, %s18
    %p20 = scmp.eq.s32.totalorder %s19, 0
    %s22 = sadd.s32 %s21, 1
    %s23 = scalar_select %p20, %s21, %s22
    %p26 = pneg %p20
    %p27 = scmp.eq.s32.totalorder %s11, 1
    %p28 = por %p26, %p27
    %p29 = scmp.ne.s32.totalorder %s21, %s24
    %p30 = scmp.eq.s32.totalorder %s11, 0
    %p31 = por %p29, %p30
    %p32 = scmp.ne.s32.totalorder %s21, %s24
    %p33 = scmp.eq.s32.totalorder %s16, 1
    %p34 = por %p32, %p33
    %p35 = scmp.ne.s32.totalorder %s24, %s25
    %p36 = scmp.eq.s32.totalorder %s16, 0
    %p37 = por %p35, %p36
    %p38 = scmp.ne.s32.totalorder %s24, %s25
    %p39 = scmp.eq.s32.totalorder %s17, 1
    %p40 = por %p38, %p39
    %p42 = scmp.ne.s32.totalorder %s25, %s41
    %p43 = scmp.eq.s32.totalorder %s17, 0
    %p44 = por %p42, %p43
    %s46 = sadd.s32 %s45, 1
    %p49 = scmp.eq.s32.totalorder %s11, 1
    %p50 = scmp.ne.s32.totalorder %s45, %s47
    %p51 = scmp.eq.s32.totalorder %s11, 0
    %p52 = por %p50, %p51
    %p53 = scmp.ne.s32.totalorder %s45, %s47
    %p54 = scmp.eq.s32.totalorder %s16, 1
    %p55 = por %p53, %p54
    %p56 = scmp.ne.s32.totalorder %s47, %s48
    %p57 = scmp.eq.s32.totalorder %s16, 0
    %p58 = por %p56, %p57
    %p59 = scmp.ne.s32.totalorder %s47, %s48
    %p60 = scmp.eq.s32.totalorder %s17, 1
    %p61 = por %p59, %p60
    %p63 = scmp.ne.s32.totalorder %s48, %s62
    %p64 = scmp.eq.s32.totalorder %s17, 0
    %p65 = por %p63, %p64
    %s67 = sadd.s32 %s66, 1
    %p70 = scmp.eq.s32.totalorder %s11, 1
    %p71 = scmp.ne.s32.totalorder %s66, %s68
    %p72 = scmp.eq.s32.totalorder %s11, 0
    %p73 = por %p71, %p72
    %p74 = scmp.ne.s32.totalorder %s66, %s68
    %p75 = scmp.eq.s32.totalorder %s16, 1
    %p76 = por %p74, %p75
    %p77 = scmp.ne.s32.totalorder %s68, %s69
    %p78 = scmp.eq.s32.totalorder %s16, 0
    %p79 = por %p77, %p78
    %p80 = scmp.ne.s32.totalorder %s68, %s69
    %p81 = scmp.eq.s32.totalorder %s17, 1
    %p82 = por %p80, %p81
    %p84 = scmp.ne.s32.totalorder %s69, %s83
    %p85 = scmp.eq.s32.totalorder %s17, 0
    %p86 = por %p84, %p85
    %s88 = sadd.s32 %s87, 1
    %p91 = scmp.eq.s32.totalorder %s11, 1
    %p92 = scmp.ne.s32.totalorder %s87, %s89
    %p93 = scmp.eq.s32.totalorder %s11, 0
    %p94 = por %p92, %p93
    %p95 = scmp.ne.s32.totalorder %s87, %s89
    %p96 = scmp.eq.s32.totalorder %s16, 1
    %p97 = por %p95, %p96
    %p98 = scmp.ne.s32.totalorder %s89, %s90
    %p99 = scmp.eq.s32.totalorder %s16, 0
    %p100 = por %p98, %p99
    %p101 = scmp.ne.s32.totalorder %s89, %s90
    %p102 = scmp.eq.s32.totalorder %s17, 1
    %p103 = por %p101, %p102
    %p105 = scmp.ne.s32.totalorder %s90, %s104
    %p106 = scmp.eq.s32.totalorder %s17, 0
    %p107 = por %p105, %p106
    %s109 = sadd.s32 %s108, 1
    %p112 = scmp.eq.s32.totalorder %s11, 1
    %p113 = scmp.ne.s32.totalorder %s108, %s110
    %p114 = scmp.eq.s32.totalorder %s11, 0
    %p115 = por %p113, %p114
    %p116 = scmp.ne.s32.totalorder %s108, %s110
    %p117 = scmp.eq.s32.totalorder %s16, 1
    %p118 = por %p116, %p117
    %p119 = scmp.ne.s32.totalorder %s110, %s111
    %p120 = scmp.eq.s32.totalorder %s16, 0
    %p121 = por %p119, %p120
    %p122 = scmp.ne.s32.totalorder %s110, %s111
    %p123 = scmp.eq.s32.totalorder %s17, 1
    %p124 = por %p122, %p123
    %p126 = scmp.ne.s32.totalorder %s111, %s125
    %p127 = scmp.eq.s32.totalorder %s17, 0
    %p128 = por %p126, %p127
    %s129 = ssub.s32 %s11, %s18
    %p130 = scmp.eq.s32.totalorder %s129, 0
    %s132 = sadd.s32 %s131, 1
    %s133 = scalar_select %p130, %s131, %s132
    %p136 = pneg %p130
    %p137 = scmp.eq.s32.totalorder %s11, 1
    %p138 = por %p136, %p137
    %p139 = scmp.ne.s32.totalorder %s131, %s134
    %p140 = scmp.eq.s32.totalorder %s11, 0
    %p141 = por %p139, %p140
    %p142 = scmp.ne.s32.totalorder %s131, %s134
    %p143 = scmp.eq.s32.totalorder %s16, 1
    %p144 = por %p142, %p143
    %p145 = scmp.ne.s32.totalorder %s134, %s135
    %p146 = scmp.eq.s32.totalorder %s16, 0
    %p147 = por %p145, %p146
    %p148 = scmp.ne.s32.totalorder %s134, %s135
    %p149 = scmp.eq.s32.totalorder %s17, 1
    %p150 = por %p148, %p149
    %p152 = scmp.ne.s32.totalorder %s135, %s151
    %p153 = scmp.eq.s32.totalorder %s17, 0
    %p154 = por %p152, %p153
    %p155 = scmp.le.s32.totalorder 1, %s11
    %p156 = scmp.lt.s32.totalorder %s11, 3
    %p157 = pnand %p155, %p156
    %p158 = pneg %p157
    // Predicated region
    $region9: #{ssconv_forward.1} parent=5 // pred_check
      _
    $region10: #{ssconv_forward.1} parent=5 // pred_check_branch
      %160 = sbr.rel (%p157) target = $region12
    $region11: #{ssconv_forward.1} parent=5 // pred_region
      %s161 = ssub.s32 %s11, 1
      // Predicated region
      $region13: #{ssconv_forward.1} parent=11 // pred_check
        %p162 = pneg %p58
      $region14: #{ssconv_forward.1} parent=11 // pred_check_branch
        %164 = sbr.rel (%p162) target = $region16
      $region15: #{ssconv_forward.1} parent=11 // pred_region
        _
      $region16: #{ssconv_forward.1} parent=11 // pred_fallthru
        _
      // Predicated region
      $region17: #{ssconv_forward.1} parent=11 // pred_check
        %p165 = pneg %p79
      $region18: #{ssconv_forward.1} parent=11 // pred_check_branch
        %167 = sbr.rel (%p165) target = $region20
      $region19: #{ssconv_forward.1} parent=11 // pred_region
        _
      $region20: #{ssconv_forward.1} parent=11 // pred_fallthru
        _
      // Predicated region
      $region21: #{ssconv_forward.1} parent=11 // pred_check
        %p168 = pneg %p100
      $region22: #{ssconv_forward.1} parent=11 // pred_check_branch
        %170 = sbr.rel (%p168) target = $region24
      $region23: #{ssconv_forward.1} parent=11 // pred_region
        _
      $region24: #{ssconv_forward.1} parent=11 // pred_fallthru
        _
      // Predicated region
      $region25: #{ssconv_forward.1} parent=11 // pred_check
        %p171 = pneg %p121
      $region26: #{ssconv_forward.1} parent=11 // pred_check_branch
        %173 = sbr.rel (%p171) target = $region28
      $region27: #{ssconv_forward.1} parent=11 // pred_region
        _
      $region28: #{ssconv_forward.1} parent=11 // pred_fallthru
        _
    $region12: #{ssconv_forward.1} parent=5 // pred_fallthru
      _
    %p174 = scmp.lt.s32.totalorder %s11, 2
    // Predicated region
    $region29: #{ssconv_forward.1} parent=5 // pred_check
      %p175 = pneg %p174
    $region30: #{ssconv_forward.1} parent=5 // pred_check_branch
      %177 = sbr.rel (%p175) target = $region32
    $region31: #{ssconv_forward.1} parent=5 // pred_region
      // Predicated region
      $region33: #{ssconv_forward.1} parent=31 // pred_check
        %p178 = pneg %p31
      $region34: #{ssconv_forward.1} parent=31 // pred_check_branch
        %180 = sbr.rel (%p178) target = $region36
      $region35: #{ssconv_forward.1} parent=31 // pred_region
        %p181 = scmp.lt.s32.totalorder %s11, 1
        %s182 = scalar_select %p181, %s11, 1
        %s183 = smul.addr %s182, 2
        %s184 = smul.addr %s183, 8
        %s185 = scalar_lea.vmem %s0, %s184
      $region36: #{ssconv_forward.1} parent=31 // pred_fallthru
        _
    $region32: #{ssconv_forward.1} parent=5 // pred_fallthru
      _
    %p186 = scmp.le.s32.totalorder 1, %s11
    %p187 = scmp.lt.s32.totalorder %s11, 3
    %p188 = pnand %p186, %p187
    %p189 = pneg %p188
    // Predicated region
    $region37: #{ssconv_forward.1} parent=5 // pred_check
      _
    $region38: #{ssconv_forward.1} parent=5 // pred_check_branch
      %191 = sbr.rel (%p188) target = $region40
    $region39: #{ssconv_forward.1} parent=5 // pred_region
      %s192 = ssub.s32 %s11, 1
      %p193 = scmp.lt.s32.totalorder %s16, 1
      %s194 = scalar_select %p193, %s16, 1
      %s195 = smul.addr %s194, 2
      %s196 = smul.addr %s195, 8
      %s197 = scalar_lea.vmem %s0, %s196
      %p198 = pneg %p37
      %p199 = pneg %p34
      %p200 = pneg %p58
      %p201 = pneg %p55
      %p202 = pneg %p79
      %p203 = pneg %p76
      %p204 = pneg %p100
      %p205 = pneg %p97
      %p206 = pneg %p121
      %p207 = pneg %p118
      %p208 = pneg %p147
      %p209 = pneg %p144
      %p210 = scmp.lt.s32.totalorder %s16, 1
      %s211 = scalar_select %p210, %s16, 1
      %s212 = smul.addr %s211, 2
      %s213 = smul.addr %s212, 8
      %s214 = scalar_lea.vmem %s5, %s213
      %p215 = scmp.lt.s32.totalorder %s16, 1
      %s216 = scalar_select %p215, %s16, 1
      %s217 = smul.addr %s216, 2
      %s218 = smul.addr %s217, 8
      %s219 = scalar_lea.vmem %s0, %s218
      %p220 = scmp.lt.s32.totalorder %s16, 1
      %s221 = scalar_select %p220, %s16, 1
      %s222 = smul.addr %s221, 2
      %s223 = smul.addr %s222, 8
      %s224 = scalar_lea.vmem %s5, %s223
      %v225 = vld [vmem:[%s219] sm:$0xff]
      %v226 = vld [vmem:[%s219 + $0x8] sm:$0xff]
      %v227 = vld [vmem:[%s1] sm:$0xff]
      %v228 = vld [vmem:[%s1 + $0x8] sm:$0xff]
      %v229 = vld [vmem:[%s1 + $0x10] sm:$0xff]
      %v230 = vld [vmem:[%s1 + $0x18] sm:$0xff]
      %v231 = vld [vmem:[%s1 + $0x20] sm:$0xff]
      %v232 = vld [vmem:[%s1 + $0x28] sm:$0xff]
      %v233 = vld [vmem:[%s1 + $0x30] sm:$0xff]
      %v234 = vld [vmem:[%s1 + $0x38] sm:$0xff]
      %v235 = vld [vmem:[%s2] sm:$0x1]
      %v237 = vlaneseq
      %v238 = vshrl.u32 %v237, 7
      %v239 = vsub.s32 0, %v238
      %v240 = vrot.slane %v235, %v239
      %vm242 = vcmask 523264
      %v244 = vsel %vm242, %v225, 0
      %v247 = vsel %vm242, %v226, 0
      %249 = vmatprep.subr.mxu0 0.0
      %250 = vmatpush1.msra.mxu0 0.0
      %251 = vmatprep.subr.mxu0 0.0
      %252 = vmatpush1.msra.mxu0 0.0
      %253 = vmatprep.subr.mxu0 0.0
      %254 = vmatpush1.msra.mxu0 0.0
      %255 = vmatprep.subr.mxu0 0.0
      %256 = vmatpush1.msra.mxu0 0.0
      %257 = vmatprep.subr.mxu0 0.0
      %258 = vmatpush1.msra.mxu0 0.0
      %259 = vmatprep.subr.mxu0 0.0
      %260 = vmatpush1.msra.mxu0 0.0
      %261 = vmatprep.subr.mxu0 0.0
      %262 = vmatpush1.msra.mxu0 0.0
      %263 = vmatprep.subr.mxu0 0.0
      %264 = vmatpush1.msra.mxu0 0.0
      %265 = vmatprep.subr.mxu0 0.0
      %v266 = vand.u32 %v234, 4294901760
      %267 = vmatpush1.msra.mxu0 %v266
      %268 = vmatprep.subr.mxu0 0.0
      %v269 = vand.u32 %v233, 4294901760
      %270 = vmatpush1.msra.mxu0 %v269
      %271 = vmatprep.subr.mxu0 0.0
      %v272 = vand.u32 %v232, 4294901760
      %273 = vmatpush1.msra.mxu0 %v272
      %274 = vmatprep.subr.mxu0 0.0
      %v275 = vand.u32 %v231, 4294901760
      %276 = vmatpush1.msra.mxu0 %v275
      %277 = vmatprep.subr.mxu0 0.0
      %v278 = vand.u32 %v230, 4294901760
      %279 = vmatpush1.msra.mxu0 %v278
      %280 = vmatprep.subr.mxu0 0.0
      %v281 = vand.u32 %v229, 4294901760
      %282 = vmatpush1.msra.mxu0 %v281
      %283 = vmatprep.subr.mxu0 0.0
      %v284 = vand.u32 %v228, 4294901760
      %285 = vmatpush1.msra.mxu0 %v284
      %286 = vmatprep.subr.mxu0 0.0
      %v287 = vand.u32 %v227, 4294901760
      %288 = vmatpush1.msra.mxu0 %v287
      %289 = vmatprep.subr.mxu0 0.0
      %290 = vmatpush2.msra.mxu0 0.0
      %291 = vmatprep.subr.mxu0 0.0
      %292 = vmatpush2.msra.mxu0 0.0
      %293 = vmatprep.subr.mxu0 0.0
      %294 = vmatpush2.msra.mxu0 0.0
      %295 = vmatprep.subr.mxu0 0.0
      %296 = vmatpush2.msra.mxu0 0.0
      %297 = vmatprep.subr.mxu0 0.0
      %298 = vmatpush2.msra.mxu0 0.0
      %299 = vmatprep.subr.mxu0 0.0
      %300 = vmatpush2.msra.mxu0 0.0
      %301 = vmatprep.subr.mxu0 0.0
      %302 = vmatpush2.msra.mxu0 0.0
      %303 = vmatprep.subr.mxu0 0.0
      %304 = vmatpush2.msra.mxu0 0.0
      %305 = vmatprep.subr.mxu0 0.0
      %306 = vmatpush2.msra.mxu0 0.0
      %307 = vmatprep.subr.mxu0 0.0
      %308 = vmatpush2.msra.mxu0 0.0
      %309 = vmatprep.subr.mxu0 0.0
      %310 = vmatpush2.msra.mxu0 0.0
      %311 = vmatprep.subr.mxu0 0.0
      %312 = vmatpush2.msra.mxu0 0.0
      %313 = vmatprep.subr.mxu0 0.0
      %314 = vmatpush2.msra.mxu0 0.0
      %315 = vmatprep.subr.mxu0 0.0
      %316 = vmatpush2.msra.mxu0 0.0
      %317 = vmatprep.subr.mxu0 0.0
      %318 = vmatpush2.msra.mxu0 0.0
      %319 = vmatprep.subr.mxu0 0.0
      %320 = vmatpush2.msra.mxu0 0.0
      %321 = vmatprep.mubr.f32.mxu0 0.0
      %v322 = vand.u32 %v244, 4294901760
      %v323 = vsub.f32 %v244, %v322
      %v324 = vand.u32 %v323, 4294901760
      %v325 = vsub.f32 %v323, %v324
      %v326 = vand.u32 %v325, 4294901760
      %327 = vmatmul.mubr.f32.gmra.mxu0 %v326
      %v328 = vpop.f32.mrf.mxu0
      %v329 = vadd.f32 %v240, %v328
      %v330 = vpop.f32.mrf.mxu0
      %331 = vmatprep.mubr.f32.mxu0 0.0
      %v332 = vand.u32 %v247, 4294901760
      %v333 = vsub.f32 %v247, %v332
      %v334 = vand.u32 %v333, 4294901760
      %v335 = vsub.f32 %v333, %v334
      %v336 = vand.u32 %v335, 4294901760
      %337 = vmatmul.mubr.f32.gmra.mxu0 %v336
      %v338 = vpop.f32.mrf.mxu0
      %v339 = vadd.f32 %v240, %v338
      %v340 = vpop.f32.mrf.mxu0
      %341 = vdwg.mxu0
      %342 = vmatprep.subr.mxu0 0.0
      %343 = vmatpush1.msra.mxu0 0.0
      %344 = vmatprep.subr.mxu0 0.0
      %345 = vmatpush1.msra.mxu0 0.0
      %346 = vmatprep.subr.mxu0 0.0
      %347 = vmatpush1.msra.mxu0 0.0
      %348 = vmatprep.subr.mxu0 0.0
      %349 = vmatpush1.msra.mxu0 0.0
      %350 = vmatprep.subr.mxu0 0.0
      %351 = vmatpush1.msra.mxu0 0.0
      %352 = vmatprep.subr.mxu0 0.0
      %353 = vmatpush1.msra.mxu0 0.0
      %354 = vmatprep.subr.mxu0 0.0
      %355 = vmatpush1.msra.mxu0 0.0
      %356 = vmatprep.subr.mxu0 0.0
      %357 = vmatpush1.msra.mxu0 0.0
      %358 = vmatprep.subr.mxu0 0.0
      %v359 = vand.u32 %v234, 4294901760
      %v360 = vsub.f32 %v234, %v359
      %v361 = vand.u32 %v360, 4294901760
      %v362 = vsub.f32 %v360, %v361
      %v363 = vand.u32 %v362, 4294901760
      %364 = vmatpush1.msra.mxu0 %v363
      %365 = vmatprep.subr.mxu0 0.0
      %v366 = vand.u32 %v233, 4294901760
      %v367 = vsub.f32 %v233, %v366
      %v368 = vand.u32 %v367, 4294901760
      %v369 = vsub.f32 %v367, %v368
      %v370 = vand.u32 %v369, 4294901760
      %371 = vmatpush1.msra.mxu0 %v370
      %372 = vmatprep.subr.mxu0 0.0
      %v373 = vand.u32 %v232, 4294901760
      %v374 = vsub.f32 %v232, %v373
      %v375 = vand.u32 %v374, 4294901760
      %v376 = vsub.f32 %v374, %v375
      %v377 = vand.u32 %v376, 4294901760
      %378 = vmatpush1.msra.mxu0 %v377
      %379 = vmatprep.subr.mxu0 0.0
      %v380 = vand.u32 %v231, 4294901760
      %v381 = vsub.f32 %v231, %v380
      %v382 = vand.u32 %v381, 4294901760
      %v383 = vsub.f32 %v381, %v382
      %v384 = vand.u32 %v383, 4294901760
      %385 = vmatpush1.msra.mxu0 %v384
      %386 = vmatprep.subr.mxu0 0.0
      %v387 = vand.u32 %v230, 4294901760
      %v388 = vsub.f32 %v230, %v387
      %v389 = vand.u32 %v388, 4294901760
      %v390 = vsub.f32 %v388, %v389
      %v391 = vand.u32 %v390, 4294901760
      %392 = vmatpush1.msra.mxu0 %v391
      %393 = vmatprep.subr.mxu0 0.0
      %v394 = vand.u32 %v229, 4294901760
      %v395 = vsub.f32 %v229, %v394
      %v396 = vand.u32 %v395, 4294901760
      %v397 = vsub.f32 %v395, %v396
      %v398 = vand.u32 %v397, 4294901760
      %399 = vmatpush1.msra.mxu0 %v398
      %400 = vmatprep.subr.mxu0 0.0
      %v401 = vand.u32 %v228, 4294901760
      %v402 = vsub.f32 %v228, %v401
      %v403 = vand.u32 %v402, 4294901760
      %v404 = vsub.f32 %v402, %v403
      %v405 = vand.u32 %v404, 4294901760
      %406 = vmatpush1.msra.mxu0 %v405
      %407 = vmatprep.subr.mxu0 0.0
      %v408 = vand.u32 %v227, 4294901760
      %v409 = vsub.f32 %v227, %v408
      %v410 = vand.u32 %v409, 4294901760
      %v411 = vsub.f32 %v409, %v410
      %v412 = vand.u32 %v411, 4294901760
      %413 = vmatpush1.msra.mxu0 %v412
      %414 = vmatprep.subr.mxu0 0.0
      %415 = vmatpush2.msra.mxu0 0.0
      %416 = vmatprep.subr.mxu0 0.0
      %417 = vmatpush2.msra.mxu0 0.0
      %418 = vmatprep.subr.mxu0 0.0
      %419 = vmatpush2.msra.mxu0 0.0
      %420 = vmatprep.subr.mxu0 0.0
      %421 = vmatpush2.msra.mxu0 0.0
      %422 = vmatprep.subr.mxu0 0.0
      %423 = vmatpush2.msra.mxu0 0.0
      %424 = vmatprep.subr.mxu0 0.0
      %425 = vmatpush2.msra.mxu0 0.0
      %426 = vmatprep.subr.mxu0 0.0
      %427 = vmatpush2.msra.mxu0 0.0
      %428 = vmatprep.subr.mxu0 0.0
      %429 = vmatpush2.msra.mxu0 0.0
      %430 = vmatprep.subr.mxu0 0.0
      %431 = vmatpush2.msra.mxu0 0.0
      %432 = vmatprep.subr.mxu0 0.0
      %433 = vmatpush2.msra.mxu0 0.0
      %434 = vmatprep.subr.mxu0 0.0
      %435 = vmatpush2.msra.mxu0 0.0
      %436 = vmatprep.subr.mxu0 0.0
      %437 = vmatpush2.msra.mxu0 0.0
      %438 = vmatprep.subr.mxu0 0.0
      %439 = vmatpush2.msra.mxu0 0.0
      %440 = vmatprep.subr.mxu0 0.0
      %441 = vmatpush2.msra.mxu0 0.0
      %442 = vmatprep.subr.mxu0 0.0
      %443 = vmatpush2.msra.mxu0 0.0
      %444 = vmatprep.subr.mxu0 0.0
      %445 = vmatpush2.msra.mxu0 0.0
      %446 = vmatprep.mubr.f32.mxu0 0.0
      %v447 = vand.u32 %v244, 4294901760
      %448 = vmatmul.mubr.f32.gmra.mxu0 %v447
      %v449 = vpop.f32.mrf.mxu0
      %v450 = vadd.f32 %v329, %v449
      %v451 = vpop.f32.mrf.mxu0
      %452 = vmatprep.mubr.f32.mxu0 0.0
      %v453 = vand.u32 %v247, 4294901760
      %454 = vmatmul.mubr.f32.gmra.mxu0 %v453
      %v455 = vpop.f32.mrf.mxu0
      %v456 = vadd.f32 %v339, %v455
      %v457 = vpop.f32.mrf.mxu0
      %458 = vdwg.mxu0
      %459 = vmatprep.subr.mxu0 0.0
      %460 = vmatpush1.msra.mxu0 0.0
      %461 = vmatprep.subr.mxu0 0.0
      %462 = vmatpush1.msra.mxu0 0.0
      %463 = vmatprep.subr.mxu0 0.0
      %464 = vmatpush1.msra.mxu0 0.0
      %465 = vmatprep.subr.mxu0 0.0
      %466 = vmatpush1.msra.mxu0 0.0
      %467 = vmatprep.subr.mxu0 0.0
      %468 = vmatpush1.msra.mxu0 0.0
      %469 = vmatprep.subr.mxu0 0.0
      %470 = vmatpush1.msra.mxu0 0.0
      %471 = vmatprep.subr.mxu0 0.0
      %472 = vmatpush1.msra.mxu0 0.0
      %473 = vmatprep.subr.mxu0 0.0
      %474 = vmatpush1.msra.mxu0 0.0
      %475 = vmatprep.subr.mxu0 0.0
      %v476 = vand.u32 %v234, 4294901760
      %v477 = vsub.f32 %v234, %v476
      %478 = vmatpush1.msra.mxu0 %v477
      %479 = vmatprep.subr.mxu0 0.0
      %v480 = vand.u32 %v233, 4294901760
      %v481 = vsub.f32 %v233, %v480
      %482 = vmatpush1.msra.mxu0 %v481
      %483 = vmatprep.subr.mxu0 0.0
      %v484 = vand.u32 %v232, 4294901760
      %v485 = vsub.f32 %v232, %v484
      %486 = vmatpush1.msra.mxu0 %v485
      %487 = vmatprep.subr.mxu0 0.0
      %v488 = vand.u32 %v231, 4294901760
      %v489 = vsub.f32 %v231, %v488
      %490 = vmatpush1.msra.mxu0 %v489
      %491 = vmatprep.subr.mxu0 0.0
      %v492 = vand.u32 %v230, 4294901760
      %v493 = vsub.f32 %v230, %v492
      %494 = vmatpush1.msra.mxu0 %v493
      %495 = vmatprep.subr.mxu0 0.0
      %v496 = vand.u32 %v229, 4294901760
      %v497 = vsub.f32 %v229, %v496
      %498 = vmatpush1.msra.mxu0 %v497
      %499 = vmatprep.subr.mxu0 0.0
      %v500 = vand.u32 %v228, 4294901760
      %v501 = vsub.f32 %v228, %v500
      %502 = vmatpush1.msra.mxu0 %v501
      %503 = vmatprep.subr.mxu0 0.0
      %v504 = vand.u32 %v227, 4294901760
      %v505 = vsub.f32 %v227, %v504
      %506 = vmatpush1.msra.mxu0 %v505
      %507 = vmatprep.subr.mxu0 0.0
      %508 = vmatpush2.msra.mxu0 0.0
      %509 = vmatprep.subr.mxu0 0.0
      %510 = vmatpush2.msra.mxu0 0.0
      %511 = vmatprep.subr.mxu0 0.0
      %512 = vmatpush2.msra.mxu0 0.0
      %513 = vmatprep.subr.mxu0 0.0
      %514 = vmatpush2.msra.mxu0 0.0
      %515 = vmatprep.subr.mxu0 0.0
      %516 = vmatpush2.msra.mxu0 0.0
      %517 = vmatprep.subr.mxu0 0.0
      %518 = vmatpush2.msra.mxu0 0.0
      %519 = vmatprep.subr.mxu0 0.0
      %520 = vmatpush2.msra.mxu0 0.0
      %521 = vmatprep.subr.mxu0 0.0
      %522 = vmatpush2.msra.mxu0 0.0
      %523 = vmatprep.subr.mxu0 0.0
      %524 = vmatpush2.msra.mxu0 0.0
      %525 = vmatprep.subr.mxu0 0.0
      %526 = vmatpush2.msra.mxu0 0.0
      %527 = vmatprep.subr.mxu0 0.0
      %528 = vmatpush2.msra.mxu0 0.0
      %529 = vmatprep.subr.mxu0 0.0
      %530 = vmatpush2.msra.mxu0 0.0
      %531 = vmatprep.subr.mxu0 0.0
      %532 = vmatpush2.msra.mxu0 0.0
      %533 = vmatprep.subr.mxu0 0.0
      %534 = vmatpush2.msra.mxu0 0.0
      %535 = vmatprep.subr.mxu0 0.0
      %536 = vmatpush2.msra.mxu0 0.0
      %537 = vmatprep.subr.mxu0 0.0
      %538 = vmatpush2.msra.mxu0 0.0
      %539 = vmatprep.mubr.f32.mxu0 0.0
      %v540 = vand.u32 %v244, 4294901760
      %v541 = vsub.f32 %v244, %v540
      %542 = vmatmul.mubr.f32.gmra.mxu0 %v541
      %v543 = vpop.f32.mrf.mxu0
      %v544 = vadd.f32 %v450, %v543
      %v545 = vpop.f32.mrf.mxu0
      %546 = vmatprep.mubr.f32.mxu0 0.0
      %v547 = vand.u32 %v247, 4294901760
      %v548 = vsub.f32 %v247, %v547
      %549 = vmatmul.mubr.f32.gmra.mxu0 %v548
      %v550 = vpop.f32.mrf.mxu0
      %v551 = vadd.f32 %v456, %v550
      %v552 = vpop.f32.mrf.mxu0
      %553 = vdwg.mxu0
      %554 = vmatprep.subr.mxu0 0.0
      %555 = vmatpush1.msra.mxu0 0.0
      %556 = vmatprep.subr.mxu0 0.0
      %557 = vmatpush1.msra.mxu0 0.0
      %558 = vmatprep.subr.mxu0 0.0
      %559 = vmatpush1.msra.mxu0 0.0
      %560 = vmatprep.subr.mxu0 0.0
      %561 = vmatpush1.msra.mxu0 0.0
      %562 = vmatprep.subr.mxu0 0.0
      %563 = vmatpush1.msra.mxu0 0.0
      %564 = vmatprep.subr.mxu0 0.0
      %565 = vmatpush1.msra.mxu0 0.0
      %566 = vmatprep.subr.mxu0 0.0
      %567 = vmatpush1.msra.mxu0 0.0
      %568 = vmatprep.subr.mxu0 0.0
      %569 = vmatpush1.msra.mxu0 0.0
      %570 = vmatprep.subr.mxu0 0.0
      %v571 = vand.u32 %v234, 4294901760
      %572 = vmatpush1.msra.mxu0 %v571
      %573 = vmatprep.subr.mxu0 0.0
      %v574 = vand.u32 %v233, 4294901760
      %575 = vmatpush1.msra.mxu0 %v574
      %576 = vmatprep.subr.mxu0 0.0
      %v577 = vand.u32 %v232, 4294901760
      %578 = vmatpush1.msra.mxu0 %v577
      %579 = vmatprep.subr.mxu0 0.0
      %v580 = vand.u32 %v231, 4294901760
      %581 = vmatpush1.msra.mxu0 %v580
      %582 = vmatprep.subr.mxu0 0.0
      %v583 = vand.u32 %v230, 4294901760
      %584 = vmatpush1.msra.mxu0 %v583
      %585 = vmatprep.subr.mxu0 0.0
      %v586 = vand.u32 %v229, 4294901760
      %587 = vmatpush1.msra.mxu0 %v586
      %588 = vmatprep.subr.mxu0 0.0
      %v589 = vand.u32 %v228, 4294901760
      %590 = vmatpush1.msra.mxu0 %v589
      %591 = vmatprep.subr.mxu0 0.0
      %v592 = vand.u32 %v227, 4294901760
      %593 = vmatpush1.msra.mxu0 %v592
      %594 = vmatprep.subr.mxu0 0.0
      %595 = vmatpush2.msra.mxu0 0.0
      %596 = vmatprep.subr.mxu0 0.0
      %597 = vmatpush2.msra.mxu0 0.0
      %598 = vmatprep.subr.mxu0 0.0
      %599 = vmatpush2.msra.mxu0 0.0
      %600 = vmatprep.subr.mxu0 0.0
      %601 = vmatpush2.msra.mxu0 0.0
      %602 = vmatprep.subr.mxu0 0.0
      %603 = vmatpush2.msra.mxu0 0.0
      %604 = vmatprep.subr.mxu0 0.0
      %605 = vmatpush2.msra.mxu0 0.0
      %606 = vmatprep.subr.mxu0 0.0
      %607 = vmatpush2.msra.mxu0 0.0
      %608 = vmatprep.subr.mxu0 0.0
      %609 = vmatpush2.msra.mxu0 0.0
      %610 = vmatprep.subr.mxu0 0.0
      %611 = vmatpush2.msra.mxu0 0.0
      %612 = vmatprep.subr.mxu0 0.0
      %613 = vmatpush2.msra.mxu0 0.0
      %614 = vmatprep.subr.mxu0 0.0
      %615 = vmatpush2.msra.mxu0 0.0
      %616 = vmatprep.subr.mxu0 0.0
      %617 = vmatpush2.msra.mxu0 0.0
      %618 = vmatprep.subr.mxu0 0.0
      %619 = vmatpush2.msra.mxu0 0.0
      %620 = vmatprep.subr.mxu0 0.0
      %621 = vmatpush2.msra.mxu0 0.0
      %622 = vmatprep.subr.mxu0 0.0
      %623 = vmatpush2.msra.mxu0 0.0
      %624 = vmatprep.subr.mxu0 0.0
      %625 = vmatpush2.msra.mxu0 0.0
      %626 = vmatprep.mubr.f32.mxu0 0.0
      %v627 = vand.u32 %v244, 4294901760
      %v628 = vsub.f32 %v244, %v627
      %v629 = vand.u32 %v628, 4294901760
      %630 = vmatmul.mubr.f32.gmra.mxu0 %v629
      %v631 = vpop.f32.mrf.mxu0
      %v632 = vadd.f32 %v544, %v631
      %v633 = vpop.f32.mrf.mxu0
      %634 = vmatprep.mubr.f32.mxu0 0.0
      %v635 = vand.u32 %v247, 4294901760
      %v636 = vsub.f32 %v247, %v635
      %v637 = vand.u32 %v636, 4294901760
      %638 = vmatmul.mubr.f32.gmra.mxu0 %v637
      %v639 = vpop.f32.mrf.mxu0
      %v640 = vadd.f32 %v551, %v639
      %v641 = vpop.f32.mrf.mxu0
      %642 = vdwg.mxu0
      %643 = vmatprep.subr.mxu0 0.0
      %644 = vmatpush1.msra.mxu0 0.0
      %645 = vmatprep.subr.mxu0 0.0
      %646 = vmatpush1.msra.mxu0 0.0
      %647 = vmatprep.subr.mxu0 0.0
      %648 = vmatpush1.msra.mxu0 0.0
      %649 = vmatprep.subr.mxu0 0.0
      %650 = vmatpush1.msra.mxu0 0.0
      %651 = vmatprep.subr.mxu0 0.0
      %652 = vmatpush1.msra.mxu0 0.0
      %653 = vmatprep.subr.mxu0 0.0
      %654 = vmatpush1.msra.mxu0 0.0
      %655 = vmatprep.subr.mxu0 0.0
      %656 = vmatpush1.msra.mxu0 0.0
      %657 = vmatprep.subr.mxu0 0.0
      %658 = vmatpush1.msra.mxu0 0.0
      %659 = vmatprep.subr.mxu0 0.0
      %v660 = vand.u32 %v234, 4294901760
      %v661 = vsub.f32 %v234, %v660
      %v662 = vand.u32 %v661, 4294901760
      %663 = vmatpush1.msra.mxu0 %v662
      %664 = vmatprep.subr.mxu0 0.0
      %v665 = vand.u32 %v233, 4294901760
      %v666 = vsub.f32 %v233, %v665
      %v667 = vand.u32 %v666, 4294901760
      %668 = vmatpush1.msra.mxu0 %v667
      %669 = vmatprep.subr.mxu0 0.0
      %v670 = vand.u32 %v232, 4294901760
      %v671 = vsub.f32 %v232, %v670
      %v672 = vand.u32 %v671, 4294901760
      %673 = vmatpush1.msra.mxu0 %v672
      %674 = vmatprep.subr.mxu0 0.0
      %v675 = vand.u32 %v231, 4294901760
      %v676 = vsub.f32 %v231, %v675
      %v677 = vand.u32 %v676, 4294901760
      %678 = vmatpush1.msra.mxu0 %v677
      %679 = vmatprep.subr.mxu0 0.0
      %v680 = vand.u32 %v230, 4294901760
      %v681 = vsub.f32 %v230, %v680
      %v682 = vand.u32 %v681, 4294901760
      %683 = vmatpush1.msra.mxu0 %v682
      %684 = vmatprep.subr.mxu0 0.0
      %v685 = vand.u32 %v229, 4294901760
      %v686 = vsub.f32 %v229, %v685
      %v687 = vand.u32 %v686, 4294901760
      %688 = vmatpush1.msra.mxu0 %v687
      %689 = vmatprep.subr.mxu0 0.0
      %v690 = vand.u32 %v228, 4294901760
      %v691 = vsub.f32 %v228, %v690
      %v692 = vand.u32 %v691, 4294901760
      %693 = vmatpush1.msra.mxu0 %v692
      %694 = vmatprep.subr.mxu0 0.0
      %v695 = vand.u32 %v227, 4294901760
      %v696 = vsub.f32 %v227, %v695
      %v697 = vand.u32 %v696, 4294901760
      %698 = vmatpush1.msra.mxu0 %v697
      %699 = vmatprep.subr.mxu0 0.0
      %700 = vmatpush2.msra.mxu0 0.0
      %701 = vmatprep.subr.mxu0 0.0
      %702 = vmatpush2.msra.mxu0 0.0
      %703 = vmatprep.subr.mxu0 0.0
      %704 = vmatpush2.msra.mxu0 0.0
      %705 = vmatprep.subr.mxu0 0.0
      %706 = vmatpush2.msra.mxu0 0.0
      %707 = vmatprep.subr.mxu0 0.0
      %708 = vmatpush2.msra.mxu0 0.0
      %709 = vmatprep.subr.mxu0 0.0
      %710 = vmatpush2.msra.mxu0 0.0
      %711 = vmatprep.subr.mxu0 0.0
      %712 = vmatpush2.msra.mxu0 0.0
      %713 = vmatprep.subr.mxu0 0.0
      %714 = vmatpush2.msra.mxu0 0.0
      %715 = vmatprep.subr.mxu0 0.0
      %716 = vmatpush2.msra.mxu0 0.0
      %717 = vmatprep.subr.mxu0 0.0
      %718 = vmatpush2.msra.mxu0 0.0
      %719 = vmatprep.subr.mxu0 0.0
      %720 = vmatpush2.msra.mxu0 0.0
      %721 = vmatprep.subr.mxu0 0.0
      %722 = vmatpush2.msra.mxu0 0.0
      %723 = vmatprep.subr.mxu0 0.0
      %724 = vmatpush2.msra.mxu0 0.0
      %725 = vmatprep.subr.mxu0 0.0
      %726 = vmatpush2.msra.mxu0 0.0
      %727 = vmatprep.subr.mxu0 0.0
      %728 = vmatpush2.msra.mxu0 0.0
      %729 = vmatprep.subr.mxu0 0.0
      %730 = vmatpush2.msra.mxu0 0.0
      %731 = vmatprep.mubr.f32.mxu0 0.0
      %v732 = vand.u32 %v244, 4294901760
      %733 = vmatmul.mubr.f32.gmra.mxu0 %v732
      %v734 = vpop.f32.mrf.mxu0
      %v735 = vadd.f32 %v632, %v734
      %v736 = vpop.f32.mrf.mxu0
      %737 = vmatprep.mubr.f32.mxu0 0.0
      %v738 = vand.u32 %v247, 4294901760
      %739 = vmatmul.mubr.f32.gmra.mxu0 %v738
      %v740 = vpop.f32.mrf.mxu0
      %v741 = vadd.f32 %v640, %v740
      %v742 = vpop.f32.mrf.mxu0
      %743 = vdwg.mxu0
      %744 = vmatprep.subr.mxu0 0.0
      %745 = vmatpush1.msra.mxu0 0.0
      %746 = vmatprep.subr.mxu0 0.0
      %747 = vmatpush1.msra.mxu0 0.0
      %748 = vmatprep.subr.mxu0 0.0
      %749 = vmatpush1.msra.mxu0 0.0
      %750 = vmatprep.subr.mxu0 0.0
      %751 = vmatpush1.msra.mxu0 0.0
      %752 = vmatprep.subr.mxu0 0.0
      %753 = vmatpush1.msra.mxu0 0.0
      %754 = vmatprep.subr.mxu0 0.0
      %755 = vmatpush1.msra.mxu0 0.0
      %756 = vmatprep.subr.mxu0 0.0
      %757 = vmatpush1.msra.mxu0 0.0
      %758 = vmatprep.subr.mxu0 0.0
      %759 = vmatpush1.msra.mxu0 0.0
      %760 = vmatprep.subr.mxu0 0.0
      %v761 = vand.u32 %v234, 4294901760
      %762 = vmatpush1.msra.mxu0 %v761
      %763 = vmatprep.subr.mxu0 0.0
      %v764 = vand.u32 %v233, 4294901760
      %765 = vmatpush1.msra.mxu0 %v764
      %766 = vmatprep.subr.mxu0 0.0
      %v767 = vand.u32 %v232, 4294901760
      %768 = vmatpush1.msra.mxu0 %v767
      %769 = vmatprep.subr.mxu0 0.0
      %v770 = vand.u32 %v231, 4294901760
      %771 = vmatpush1.msra.mxu0 %v770
      %772 = vmatprep.subr.mxu0 0.0
      %v773 = vand.u32 %v230, 4294901760
      %774 = vmatpush1.msra.mxu0 %v773
      %775 = vmatprep.subr.mxu0 0.0
      %v776 = vand.u32 %v229, 4294901760
      %777 = vmatpush1.msra.mxu0 %v776
      %778 = vmatprep.subr.mxu0 0.0
      %v779 = vand.u32 %v228, 4294901760
      %780 = vmatpush1.msra.mxu0 %v779
      %781 = vmatprep.subr.mxu0 0.0
      %v782 = vand.u32 %v227, 4294901760
      %783 = vmatpush1.msra.mxu0 %v782
      %784 = vmatprep.subr.mxu0 0.0
      %785 = vmatpush2.msra.mxu0 0.0
      %786 = vmatprep.subr.mxu0 0.0
      %787 = vmatpush2.msra.mxu0 0.0
      %788 = vmatprep.subr.mxu0 0.0
      %789 = vmatpush2.msra.mxu0 0.0
      %790 = vmatprep.subr.mxu0 0.0
      %791 = vmatpush2.msra.mxu0 0.0
      %792 = vmatprep.subr.mxu0 0.0
      %793 = vmatpush2.msra.mxu0 0.0
      %794 = vmatprep.subr.mxu0 0.0
      %795 = vmatpush2.msra.mxu0 0.0
      %796 = vmatprep.subr.mxu0 0.0
      %797 = vmatpush2.msra.mxu0 0.0
      %798 = vmatprep.subr.mxu0 0.0
      %799 = vmatpush2.msra.mxu0 0.0
      %800 = vmatprep.subr.mxu0 0.0
      %801 = vmatpush2.msra.mxu0 0.0
      %802 = vmatprep.subr.mxu0 0.0
      %803 = vmatpush2.msra.mxu0 0.0
      %804 = vmatprep.subr.mxu0 0.0
      %805 = vmatpush2.msra.mxu0 0.0
      %806 = vmatprep.subr.mxu0 0.0
      %807 = vmatpush2.msra.mxu0 0.0
      %808 = vmatprep.subr.mxu0 0.0
      %809 = vmatpush2.msra.mxu0 0.0
      %810 = vmatprep.subr.mxu0 0.0
      %811 = vmatpush2.msra.mxu0 0.0
      %812 = vmatprep.subr.mxu0 0.0
      %813 = vmatpush2.msra.mxu0 0.0
      %814 = vmatprep.subr.mxu0 0.0
      %815 = vmatpush2.msra.mxu0 0.0
      %816 = vmatprep.mubr.f32.mxu0 0.0
      %v817 = vand.u32 %v244, 4294901760
      %818 = vmatmul.mubr.f32.gmra.mxu0 %v817
      %v819 = vpop.f32.mrf.mxu0
      %v820 = vadd.f32 %v735, %v819
      %v821 = vpop.f32.mrf.mxu0
      %822 = vmatprep.mubr.f32.mxu0 0.0
      %v823 = vand.u32 %v247, 4294901760
      %824 = vmatmul.mubr.f32.gmra.mxu0 %v823
      %v825 = vpop.f32.mrf.mxu0
      %v826 = vadd.f32 %v741, %v825
      %v827 = vpop.f32.mrf.mxu0
      %828 = vdwg.mxu0
      %vm829 = vcmp.ge.f32.partialorder %v820, 0.0
      %vm830 = vcmp.ge.f32.partialorder %v826, 0.0
      %v831 = vmul.f32 %v820, 0.01
      %v832 = vmul.f32 %v826, 0.01
      %v833 = vsel %vm829, %v820, %v831
      %v834 = vsel %vm830, %v826, %v832
      %835 = vst [vmem:[#allocation2] sm:$0x3] 0.0
      %836 = vst [vmem:[#allocation2 + $0x12] sm:$0x3] 0.0
      %837 = vst [vmem:[#allocation2 + $0x2] sm:$0xff] %v833
      %838 = vst [vmem:[#allocation2 + $0xa] sm:$0xff] %v834
      %v839 = vld [vmem:[#allocation2] sm:$0xff]
      %v840 = vld [vmem:[#allocation2 + $0x8] sm:$0xff]
      %v841 = vld [vmem:[%s3] sm:$0xff]
      %v842 = vld [vmem:[%s3 + $0x8] sm:$0xff]
      %v843 = vld [vmem:[%s3 + $0x10] sm:$0xff]
      %v844 = vld [vmem:[%s3 + $0x18] sm:$0xff]
      %v845 = vld [vmem:[%s3 + $0x20] sm:$0xff]
      %v846 = vld [vmem:[%s3 + $0x28] sm:$0xff]
      %v847 = vld [vmem:[%s3 + $0x30] sm:$0xff]
      %v848 = vld [vmem:[%s3 + $0x38] sm:$0xff]
      %v849 = vld [vmem:[%s3 + $0x40] sm:$0xff]
      %v850 = vld [vmem:[%s3 + $0x48] sm:$0xff]
      %v851 = vld [vmem:[%s3 + $0x50] sm:$0xff]
      %v852 = vld [vmem:[%s3 + $0x58] sm:$0xff]
      %v853 = vld [vmem:[%s3 + $0x60] sm:$0xff]
      %v854 = vld [vmem:[%s3 + $0x68] sm:$0xff]
      %v855 = vld [vmem:[%s3 + $0x70] sm:$0xff]
      %v856 = vld [vmem:[%s3 + $0x78] sm:$0xff]
      %v857 = vld [vmem:[#allocation2 + $0x1] sm:$0xff]
      %v858 = vld [vmem:[#allocation2 + $0x9] sm:$0xff]
      %s859 = scalar_lea.vmem %s3, 128
      %v860 = vld [vmem:[%s859] sm:$0xff]
      %v861 = vld [vmem:[%s859 + $0x8] sm:$0xff]
      %v862 = vld [vmem:[%s859 + $0x10] sm:$0xff]
      %v863 = vld [vmem:[%s859 + $0x18] sm:$0xff]
      %v864 = vld [vmem:[%s859 + $0x20] sm:$0xff]
      %v865 = vld [vmem:[%s859 + $0x28] sm:$0xff]
      %v866 = vld [vmem:[%s859 + $0x30] sm:$0xff]
      %v867 = vld [vmem:[%s859 + $0x38] sm:$0xff]
      %v868 = vld [vmem:[%s859 + $0x40] sm:$0xff]
      %v869 = vld [vmem:[%s859 + $0x48] sm:$0xff]
      %v870 = vld [vmem:[%s859 + $0x50] sm:$0xff]
      %v871 = vld [vmem:[%s859 + $0x58] sm:$0xff]
      %v872 = vld [vmem:[%s859 + $0x60] sm:$0xff]
      %v873 = vld [vmem:[%s859 + $0x68] sm:$0xff]
      %v874 = vld [vmem:[%s859 + $0x70] sm:$0xff]
      %v875 = vld [vmem:[%s859 + $0x78] sm:$0xff]
      %876 = vmatprep.subr.mxu0 0.0
      %v877 = vand.u32 %v875, 4294901760
      %878 = vmatpush1.msra.mxu0 %v877
      %879 = vmatprep.subr.mxu0 0.0
      %v880 = vand.u32 %v874, 4294901760
      %881 = vmatpush1.msra.mxu0 %v880
      %882 = vmatprep.subr.mxu0 0.0
      %v883 = vand.u32 %v873, 4294901760
      %884 = vmatpush1.msra.mxu0 %v883
      %885 = vmatprep.subr.mxu0 0.0
      %v886 = vand.u32 %v872, 4294901760
      %887 = vmatpush1.msra.mxu0 %v886
      %888 = vmatprep.subr.mxu0 0.0
      %v889 = vand.u32 %v871, 4294901760
      %890 = vmatpush1.msra.mxu0 %v889
      %891 = vmatprep.subr.mxu0 0.0
      %v892 = vand.u32 %v870, 4294901760
      %893 = vmatpush1.msra.mxu0 %v892
      %894 = vmatprep.subr.mxu0 0.0
      %v895 = vand.u32 %v869, 4294901760
      %896 = vmatpush1.msra.mxu0 %v895
      %897 = vmatprep.subr.mxu0 0.0
      %v898 = vand.u32 %v868, 4294901760
      %899 = vmatpush1.msra.mxu0 %v898
      %900 = vmatprep.subr.mxu0 0.0
      %v901 = vand.u32 %v867, 4294901760
      %902 = vmatpush1.msra.mxu0 %v901
      %903 = vmatprep.subr.mxu0 0.0
      %v904 = vand.u32 %v866, 4294901760
      %905 = vmatpush1.msra.mxu0 %v904
      %906 = vmatprep.subr.mxu0 0.0
      %v907 = vand.u32 %v865, 4294901760
      %908 = vmatpush1.msra.mxu0 %v907
      %909 = vmatprep.subr.mxu0 0.0
      %v910 = vand.u32 %v864, 4294901760
      %911 = vmatpush1.msra.mxu0 %v910
      %912 = vmatprep.subr.mxu0 0.0
      %v913 = vand.u32 %v863, 4294901760
      %914 = vmatpush1.msra.mxu0 %v913
      %915 = vmatprep.subr.mxu0 0.0
      %v916 = vand.u32 %v862, 4294901760
      %917 = vmatpush1.msra.mxu0 %v916
      %918 = vmatprep.subr.mxu0 0.0
      %v919 = vand.u32 %v861, 4294901760
      %920 = vmatpush1.msra.mxu0 %v919
      %921 = vmatprep.subr.mxu0 0.0
      %v922 = vand.u32 %v860, 4294901760
      %923 = vmatpush1.msra.mxu0 %v922
      %924 = vmatprep.subr.mxu0 0.0
      %925 = vmatpush2.msra.mxu0 0.0
      %926 = vmatprep.subr.mxu0 0.0
      %927 = vmatpush2.msra.mxu0 0.0
      %928 = vmatprep.subr.mxu0 0.0
      %929 = vmatpush2.msra.mxu0 0.0
      %930 = vmatprep.subr.mxu0 0.0
      %931 = vmatpush2.msra.mxu0 0.0
      %932 = vmatprep.subr.mxu0 0.0
      %933 = vmatpush2.msra.mxu0 0.0
      %934 = vmatprep.subr.mxu0 0.0
      %935 = vmatpush2.msra.mxu0 0.0
      %936 = vmatprep.subr.mxu0 0.0
      %937 = vmatpush2.msra.mxu0 0.0
      %938 = vmatprep.subr.mxu0 0.0
      %939 = vmatpush2.msra.mxu0 0.0
      %940 = vmatprep.subr.mxu0 0.0
      %941 = vmatpush2.msra.mxu0 0.0
      %942 = vmatprep.subr.mxu0 0.0
      %943 = vmatpush2.msra.mxu0 0.0
      %944 = vmatprep.subr.mxu0 0.0
      %945 = vmatpush2.msra.mxu0 0.0
      %946 = vmatprep.subr.mxu0 0.0
      %947 = vmatpush2.msra.mxu0 0.0
      %948 = vmatprep.subr.mxu0 0.0
      %949 = vmatpush2.msra.mxu0 0.0
      %950 = vmatprep.subr.mxu0 0.0
      %951 = vmatpush2.msra.mxu0 0.0
      %952 = vmatprep.subr.mxu0 0.0
      %953 = vmatpush2.msra.mxu0 0.0
      %954 = vmatprep.subr.mxu0 0.0
      %955 = vmatpush2.msra.mxu0 0.0
      %956 = vmatprep.mubr.f32.mxu0 0.0
      %v957 = vand.u32 %v857, 4294901760
      %v958 = vsub.f32 %v857, %v957
      %v959 = vand.u32 %v958, 4294901760
      %v960 = vsub.f32 %v958, %v959
      %v961 = vand.u32 %v960, 4294901760
      %962 = vmatmul.mubr.f32.gmra.mxu0 %v961
      %v963 = vpop.f32.mrf.mxu0
      %v964 = vadd.f32 0.0, %v963
      %v965 = vpop.f32.mrf.mxu0
      %966 = vmatprep.mubr.f32.mxu0 0.0
      %v967 = vand.u32 %v858, 4294901760
      %v968 = vsub.f32 %v858, %v967
      %v969 = vand.u32 %v968, 4294901760
      %v970 = vsub.f32 %v968, %v969
      %v971 = vand.u32 %v970, 4294901760
      %972 = vmatmul.mubr.f32.gmra.mxu0 %v971
      %v973 = vpop.f32.mrf.mxu0
      %v974 = vadd.f32 0.0, %v973
      %v975 = vpop.f32.mrf.mxu0
      %976 = vdwg.mxu0
      %977 = vmatprep.subr.mxu0 0.0
      %v978 = vand.u32 %v875, 4294901760
      %v979 = vsub.f32 %v875, %v978
      %v980 = vand.u32 %v979, 4294901760
      %v981 = vsub.f32 %v979, %v980
      %v982 = vand.u32 %v981, 4294901760
      %983 = vmatpush1.msra.mxu0 %v982
      %984 = vmatprep.subr.mxu0 0.0
      %v985 = vand.u32 %v874, 4294901760
      %v986 = vsub.f32 %v874, %v985
      %v987 = vand.u32 %v986, 4294901760
      %v988 = vsub.f32 %v986, %v987
      %v989 = vand.u32 %v988, 4294901760
      %990 = vmatpush1.msra.mxu0 %v989
      %991 = vmatprep.subr.mxu0 0.0
      %v992 = vand.u32 %v873, 4294901760
      %v993 = vsub.f32 %v873, %v992
      %v994 = vand.u32 %v993, 4294901760
      %v995 = vsub.f32 %v993, %v994
      %v996 = vand.u32 %v995, 4294901760
      %997 = vmatpush1.msra.mxu0 %v996
      %998 = vmatprep.subr.mxu0 0.0
      %v999 = vand.u32 %v872, 4294901760
      %v1000 = vsub.f32 %v872, %v999
      %v1001 = vand.u32 %v1000, 4294901760
      %v1002 = vsub.f32 %v1000, %v1001
      %v1003 = vand.u32 %v1002, 4294901760
      %1004 = vmatpush1.msra.mxu0 %v1003
      %1005 = vmatprep.subr.mxu0 0.0
      %v1006 = vand.u32 %v871, 4294901760
      %v1007 = vsub.f32 %v871, %v1006
      %v1008 = vand.u32 %v1007, 4294901760
      %v1009 = vsub.f32 %v1007, %v1008
      %v1010 = vand.u32 %v1009, 4294901760
      %1011 = vmatpush1.msra.mxu0 %v1010
      %1012 = vmatprep.subr.mxu0 0.0
      %v1013 = vand.u32 %v870, 4294901760
      %v1014 = vsub.f32 %v870, %v1013
      %v1015 = vand.u32 %v1014, 4294901760
      %v1016 = vsub.f32 %v1014, %v1015
      %v1017 = vand.u32 %v1016, 4294901760
      %1018 = vmatpush1.msra.mxu0 %v1017
      %1019 = vmatprep.subr.mxu0 0.0
      %v1020 = vand.u32 %v869, 4294901760
      %v1021 = vsub.f32 %v869, %v1020
      %v1022 = vand.u32 %v1021, 4294901760
      %v1023 = vsub.f32 %v1021, %v1022
      %v1024 = vand.u32 %v1023, 4294901760
      %1025 = vmatpush1.msra.mxu0 %v1024
      %1026 = vmatprep.subr.mxu0 0.0
      %v1027 = vand.u32 %v868, 4294901760
      %v1028 = vsub.f32 %v868, %v1027
      %v1029 = vand.u32 %v1028, 4294901760
      %v1030 = vsub.f32 %v1028, %v1029
      %v1031 = vand.u32 %v1030, 4294901760
      %1032 = vmatpush1.msra.mxu0 %v1031
      %1033 = vmatprep.subr.mxu0 0.0
      %v1034 = vand.u32 %v867, 4294901760
      %v1035 = vsub.f32 %v867, %v1034
      %v1036 = vand.u32 %v1035, 4294901760
      %v1037 = vsub.f32 %v1035, %v1036
      %v1038 = vand.u32 %v1037, 4294901760
      %1039 = vmatpush1.msra.mxu0 %v1038
      %1040 = vmatprep.subr.mxu0 0.0
      %v1041 = vand.u32 %v866, 4294901760
      %v1042 = vsub.f32 %v866, %v1041
      %v1043 = vand.u32 %v1042, 4294901760
      %v1044 = vsub.f32 %v1042, %v1043
      %v1045 = vand.u32 %v1044, 4294901760
      %1046 = vmatpush1.msra.mxu0 %v1045
      %1047 = vmatprep.subr.mxu0 0.0
      %v1048 = vand.u32 %v865, 4294901760
      %v1049 = vsub.f32 %v865, %v1048
      %v1050 = vand.u32 %v1049, 4294901760
      %v1051 = vsub.f32 %v1049, %v1050
      %v1052 = vand.u32 %v1051, 4294901760
      %1053 = vmatpush1.msra.mxu0 %v1052
      %1054 = vmatprep.subr.mxu0 0.0
      %v1055 = vand.u32 %v864, 4294901760
      %v1056 = vsub.f32 %v864, %v1055
      %v1057 = vand.u32 %v1056, 4294901760
      %v1058 = vsub.f32 %v1056, %v1057
      %v1059 = vand.u32 %v1058, 4294901760
      %1060 = vmatpush1.msra.mxu0 %v1059
      %1061 = vmatprep.subr.mxu0 0.0
      %v1062 = vand.u32 %v863, 4294901760
      %v1063 = vsub.f32 %v863, %v1062
      %v1064 = vand.u32 %v1063, 4294901760
      %v1065 = vsub.f32 %v1063, %v1064
      %v1066 = vand.u32 %v1065, 4294901760
      %1067 = vmatpush1.msra.mxu0 %v1066
      %1068 = vmatprep.subr.mxu0 0.0
      %v1069 = vand.u32 %v862, 4294901760
      %v1070 = vsub.f32 %v862, %v1069
      %v1071 = vand.u32 %v1070, 4294901760
      %v1072 = vsub.f32 %v1070, %v1071
      %v1073 = vand.u32 %v1072, 4294901760
      %1074 = vmatpush1.msra.mxu0 %v1073
      %1075 = vmatprep.subr.mxu0 0.0
      %v1076 = vand.u32 %v861, 4294901760
      %v1077 = vsub.f32 %v861, %v1076
      %v1078 = vand.u32 %v1077, 4294901760
      %v1079 = vsub.f32 %v1077, %v1078
      %v1080 = vand.u32 %v1079, 4294901760
      %1081 = vmatpush1.msra.mxu0 %v1080
      %1082 = vmatprep.subr.mxu0 0.0
      %v1083 = vand.u32 %v860, 4294901760
      %v1084 = vsub.f32 %v860, %v1083
      %v1085 = vand.u32 %v1084, 4294901760
      %v1086 = vsub.f32 %v1084, %v1085
      %v1087 = vand.u32 %v1086, 4294901760
      %1088 = vmatpush1.msra.mxu0 %v1087
      %1089 = vmatprep.subr.mxu0 0.0
      %1090 = vmatpush2.msra.mxu0 0.0
      %1091 = vmatprep.subr.mxu0 0.0
      %1092 = vmatpush2.msra.mxu0 0.0
      %1093 = vmatprep.subr.mxu0 0.0
      %1094 = vmatpush2.msra.mxu0 0.0
      %1095 = vmatprep.subr.mxu0 0.0
      %1096 = vmatpush2.msra.mxu0 0.0
      %1097 = vmatprep.subr.mxu0 0.0
      %1098 = vmatpush2.msra.mxu0 0.0
      %1099 = vmatprep.subr.mxu0 0.0
      %1100 = vmatpush2.msra.mxu0 0.0
      %1101 = vmatprep.subr.mxu0 0.0
      %1102 = vmatpush2.msra.mxu0 0.0
      %1103 = vmatprep.subr.mxu0 0.0
      %1104 = vmatpush2.msra.mxu0 0.0
      %1105 = vmatprep.subr.mxu0 0.0
      %1106 = vmatpush2.msra.mxu0 0.0
      %1107 = vmatprep.subr.mxu0 0.0
      %1108 = vmatpush2.msra.mxu0 0.0
      %1109 = vmatprep.subr.mxu0 0.0
      %1110 = vmatpush2.msra.mxu0 0.0
      %1111 = vmatprep.subr.mxu0 0.0
      %1112 = vmatpush2.msra.mxu0 0.0
      %1113 = vmatprep.subr.mxu0 0.0
      %1114 = vmatpush2.msra.mxu0 0.0
      %1115 = vmatprep.subr.mxu0 0.0
      %1116 = vmatpush2.msra.mxu0 0.0
      %1117 = vmatprep.subr.mxu0 0.0
      %1118 = vmatpush2.msra.mxu0 0.0
      %1119 = vmatprep.subr.mxu0 0.0
      %1120 = vmatpush2.msra.mxu0 0.0
      %1121 = vmatprep.mubr.f32.mxu0 0.0
      %v1122 = vand.u32 %v857, 4294901760
      %1123 = vmatmul.mubr.f32.gmra.mxu0 %v1122
      %v1124 = vpop.f32.mrf.mxu0
      %v1125 = vadd.f32 %v964, %v1124
      %v1126 = vpop.f32.mrf.mxu0
      %1127 = vmatprep.mubr.f32.mxu0 0.0
      %v1128 = vand.u32 %v858, 4294901760
      %1129 = vmatmul.mubr.f32.gmra.mxu0 %v1128
      %v1130 = vpop.f32.mrf.mxu0
      %v1131 = vadd.f32 %v974, %v1130
      %v1132 = vpop.f32.mrf.mxu0
      %1133 = vdwg.mxu0
      %1134 = vmatprep.subr.mxu0 0.0
      %v1135 = vand.u32 %v875, 4294901760
      %v1136 = vsub.f32 %v875, %v1135
      %1137 = vmatpush1.msra.mxu0 %v1136
      %1138 = vmatprep.subr.mxu0 0.0
      %v1139 = vand.u32 %v874, 4294901760
      %v1140 = vsub.f32 %v874, %v1139
      %1141 = vmatpush1.msra.mxu0 %v1140
      %1142 = vmatprep.subr.mxu0 0.0
      %v1143 = vand.u32 %v873, 4294901760
      %v1144 = vsub.f32 %v873, %v1143
      %1145 = vmatpush1.msra.mxu0 %v1144
      %1146 = vmatprep.subr.mxu0 0.0
      %v1147 = vand.u32 %v872, 4294901760
      %v1148 = vsub.f32 %v872, %v1147
      %1149 = vmatpush1.msra.mxu0 %v1148
      %1150 = vmatprep.subr.mxu0 0.0
      %v1151 = vand.u32 %v871, 4294901760
      %v1152 = vsub.f32 %v871, %v1151
      %1153 = vmatpush1.msra.mxu0 %v1152
      %1154 = vmatprep.subr.mxu0 0.0
      %v1155 = vand.u32 %v870, 4294901760
      %v1156 = vsub.f32 %v870, %v1155
      %1157 = vmatpush1.msra.mxu0 %v1156
      %1158 = vmatprep.subr.mxu0 0.0
      %v1159 = vand.u32 %v869, 4294901760
      %v1160 = vsub.f32 %v869, %v1159
      %1161 = vmatpush1.msra.mxu0 %v1160
      %1162 = vmatprep.subr.mxu0 0.0
      %v1163 = vand.u32 %v868, 4294901760
      %v1164 = vsub.f32 %v868, %v1163
      %1165 = vmatpush1.msra.mxu0 %v1164
      %1166 = vmatprep.subr.mxu0 0.0
      %v1167 = vand.u32 %v867, 4294901760
      %v1168 = vsub.f32 %v867, %v1167
      %1169 = vmatpush1.msra.mxu0 %v1168
      %1170 = vmatprep.subr.mxu0 0.0
      %v1171 = vand.u32 %v866, 4294901760
      %v1172 = vsub.f32 %v866, %v1171
      %1173 = vmatpush1.msra.mxu0 %v1172
      %1174 = vmatprep.subr.mxu0 0.0
      %v1175 = vand.u32 %v865, 4294901760
      %v1176 = vsub.f32 %v865, %v1175
      %1177 = vmatpush1.msra.mxu0 %v1176
      %1178 = vmatprep.subr.mxu0 0.0
      %v1179 = vand.u32 %v864, 4294901760
      %v1180 = vsub.f32 %v864, %v1179
      %1181 = vmatpush1.msra.mxu0 %v1180
      %1182 = vmatprep.subr.mxu0 0.0
      %v1183 = vand.u32 %v863, 4294901760
      %v1184 = vsub.f32 %v863, %v1183
      %1185 = vmatpush1.msra.mxu0 %v1184
      %1186 = vmatprep.subr.mxu0 0.0
      %v1187 = vand.u32 %v862, 4294901760
      %v1188 = vsub.f32 %v862, %v1187
      %1189 = vmatpush1.msra.mxu0 %v1188
      %1190 = vmatprep.subr.mxu0 0.0
      %v1191 = vand.u32 %v861, 4294901760
      %v1192 = vsub.f32 %v861, %v1191
      %1193 = vmatpush1.msra.mxu0 %v1192
      %1194 = vmatprep.subr.mxu0 0.0
      %v1195 = vand.u32 %v860, 4294901760
      %v1196 = vsub.f32 %v860, %v1195
      %1197 = vmatpush1.msra.mxu0 %v1196
      %1198 = vmatprep.subr.mxu0 0.0
      %1199 = vmatpush2.msra.mxu0 0.0
      %1200 = vmatprep.subr.mxu0 0.0
      %1201 = vmatpush2.msra.mxu0 0.0
      %1202 = vmatprep.subr.mxu0 0.0
      %1203 = vmatpush2.msra.mxu0 0.0
      %1204 = vmatprep.subr.mxu0 0.0
      %1205 = vmatpush2.msra.mxu0 0.0
      %1206 = vmatprep.subr.mxu0 0.0
      %1207 = vmatpush2.msra.mxu0 0.0
      %1208 = vmatprep.subr.mxu0 0.0
      %1209 = vmatpush2.msra.mxu0 0.0
      %1210 = vmatprep.subr.mxu0 0.0
      %1211 = vmatpush2.msra.mxu0 0.0
      %1212 = vmatprep.subr.mxu0 0.0
      %1213 = vmatpush2.msra.mxu0 0.0
      %1214 = vmatprep.subr.mxu0 0.0
      %1215 = vmatpush2.msra.mxu0 0.0
      %1216 = vmatprep.subr.mxu0 0.0
      %1217 = vmatpush2.msra.mxu0 0.0
      %1218 = vmatprep.subr.mxu0 0.0
      %1219 = vmatpush2.msra.mxu0 0.0
      %1220 = vmatprep.subr.mxu0 0.0
      %1221 = vmatpush2.msra.mxu0 0.0
      %1222 = vmatprep.subr.mxu0 0.0
      %1223 = vmatpush2.msra.mxu0 0.0
      %1224 = vmatprep.subr.mxu0 0.0
      %1225 = vmatpush2.msra.mxu0 0.0
      %1226 = vmatprep.subr.mxu0 0.0
      %1227 = vmatpush2.msra.mxu0 0.0
      %1228 = vmatprep.subr.mxu0 0.0
      %1229 = vmatpush2.msra.mxu0 0.0
      %1230 = vmatprep.mubr.f32.mxu0 0.0
      %v1231 = vand.u32 %v857, 4294901760
      %v1232 = vsub.f32 %v857, %v1231
      %1233 = vmatmul.mubr.f32.gmra.mxu0 %v1232
      %v1234 = vpop.f32.mrf.mxu0
      %v1235 = vadd.f32 %v1125, %v1234
      %v1236 = vpop.f32.mrf.mxu0
      %1237 = vmatprep.mubr.f32.mxu0 0.0
      %v1238 = vand.u32 %v858, 4294901760
      %v1239 = vsub.f32 %v858, %v1238
      %1240 = vmatmul.mubr.f32.gmra.mxu0 %v1239
      %v1241 = vpop.f32.mrf.mxu0
      %v1242 = vadd.f32 %v1131, %v1241
      %v1243 = vpop.f32.mrf.mxu0
      %1244 = vdwg.mxu0
      %1245 = vmatprep.subr.mxu0 0.0
      %v1246 = vand.u32 %v875, 4294901760
      %1247 = vmatpush1.msra.mxu0 %v1246
      %1248 = vmatprep.subr.mxu0 0.0
      %v1249 = vand.u32 %v874, 4294901760
      %1250 = vmatpush1.msra.mxu0 %v1249
      %1251 = vmatprep.subr.mxu0 0.0
      %v1252 = vand.u32 %v873, 4294901760
      %1253 = vmatpush1.msra.mxu0 %v1252
      %1254 = vmatprep.subr.mxu0 0.0
      %v1255 = vand.u32 %v872, 4294901760
      %1256 = vmatpush1.msra.mxu0 %v1255
      %1257 = vmatprep.subr.mxu0 0.0
      %v1258 = vand.u32 %v871, 4294901760
      %1259 = vmatpush1.msra.mxu0 %v1258
      %1260 = vmatprep.subr.mxu0 0.0
      %v1261 = vand.u32 %v870, 4294901760
      %1262 = vmatpush1.msra.mxu0 %v1261
      %1263 = vmatprep.subr.mxu0 0.0
      %v1264 = vand.u32 %v869, 4294901760
      %1265 = vmatpush1.msra.mxu0 %v1264
      %1266 = vmatprep.subr.mxu0 0.0
      %v1267 = vand.u32 %v868, 4294901760
      %1268 = vmatpush1.msra.mxu0 %v1267
      %1269 = vmatprep.subr.mxu0 0.0
      %v1270 = vand.u32 %v867, 4294901760
      %1271 = vmatpush1.msra.mxu0 %v1270
      %1272 = vmatprep.subr.mxu0 0.0
      %v1273 = vand.u32 %v866, 4294901760
      %1274 = vmatpush1.msra.mxu0 %v1273
      %1275 = vmatprep.subr.mxu0 0.0
      %v1276 = vand.u32 %v865, 4294901760
      %1277 = vmatpush1.msra.mxu0 %v1276
      %1278 = vmatprep.subr.mxu0 0.0
      %v1279 = vand.u32 %v864, 4294901760
      %1280 = vmatpush1.msra.mxu0 %v1279
      %1281 = vmatprep.subr.mxu0 0.0
      %v1282 = vand.u32 %v863, 4294901760
      %1283 = vmatpush1.msra.mxu0 %v1282
      %1284 = vmatprep.subr.mxu0 0.0
      %v1285 = vand.u32 %v862, 4294901760
      %1286 = vmatpush1.msra.mxu0 %v1285
      %1287 = vmatprep.subr.mxu0 0.0
      %v1288 = vand.u32 %v861, 4294901760
      %1289 = vmatpush1.msra.mxu0 %v1288
      %1290 = vmatprep.subr.mxu0 0.0
      %v1291 = vand.u32 %v860, 4294901760
      %1292 = vmatpush1.msra.mxu0 %v1291
      %1293 = vmatprep.subr.mxu0 0.0
      %1294 = vmatpush2.msra.mxu0 0.0
      %1295 = vmatprep.subr.mxu0 0.0
      %1296 = vmatpush2.msra.mxu0 0.0
      %1297 = vmatprep.subr.mxu0 0.0
      %1298 = vmatpush2.msra.mxu0 0.0
      %1299 = vmatprep.subr.mxu0 0.0
      %1300 = vmatpush2.msra.mxu0 0.0
      %1301 = vmatprep.subr.mxu0 0.0
      %1302 = vmatpush2.msra.mxu0 0.0
      %1303 = vmatprep.subr.mxu0 0.0
      %1304 = vmatpush2.msra.mxu0 0.0
      %1305 = vmatprep.subr.mxu0 0.0
      %1306 = vmatpush2.msra.mxu0 0.0
      %1307 = vmatprep.subr.mxu0 0.0
      %1308 = vmatpush2.msra.mxu0 0.0
      %1309 = vmatprep.subr.mxu0 0.0
      %1310 = vmatpush2.msra.mxu0 0.0
      %1311 = vmatprep.subr.mxu0 0.0
      %1312 = vmatpush2.msra.mxu0 0.0
      %1313 = vmatprep.subr.mxu0 0.0
      %1314 = vmatpush2.msra.mxu0 0.0
      %1315 = vmatprep.subr.mxu0 0.0
      %1316 = vmatpush2.msra.mxu0 0.0
      %1317 = vmatprep.subr.mxu0 0.0
      %1318 = vmatpush2.msra.mxu0 0.0
      %1319 = vmatprep.subr.mxu0 0.0
      %1320 = vmatpush2.msra.mxu0 0.0
      %1321 = vmatprep.subr.mxu0 0.0
      %1322 = vmatpush2.msra.mxu0 0.0
      %1323 = vmatprep.subr.mxu0 0.0
      %1324 = vmatpush2.msra.mxu0 0.0
      %1325 = vmatprep.mubr.f32.mxu0 0.0
      %v1326 = vand.u32 %v857, 4294901760
      %v1327 = vsub.f32 %v857, %v1326
      %v1328 = vand.u32 %v1327, 4294901760
      %1329 = vmatmul.mubr.f32.gmra.mxu0 %v1328
      %v1330 = vpop.f32.mrf.mxu0
      %v1331 = vadd.f32 %v1235, %v1330
      %v1332 = vpop.f32.mrf.mxu0
      %1333 = vmatprep.mubr.f32.mxu0 0.0
      %v1334 = vand.u32 %v858, 4294901760
      %v1335 = vsub.f32 %v858, %v1334
      %v1336 = vand.u32 %v1335, 4294901760
      %1337 = vmatmul.mubr.f32.gmra.mxu0 %v1336
      %v1338 = vpop.f32.mrf.mxu0
      %v1339 = vadd.f32 %v1242, %v1338
      %v1340 = vpop.f32.mrf.mxu0
      %1341 = vdwg.mxu0
      %1342 = vmatprep.subr.mxu0 0.0
      %v1343 = vand.u32 %v875, 4294901760
      %v1344 = vsub.f32 %v875, %v1343
      %v1345 = vand.u32 %v1344, 4294901760
      %1346 = vmatpush1.msra.mxu0 %v1345
      %1347 = vmatprep.subr.mxu0 0.0
      %v1348 = vand.u32 %v874, 4294901760
      %v1349 = vsub.f32 %v874, %v1348
      %v1350 = vand.u32 %v1349, 4294901760
      %1351 = vmatpush1.msra.mxu0 %v1350
      %1352 = vmatprep.subr.mxu0 0.0
      %v1353 = vand.u32 %v873, 4294901760
      %v1354 = vsub.f32 %v873, %v1353
      %v1355 = vand.u32 %v1354, 4294901760
      %1356 = vmatpush1.msra.mxu0 %v1355
      %1357 = vmatprep.subr.mxu0 0.0
      %v1358 = vand.u32 %v872, 4294901760
      %v1359 = vsub.f32 %v872, %v1358
      %v1360 = vand.u32 %v1359, 4294901760
      %1361 = vmatpush1.msra.mxu0 %v1360
      %1362 = vmatprep.subr.mxu0 0.0
      %v1363 = vand.u32 %v871, 4294901760
      %v1364 = vsub.f32 %v871, %v1363
      %v1365 = vand.u32 %v1364, 4294901760
      %1366 = vmatpush1.msra.mxu0 %v1365
      %1367 = vmatprep.subr.mxu0 0.0
      %v1368 = vand.u32 %v870, 4294901760
      %v1369 = vsub.f32 %v870, %v1368
      %v1370 = vand.u32 %v1369, 4294901760
      %1371 = vmatpush1.msra.mxu0 %v1370
      %1372 = vmatprep.subr.mxu0 0.0
      %v1373 = vand.u32 %v869, 4294901760
      %v1374 = vsub.f32 %v869, %v1373
      %v1375 = vand.u32 %v1374, 4294901760
      %1376 = vmatpush1.msra.mxu0 %v1375
      %1377 = vmatprep.subr.mxu0 0.0
      %v1378 = vand.u32 %v868, 4294901760
      %v1379 = vsub.f32 %v868, %v1378
      %v1380 = vand.u32 %v1379, 4294901760
      %1381 = vmatpush1.msra.mxu0 %v1380
      %1382 = vmatprep.subr.mxu0 0.0
      %v1383 = vand.u32 %v867, 4294901760
      %v1384 = vsub.f32 %v867, %v1383
      %v1385 = vand.u32 %v1384, 4294901760
      %1386 = vmatpush1.msra.mxu0 %v1385
      %1387 = vmatprep.subr.mxu0 0.0
      %v1388 = vand.u32 %v866, 4294901760
      %v1389 = vsub.f32 %v866, %v1388
      %v1390 = vand.u32 %v1389, 4294901760
      %1391 = vmatpush1.msra.mxu0 %v1390
      %1392 = vmatprep.subr.mxu0 0.0
      %v1393 = vand.u32 %v865, 4294901760
      %v1394 = vsub.f32 %v865, %v1393
      %v1395 = vand.u32 %v1394, 4294901760
      %1396 = vmatpush1.msra.mxu0 %v1395
      %1397 = vmatprep.subr.mxu0 0.0
      %v1398 = vand.u32 %v864, 4294901760
      %v1399 = vsub.f32 %v864, %v1398
      %v1400 = vand.u32 %v1399, 4294901760
      %1401 = vmatpush1.msra.mxu0 %v1400
      %1402 = vmatprep.subr.mxu0 0.0
      %v1403 = vand.u32 %v863, 4294901760
      %v1404 = vsub.f32 %v863, %v1403
      %v1405 = vand.u32 %v1404, 4294901760
      %1406 = vmatpush1.msra.mxu0 %v1405
      %1407 = vmatprep.subr.mxu0 0.0
      %v1408 = vand.u32 %v862, 4294901760
      %v1409 = vsub.f32 %v862, %v1408
      %v1410 = vand.u32 %v1409, 4294901760
      %1411 = vmatpush1.msra.mxu0 %v1410
      %1412 = vmatprep.subr.mxu0 0.0
      %v1413 = vand.u32 %v861, 4294901760
      %v1414 = vsub.f32 %v861, %v1413
      %v1415 = vand.u32 %v1414, 4294901760
      %1416 = vmatpush1.msra.mxu0 %v1415
      %1417 = vmatprep.subr.mxu0 0.0
      %v1418 = vand.u32 %v860, 4294901760
      %v1419 = vsub.f32 %v860, %v1418
      %v1420 = vand.u32 %v1419, 4294901760
      %1421 = vmatpush1.msra.mxu0 %v1420
      %1422 = vmatprep.subr.mxu0 0.0
      %1423 = vmatpush2.msra.mxu0 0.0
      %1424 = vmatprep.subr.mxu0 0.0
      %1425 = vmatpush2.msra.mxu0 0.0
      %1426 = vmatprep.subr.mxu0 0.0
      %1427 = vmatpush2.msra.mxu0 0.0
      %1428 = vmatprep.subr.mxu0 0.0
      %1429 = vmatpush2.msra.mxu0 0.0
      %1430 = vmatprep.subr.mxu0 0.0
      %1431 = vmatpush2.msra.mxu0 0.0
      %1432 = vmatprep.subr.mxu0 0.0
      %1433 = vmatpush2.msra.mxu0 0.0
      %1434 = vmatprep.subr.mxu0 0.0
      %1435 = vmatpush2.msra.mxu0 0.0
      %1436 = vmatprep.subr.mxu0 0.0
      %1437 = vmatpush2.msra.mxu0 0.0
      %1438 = vmatprep.subr.mxu0 0.0
      %1439 = vmatpush2.msra.mxu0 0.0
      %1440 = vmatprep.subr.mxu0 0.0
      %1441 = vmatpush2.msra.mxu0 0.0
      %1442 = vmatprep.subr.mxu0 0.0
      %1443 = vmatpush2.msra.mxu0 0.0
      %1444 = vmatprep.subr.mxu0 0.0
      %1445 = vmatpush2.msra.mxu0 0.0
      %1446 = vmatprep.subr.mxu0 0.0
      %1447 = vmatpush2.msra.mxu0 0.0
      %1448 = vmatprep.subr.mxu0 0.0
      %1449 = vmatpush2.msra.mxu0 0.0
      %1450 = vmatprep.subr.mxu0 0.0
      %1451 = vmatpush2.msra.mxu0 0.0
      %1452 = vmatprep.subr.mxu0 0.0
      %1453 = vmatpush2.msra.mxu0 0.0
      %1454 = vmatprep.mubr.f32.mxu0 0.0
      %v1455 = vand.u32 %v857, 4294901760
      %1456 = vmatmul.mubr.f32.gmra.mxu0 %v1455
      %v1457 = vpop.f32.mrf.mxu0
      %v1458 = vadd.f32 %v1331, %v1457
      %v1459 = vpop.f32.mrf.mxu0
      %1460 = vmatprep.mubr.f32.mxu0 0.0
      %v1461 = vand.u32 %v858, 4294901760
      %1462 = vmatmul.mubr.f32.gmra.mxu0 %v1461
      %v1463 = vpop.f32.mrf.mxu0
      %v1464 = vadd.f32 %v1339, %v1463
      %v1465 = vpop.f32.mrf.mxu0
      %1466 = vdwg.mxu0
      %1467 = vmatprep.subr.mxu0 0.0
      %v1468 = vand.u32 %v875, 4294901760
      %1469 = vmatpush1.msra.mxu0 %v1468
      %1470 = vmatprep.subr.mxu0 0.0
      %v1471 = vand.u32 %v874, 4294901760
      %1472 = vmatpush1.msra.mxu0 %v1471
      %1473 = vmatprep.subr.mxu0 0.0
      %v1474 = vand.u32 %v873, 4294901760
      %1475 = vmatpush1.msra.mxu0 %v1474
      %1476 = vmatprep.subr.mxu0 0.0
      %v1477 = vand.u32 %v872, 4294901760
      %1478 = vmatpush1.msra.mxu0 %v1477
      %1479 = vmatprep.subr.mxu0 0.0
      %v1480 = vand.u32 %v871, 4294901760
      %1481 = vmatpush1.msra.mxu0 %v1480
      %1482 = vmatprep.subr.mxu0 0.0
      %v1483 = vand.u32 %v870, 4294901760
      %1484 = vmatpush1.msra.mxu0 %v1483
      %1485 = vmatprep.subr.mxu0 0.0
      %v1486 = vand.u32 %v869, 4294901760
      %1487 = vmatpush1.msra.mxu0 %v1486
      %1488 = vmatprep.subr.mxu0 0.0
      %v1489 = vand.u32 %v868, 4294901760
      %1490 = vmatpush1.msra.mxu0 %v1489
      %1491 = vmatprep.subr.mxu0 0.0
      %v1492 = vand.u32 %v867, 4294901760
      %1493 = vmatpush1.msra.mxu0 %v1492
      %1494 = vmatprep.subr.mxu0 0.0
      %v1495 = vand.u32 %v866, 4294901760
      %1496 = vmatpush1.msra.mxu0 %v1495
      %1497 = vmatprep.subr.mxu0 0.0
      %v1498 = vand.u32 %v865, 4294901760
      %1499 = vmatpush1.msra.mxu0 %v1498
      %1500 = vmatprep.subr.mxu0 0.0
      %v1501 = vand.u32 %v864, 4294901760
      %1502 = vmatpush1.msra.mxu0 %v1501
      %1503 = vmatprep.subr.mxu0 0.0
      %v1504 = vand.u32 %v863, 4294901760
      %1505 = vmatpush1.msra.mxu0 %v1504
      %1506 = vmatprep.subr.mxu0 0.0
      %v1507 = vand.u32 %v862, 4294901760
      %1508 = vmatpush1.msra.mxu0 %v1507
      %1509 = vmatprep.subr.mxu0 0.0
      %v1510 = vand.u32 %v861, 4294901760
      %1511 = vmatpush1.msra.mxu0 %v1510
      %1512 = vmatprep.subr.mxu0 0.0
      %v1513 = vand.u32 %v860, 4294901760
      %1514 = vmatpush1.msra.mxu0 %v1513
      %1515 = vmatprep.subr.mxu0 0.0
      %1516 = vmatpush2.msra.mxu0 0.0
      %1517 = vmatprep.subr.mxu0 0.0
      %1518 = vmatpush2.msra.mxu0 0.0
      %1519 = vmatprep.subr.mxu0 0.0
      %1520 = vmatpush2.msra.mxu0 0.0
      %1521 = vmatprep.subr.mxu0 0.0
      %1522 = vmatpush2.msra.mxu0 0.0
      %1523 = vmatprep.subr.mxu0 0.0
      %1524 = vmatpush2.msra.mxu0 0.0
      %1525 = vmatprep.subr.mxu0 0.0
      %1526 = vmatpush2.msra.mxu0 0.0
      %1527 = vmatprep.subr.mxu0 0.0
      %1528 = vmatpush2.msra.mxu0 0.0
      %1529 = vmatprep.subr.mxu0 0.0
      %1530 = vmatpush2.msra.mxu0 0.0
      %1531 = vmatprep.subr.mxu0 0.0
      %1532 = vmatpush2.msra.mxu0 0.0
      %1533 = vmatprep.subr.mxu0 0.0
      %1534 = vmatpush2.msra.mxu0 0.0
      %1535 = vmatprep.subr.mxu0 0.0
      %1536 = vmatpush2.msra.mxu0 0.0
      %1537 = vmatprep.subr.mxu0 0.0
      %1538 = vmatpush2.msra.mxu0 0.0
      %1539 = vmatprep.subr.mxu0 0.0
      %1540 = vmatpush2.msra.mxu0 0.0
      %1541 = vmatprep.subr.mxu0 0.0
      %1542 = vmatpush2.msra.mxu0 0.0
      %1543 = vmatprep.subr.mxu0 0.0
      %1544 = vmatpush2.msra.mxu0 0.0
      %1545 = vmatprep.subr.mxu0 0.0
      %1546 = vmatpush2.msra.mxu0 0.0
      %1547 = vmatprep.mubr.f32.mxu0 0.0
      %v1548 = vand.u32 %v857, 4294901760
      %1549 = vmatmul.mubr.f32.gmra.mxu0 %v1548
      %v1550 = vpop.f32.mrf.mxu0
      %v1551 = vadd.f32 %v1458, %v1550
      %v1552 = vpop.f32.mrf.mxu0
      %1553 = vmatprep.mubr.f32.mxu0 0.0
      %v1554 = vand.u32 %v858, 4294901760
      %1555 = vmatmul.mubr.f32.gmra.mxu0 %v1554
      %v1556 = vpop.f32.mrf.mxu0
      %v1557 = vadd.f32 %v1464, %v1556
      %v1558 = vpop.f32.mrf.mxu0
      %1559 = vdwg.mxu0
      %1560 = vmatprep.subr.mxu0 0.0
      %v1561 = vand.u32 %v856, 4294901760
      %1562 = vmatpush1.msra.mxu0 %v1561
      %1563 = vmatprep.subr.mxu0 0.0
      %v1564 = vand.u32 %v855, 4294901760
      %1565 = vmatpush1.msra.mxu0 %v1564
      %1566 = vmatprep.subr.mxu0 0.0
      %v1567 = vand.u32 %v854, 4294901760
      %1568 = vmatpush1.msra.mxu0 %v1567
      %1569 = vmatprep.subr.mxu0 0.0
      %v1570 = vand.u32 %v853, 4294901760
      %1571 = vmatpush1.msra.mxu0 %v1570
      %1572 = vmatprep.subr.mxu0 0.0
      %v1573 = vand.u32 %v852, 4294901760
      %1574 = vmatpush1.msra.mxu0 %v1573
      %1575 = vmatprep.subr.mxu0 0.0
      %v1576 = vand.u32 %v851, 4294901760
      %1577 = vmatpush1.msra.mxu0 %v1576
      %1578 = vmatprep.subr.mxu0 0.0
      %v1579 = vand.u32 %v850, 4294901760
      %1580 = vmatpush1.msra.mxu0 %v1579
      %1581 = vmatprep.subr.mxu0 0.0
      %v1582 = vand.u32 %v849, 4294901760
      %1583 = vmatpush1.msra.mxu0 %v1582
      %1584 = vmatprep.subr.mxu0 0.0
      %v1585 = vand.u32 %v848, 4294901760
      %1586 = vmatpush1.msra.mxu0 %v1585
      %1587 = vmatprep.subr.mxu0 0.0
      %v1588 = vand.u32 %v847, 4294901760
      %1589 = vmatpush1.msra.mxu0 %v1588
      %1590 = vmatprep.subr.mxu0 0.0
      %v1591 = vand.u32 %v846, 4294901760
      %1592 = vmatpush1.msra.mxu0 %v1591
      %1593 = vmatprep.subr.mxu0 0.0
      %v1594 = vand.u32 %v845, 4294901760
      %1595 = vmatpush1.msra.mxu0 %v1594
      %1596 = vmatprep.subr.mxu0 0.0
      %v1597 = vand.u32 %v844, 4294901760
      %1598 = vmatpush1.msra.mxu0 %v1597
      %1599 = vmatprep.subr.mxu0 0.0
      %v1600 = vand.u32 %v843, 4294901760
      %1601 = vmatpush1.msra.mxu0 %v1600
      %1602 = vmatprep.subr.mxu0 0.0
      %v1603 = vand.u32 %v842, 4294901760
      %1604 = vmatpush1.msra.mxu0 %v1603
      %1605 = vmatprep.subr.mxu0 0.0
      %v1606 = vand.u32 %v841, 4294901760
      %1607 = vmatpush1.msra.mxu0 %v1606
      %1608 = vmatprep.subr.mxu0 0.0
      %1609 = vmatpush2.msra.mxu0 0.0
      %1610 = vmatprep.subr.mxu0 0.0
      %1611 = vmatpush2.msra.mxu0 0.0
      %1612 = vmatprep.subr.mxu0 0.0
      %1613 = vmatpush2.msra.mxu0 0.0
      %1614 = vmatprep.subr.mxu0 0.0
      %1615 = vmatpush2.msra.mxu0 0.0
      %1616 = vmatprep.subr.mxu0 0.0
      %1617 = vmatpush2.msra.mxu0 0.0
      %1618 = vmatprep.subr.mxu0 0.0
      %1619 = vmatpush2.msra.mxu0 0.0
      %1620 = vmatprep.subr.mxu0 0.0
      %1621 = vmatpush2.msra.mxu0 0.0
      %1622 = vmatprep.subr.mxu0 0.0
      %1623 = vmatpush2.msra.mxu0 0.0
      %1624 = vmatprep.subr.mxu0 0.0
      %1625 = vmatpush2.msra.mxu0 0.0
      %1626 = vmatprep.subr.mxu0 0.0
      %1627 = vmatpush2.msra.mxu0 0.0
      %1628 = vmatprep.subr.mxu0 0.0
      %1629 = vmatpush2.msra.mxu0 0.0
      %1630 = vmatprep.subr.mxu0 0.0
      %1631 = vmatpush2.msra.mxu0 0.0
      %1632 = vmatprep.subr.mxu0 0.0
      %1633 = vmatpush2.msra.mxu0 0.0
      %1634 = vmatprep.subr.mxu0 0.0
      %1635 = vmatpush2.msra.mxu0 0.0
      %1636 = vmatprep.subr.mxu0 0.0
      %1637 = vmatpush2.msra.mxu0 0.0
      %1638 = vmatprep.subr.mxu0 0.0
      %1639 = vmatpush2.msra.mxu0 0.0
      %1640 = vmatprep.mubr.f32.mxu0 0.0
      %v1641 = vand.u32 %v839, 4294901760
      %v1642 = vsub.f32 %v839, %v1641
      %v1643 = vand.u32 %v1642, 4294901760
      %v1644 = vsub.f32 %v1642, %v1643
      %v1645 = vand.u32 %v1644, 4294901760
      %1646 = vmatmul.mubr.f32.gmra.mxu0 %v1645
      %v1647 = vpop.f32.mrf.mxu0
      %v1648 = vadd.f32 %v1551, %v1647
      %v1649 = vpop.f32.mrf.mxu0
      %1650 = vmatprep.mubr.f32.mxu0 0.0
      %v1651 = vand.u32 %v840, 4294901760
      %v1652 = vsub.f32 %v840, %v1651
      %v1653 = vand.u32 %v1652, 4294901760
      %v1654 = vsub.f32 %v1652, %v1653
      %v1655 = vand.u32 %v1654, 4294901760
      %1656 = vmatmul.mubr.f32.gmra.mxu0 %v1655
      %v1657 = vpop.f32.mrf.mxu0
      %v1658 = vadd.f32 %v1557, %v1657
      %v1659 = vpop.f32.mrf.mxu0
      %1660 = vdwg.mxu0
      %1661 = vmatprep.subr.mxu0 0.0
      %v1662 = vand.u32 %v856, 4294901760
      %v1663 = vsub.f32 %v856, %v1662
      %v1664 = vand.u32 %v1663, 4294901760
      %v1665 = vsub.f32 %v1663, %v1664
      %v1666 = vand.u32 %v1665, 4294901760
      %1667 = vmatpush1.msra.mxu0 %v1666
      %1668 = vmatprep.subr.mxu0 0.0
      %v1669 = vand.u32 %v855, 4294901760
      %v1670 = vsub.f32 %v855, %v1669
      %v1671 = vand.u32 %v1670, 4294901760
      %v1672 = vsub.f32 %v1670, %v1671
      %v1673 = vand.u32 %v1672, 4294901760
      %1674 = vmatpush1.msra.mxu0 %v1673
      %1675 = vmatprep.subr.mxu0 0.0
      %v1676 = vand.u32 %v854, 4294901760
      %v1677 = vsub.f32 %v854, %v1676
      %v1678 = vand.u32 %v1677, 4294901760
      %v1679 = vsub.f32 %v1677, %v1678
      %v1680 = vand.u32 %v1679, 4294901760
      %1681 = vmatpush1.msra.mxu0 %v1680
      %1682 = vmatprep.subr.mxu0 0.0
      %v1683 = vand.u32 %v853, 4294901760
      %v1684 = vsub.f32 %v853, %v1683
      %v1685 = vand.u32 %v1684, 4294901760
      %v1686 = vsub.f32 %v1684, %v1685
      %v1687 = vand.u32 %v1686, 4294901760
      %1688 = vmatpush1.msra.mxu0 %v1687
      %1689 = vmatprep.subr.mxu0 0.0
      %v1690 = vand.u32 %v852, 4294901760
      %v1691 = vsub.f32 %v852, %v1690
      %v1692 = vand.u32 %v1691, 4294901760
      %v1693 = vsub.f32 %v1691, %v1692
      %v1694 = vand.u32 %v1693, 4294901760
      %1695 = vmatpush1.msra.mxu0 %v1694
      %1696 = vmatprep.subr.mxu0 0.0
      %v1697 = vand.u32 %v851, 4294901760
      %v1698 = vsub.f32 %v851, %v1697
      %v1699 = vand.u32 %v1698, 4294901760
      %v1700 = vsub.f32 %v1698, %v1699
      %v1701 = vand.u32 %v1700, 4294901760
      %1702 = vmatpush1.msra.mxu0 %v1701
      %1703 = vmatprep.subr.mxu0 0.0
      %v1704 = vand.u32 %v850, 4294901760
      %v1705 = vsub.f32 %v850, %v1704
      %v1706 = vand.u32 %v1705, 4294901760
      %v1707 = vsub.f32 %v1705, %v1706
      %v1708 = vand.u32 %v1707, 4294901760
      %1709 = vmatpush1.msra.mxu0 %v1708
      %1710 = vmatprep.subr.mxu0 0.0
      %v1711 = vand.u32 %v849, 4294901760
      %v1712 = vsub.f32 %v849, %v1711
      %v1713 = vand.u32 %v1712, 4294901760
      %v1714 = vsub.f32 %v1712, %v1713
      %v1715 = vand.u32 %v1714, 4294901760
      %1716 = vmatpush1.msra.mxu0 %v1715
      %1717 = vmatprep.subr.mxu0 0.0
      %v1718 = vand.u32 %v848, 4294901760
      %v1719 = vsub.f32 %v848, %v1718
      %v1720 = vand.u32 %v1719, 4294901760
      %v1721 = vsub.f32 %v1719, %v1720
      %v1722 = vand.u32 %v1721, 4294901760
      %1723 = vmatpush1.msra.mxu0 %v1722
      %1724 = vmatprep.subr.mxu0 0.0
      %v1725 = vand.u32 %v847, 4294901760
      %v1726 = vsub.f32 %v847, %v1725
      %v1727 = vand.u32 %v1726, 4294901760
      %v1728 = vsub.f32 %v1726, %v1727
      %v1729 = vand.u32 %v1728, 4294901760
      %1730 = vmatpush1.msra.mxu0 %v1729
      %1731 = vmatprep.subr.mxu0 0.0
      %v1732 = vand.u32 %v846, 4294901760
      %v1733 = vsub.f32 %v846, %v1732
      %v1734 = vand.u32 %v1733, 4294901760
      %v1735 = vsub.f32 %v1733, %v1734
      %v1736 = vand.u32 %v1735, 4294901760
      %1737 = vmatpush1.msra.mxu0 %v1736
      %1738 = vmatprep.subr.mxu0 0.0
      %v1739 = vand.u32 %v845, 4294901760
      %v1740 = vsub.f32 %v845, %v1739
      %v1741 = vand.u32 %v1740, 4294901760
      %v1742 = vsub.f32 %v1740, %v1741
      %v1743 = vand.u32 %v1742, 4294901760
      %1744 = vmatpush1.msra.mxu0 %v1743
      %1745 = vmatprep.subr.mxu0 0.0
      %v1746 = vand.u32 %v844, 4294901760
      %v1747 = vsub.f32 %v844, %v1746
      %v1748 = vand.u32 %v1747, 4294901760
      %v1749 = vsub.f32 %v1747, %v1748
      %v1750 = vand.u32 %v1749, 4294901760
      %1751 = vmatpush1.msra.mxu0 %v1750
      %1752 = vmatprep.subr.mxu0 0.0
      %v1753 = vand.u32 %v843, 4294901760
      %v1754 = vsub.f32 %v843, %v1753
      %v1755 = vand.u32 %v1754, 4294901760
      %v1756 = vsub.f32 %v1754, %v1755
      %v1757 = vand.u32 %v1756, 4294901760
      %1758 = vmatpush1.msra.mxu0 %v1757
      %1759 = vmatprep.subr.mxu0 0.0
      %v1760 = vand.u32 %v842, 4294901760
      %v1761 = vsub.f32 %v842, %v1760
      %v1762 = vand.u32 %v1761, 4294901760
      %v1763 = vsub.f32 %v1761, %v1762
      %v1764 = vand.u32 %v1763, 4294901760
      %1765 = vmatpush1.msra.mxu0 %v1764
      %1766 = vmatprep.subr.mxu0 0.0
      %v1767 = vand.u32 %v841, 4294901760
      %v1768 = vsub.f32 %v841, %v1767
      %v1769 = vand.u32 %v1768, 4294901760
      %v1770 = vsub.f32 %v1768, %v1769
      %v1771 = vand.u32 %v1770, 4294901760
      %1772 = vmatpush1.msra.mxu0 %v1771
      %1773 = vmatprep.subr.mxu0 0.0
      %1774 = vmatpush2.msra.mxu0 0.0
      %1775 = vmatprep.subr.mxu0 0.0
      %1776 = vmatpush2.msra.mxu0 0.0
      %1777 = vmatprep.subr.mxu0 0.0
      %1778 = vmatpush2.msra.mxu0 0.0
      %1779 = vmatprep.subr.mxu0 0.0
      %1780 = vmatpush2.msra.mxu0 0.0
      %1781 = vmatprep.subr.mxu0 0.0
      %1782 = vmatpush2.msra.mxu0 0.0
      %1783 = vmatprep.subr.mxu0 0.0
      %1784 = vmatpush2.msra.mxu0 0.0
      %1785 = vmatprep.subr.mxu0 0.0
      %1786 = vmatpush2.msra.mxu0 0.0
      %1787 = vmatprep.subr.mxu0 0.0
      %1788 = vmatpush2.msra.mxu0 0.0
      %1789 = vmatprep.subr.mxu0 0.0
      %1790 = vmatpush2.msra.mxu0 0.0
      %1791 = vmatprep.subr.mxu0 0.0
      %1792 = vmatpush2.msra.mxu0 0.0
      %1793 = vmatprep.subr.mxu0 0.0
      %1794 = vmatpush2.msra.mxu0 0.0
      %1795 = vmatprep.subr.mxu0 0.0
      %1796 = vmatpush2.msra.mxu0 0.0
      %1797 = vmatprep.subr.mxu0 0.0
      %1798 = vmatpush2.msra.mxu0 0.0
      %1799 = vmatprep.subr.mxu0 0.0
      %1800 = vmatpush2.msra.mxu0 0.0
      %1801 = vmatprep.subr.mxu0 0.0
      %1802 = vmatpush2.msra.mxu0 0.0
      %1803 = vmatprep.subr.mxu0 0.0
      %1804 = vmatpush2.msra.mxu0 0.0
      %1805 = vmatprep.mubr.f32.mxu0 0.0
      %v1806 = vand.u32 %v839, 4294901760
      %1807 = vmatmul.mubr.f32.gmra.mxu0 %v1806
      %v1808 = vpop.f32.mrf.mxu0
      %v1809 = vadd.f32 %v1648, %v1808
      %v1810 = vpop.f32.mrf.mxu0
      %1811 = vmatprep.mubr.f32.mxu0 0.0
      %v1812 = vand.u32 %v840, 4294901760
      %1813 = vmatmul.mubr.f32.gmra.mxu0 %v1812
      %v1814 = vpop.f32.mrf.mxu0
      %v1815 = vadd.f32 %v1658, %v1814
      %v1816 = vpop.f32.mrf.mxu0
      %1817 = vdwg.mxu0
      %1818 = vmatprep.subr.mxu0 0.0
      %v1819 = vand.u32 %v856, 4294901760
      %v1820 = vsub.f32 %v856, %v1819
      %1821 = vmatpush1.msra.mxu0 %v1820
      %1822 = vmatprep.subr.mxu0 0.0
      %v1823 = vand.u32 %v855, 4294901760
      %v1824 = vsub.f32 %v855, %v1823
      %1825 = vmatpush1.msra.mxu0 %v1824
      %1826 = vmatprep.subr.mxu0 0.0
      %v1827 = vand.u32 %v854, 4294901760
      %v1828 = vsub.f32 %v854, %v1827
      %1829 = vmatpush1.msra.mxu0 %v1828
      %1830 = vmatprep.subr.mxu0 0.0
      %v1831 = vand.u32 %v853, 4294901760
      %v1832 = vsub.f32 %v853, %v1831
      %1833 = vmatpush1.msra.mxu0 %v1832
      %1834 = vmatprep.subr.mxu0 0.0
      %v1835 = vand.u32 %v852, 4294901760
      %v1836 = vsub.f32 %v852, %v1835
      %1837 = vmatpush1.msra.mxu0 %v1836
      %1838 = vmatprep.subr.mxu0 0.0
      %v1839 = vand.u32 %v851, 4294901760
      %v1840 = vsub.f32 %v851, %v1839
      %1841 = vmatpush1.msra.mxu0 %v1840
      %1842 = vmatprep.subr.mxu0 0.0
      %v1843 = vand.u32 %v850, 4294901760
      %v1844 = vsub.f32 %v850, %v1843
      %1845 = vmatpush1.msra.mxu0 %v1844
      %1846 = vmatprep.subr.mxu0 0.0
      %v1847 = vand.u32 %v849, 4294901760
      %v1848 = vsub.f32 %v849, %v1847
      %1849 = vmatpush1.msra.mxu0 %v1848
      %1850 = vmatprep.subr.mxu0 0.0
      %v1851 = vand.u32 %v848, 4294901760
      %v1852 = vsub.f32 %v848, %v1851
      %1853 = vmatpush1.msra.mxu0 %v1852
      %1854 = vmatprep.subr.mxu0 0.0
      %v1855 = vand.u32 %v847, 4294901760
      %v1856 = vsub.f32 %v847, %v1855
      %1857 = vmatpush1.msra.mxu0 %v1856
      %1858 = vmatprep.subr.mxu0 0.0
      %v1859 = vand.u32 %v846, 4294901760
      %v1860 = vsub.f32 %v846, %v1859
      %1861 = vmatpush1.msra.mxu0 %v1860
      %1862 = vmatprep.subr.mxu0 0.0
      %v1863 = vand.u32 %v845, 4294901760
      %v1864 = vsub.f32 %v845, %v1863
      %1865 = vmatpush1.msra.mxu0 %v1864
      %1866 = vmatprep.subr.mxu0 0.0
      %v1867 = vand.u32 %v844, 4294901760
      %v1868 = vsub.f32 %v844, %v1867
      %1869 = vmatpush1.msra.mxu0 %v1868
      %1870 = vmatprep.subr.mxu0 0.0
      %v1871 = vand.u32 %v843, 4294901760
      %v1872 = vsub.f32 %v843, %v1871
      %1873 = vmatpush1.msra.mxu0 %v1872
      %1874 = vmatprep.subr.mxu0 0.0
      %v1875 = vand.u32 %v842, 4294901760
      %v1876 = vsub.f32 %v842, %v1875
      %1877 = vmatpush1.msra.mxu0 %v1876
      %1878 = vmatprep.subr.mxu0 0.0
      %v1879 = vand.u32 %v841, 4294901760
      %v1880 = vsub.f32 %v841, %v1879
      %1881 = vmatpush1.msra.mxu0 %v1880
      %1882 = vmatprep.subr.mxu0 0.0
      %1883 = vmatpush2.msra.mxu0 0.0
      %1884 = vmatprep.subr.mxu0 0.0
      %1885 = vmatpush2.msra.mxu0 0.0
      %1886 = vmatprep.subr.mxu0 0.0
      %1887 = vmatpush2.msra.mxu0 0.0
      %1888 = vmatprep.subr.mxu0 0.0
      %1889 = vmatpush2.msra.mxu0 0.0
      %1890 = vmatprep.subr.mxu0 0.0
      %1891 = vmatpush2.msra.mxu0 0.0
      %1892 = vmatprep.subr.mxu0 0.0
      %1893 = vmatpush2.msra.mxu0 0.0
      %1894 = vmatprep.subr.mxu0 0.0
      %1895 = vmatpush2.msra.mxu0 0.0
      %1896 = vmatprep.subr.mxu0 0.0
      %1897 = vmatpush2.msra.mxu0 0.0
      %1898 = vmatprep.subr.mxu0 0.0
      %1899 = vmatpush2.msra.mxu0 0.0
      %1900 = vmatprep.subr.mxu0 0.0
      %1901 = vmatpush2.msra.mxu0 0.0
      %1902 = vmatprep.subr.mxu0 0.0
      %1903 = vmatpush2.msra.mxu0 0.0
      %1904 = vmatprep.subr.mxu0 0.0
      %1905 = vmatpush2.msra.mxu0 0.0
      %1906 = vmatprep.subr.mxu0 0.0
      %1907 = vmatpush2.msra.mxu0 0.0
      %1908 = vmatprep.subr.mxu0 0.0
      %1909 = vmatpush2.msra.mxu0 0.0
      %1910 = vmatprep.subr.mxu0 0.0
      %1911 = vmatpush2.msra.mxu0 0.0
      %1912 = vmatprep.subr.mxu0 0.0
      %1913 = vmatpush2.msra.mxu0 0.0
      %1914 = vmatprep.mubr.f32.mxu0 0.0
      %v1915 = vand.u32 %v839, 4294901760
      %v1916 = vsub.f32 %v839, %v1915
      %1917 = vmatmul.mubr.f32.gmra.mxu0 %v1916
      %v1918 = vpop.f32.mrf.mxu0
      %v1919 = vadd.f32 %v1809, %v1918
      %v1920 = vpop.f32.mrf.mxu0
      %1921 = vmatprep.mubr.f32.mxu0 0.0
      %v1922 = vand.u32 %v840, 4294901760
      %v1923 = vsub.f32 %v840, %v1922
      %1924 = vmatmul.mubr.f32.gmra.mxu0 %v1923
      %v1925 = vpop.f32.mrf.mxu0
      %v1926 = vadd.f32 %v1815, %v1925
      %v1927 = vpop.f32.mrf.mxu0
      %1928 = vdwg.mxu0
      %1929 = vmatprep.subr.mxu0 0.0
      %v1930 = vand.u32 %v856, 4294901760
      %1931 = vmatpush1.msra.mxu0 %v1930
      %1932 = vmatprep.subr.mxu0 0.0
      %v1933 = vand.u32 %v855, 4294901760
      %1934 = vmatpush1.msra.mxu0 %v1933
      %1935 = vmatprep.subr.mxu0 0.0
      %v1936 = vand.u32 %v854, 4294901760
      %1937 = vmatpush1.msra.mxu0 %v1936
      %1938 = vmatprep.subr.mxu0 0.0
      %v1939 = vand.u32 %v853, 4294901760
      %1940 = vmatpush1.msra.mxu0 %v1939
      %1941 = vmatprep.subr.mxu0 0.0
      %v1942 = vand.u32 %v852, 4294901760
      %1943 = vmatpush1.msra.mxu0 %v1942
      %1944 = vmatprep.subr.mxu0 0.0
      %v1945 = vand.u32 %v851, 4294901760
      %1946 = vmatpush1.msra.mxu0 %v1945
      %1947 = vmatprep.subr.mxu0 0.0
      %v1948 = vand.u32 %v850, 4294901760
      %1949 = vmatpush1.msra.mxu0 %v1948
      %1950 = vmatprep.subr.mxu0 0.0
      %v1951 = vand.u32 %v849, 4294901760
      %1952 = vmatpush1.msra.mxu0 %v1951
      %1953 = vmatprep.subr.mxu0 0.0
      %v1954 = vand.u32 %v848, 4294901760
      %1955 = vmatpush1.msra.mxu0 %v1954
      %1956 = vmatprep.subr.mxu0 0.0
      %v1957 = vand.u32 %v847, 4294901760
      %1958 = vmatpush1.msra.mxu0 %v1957
      %1959 = vmatprep.subr.mxu0 0.0
      %v1960 = vand.u32 %v846, 4294901760
      %1961 = vmatpush1.msra.mxu0 %v1960
      %1962 = vmatprep.subr.mxu0 0.0
      %v1963 = vand.u32 %v845, 4294901760
      %1964 = vmatpush1.msra.mxu0 %v1963
      %1965 = vmatprep.subr.mxu0 0.0
      %v1966 = vand.u32 %v844, 4294901760
      %1967 = vmatpush1.msra.mxu0 %v1966
      %1968 = vmatprep.subr.mxu0 0.0
      %v1969 = vand.u32 %v843, 4294901760
      %1970 = vmatpush1.msra.mxu0 %v1969
      %1971 = vmatprep.subr.mxu0 0.0
      %v1972 = vand.u32 %v842, 4294901760
      %1973 = vmatpush1.msra.mxu0 %v1972
      %1974 = vmatprep.subr.mxu0 0.0
      %v1975 = vand.u32 %v841, 4294901760
      %1976 = vmatpush1.msra.mxu0 %v1975
      %1977 = vmatprep.subr.mxu0 0.0
      %1978 = vmatpush2.msra.mxu0 0.0
      %1979 = vmatprep.subr.mxu0 0.0
      %1980 = vmatpush2.msra.mxu0 0.0
      %1981 = vmatprep.subr.mxu0 0.0
      %1982 = vmatpush2.msra.mxu0 0.0
      %1983 = vmatprep.subr.mxu0 0.0
      %1984 = vmatpush2.msra.mxu0 0.0
      %1985 = vmatprep.subr.mxu0 0.0
      %1986 = vmatpush2.msra.mxu0 0.0
      %1987 = vmatprep.subr.mxu0 0.0
      %1988 = vmatpush2.msra.mxu0 0.0
      %1989 = vmatprep.subr.mxu0 0.0
      %1990 = vmatpush2.msra.mxu0 0.0
      %1991 = vmatprep.subr.mxu0 0.0
      %1992 = vmatpush2.msra.mxu0 0.0
      %1993 = vmatprep.subr.mxu0 0.0
      %1994 = vmatpush2.msra.mxu0 0.0
      %1995 = vmatprep.subr.mxu0 0.0
      %1996 = vmatpush2.msra.mxu0 0.0
      %1997 = vmatprep.subr.mxu0 0.0
      %1998 = vmatpush2.msra.mxu0 0.0
      %1999 = vmatprep.subr.mxu0 0.0
      %2000 = vmatpush2.msra.mxu0 0.0
      %2001 = vmatprep.subr.mxu0 0.0
      %2002 = vmatpush2.msra.mxu0 0.0
      %2003 = vmatprep.subr.mxu0 0.0
      %2004 = vmatpush2.msra.mxu0 0.0
      %2005 = vmatprep.subr.mxu0 0.0
      %2006 = vmatpush2.msra.mxu0 0.0
      %2007 = vmatprep.subr.mxu0 0.0
      %2008 = vmatpush2.msra.mxu0 0.0
      %2009 = vmatprep.mubr.f32.mxu0 0.0
      %v2010 = vand.u32 %v839, 4294901760
      %v2011 = vsub.f32 %v839, %v2010
      %v2012 = vand.u32 %v2011, 4294901760
      %2013 = vmatmul.mubr.f32.gmra.mxu0 %v2012
      %v2014 = vpop.f32.mrf.mxu0
      %v2015 = vadd.f32 %v1919, %v2014
      %v2016 = vpop.f32.mrf.mxu0
      %2017 = vmatprep.mubr.f32.mxu0 0.0
      %v2018 = vand.u32 %v840, 4294901760
      %v2019 = vsub.f32 %v840, %v2018
      %v2020 = vand.u32 %v2019, 4294901760
      %2021 = vmatmul.mubr.f32.gmra.mxu0 %v2020
      %v2022 = vpop.f32.mrf.mxu0
      %v2023 = vadd.f32 %v1926, %v2022
      %v2024 = vpop.f32.mrf.mxu0
      %2025 = vdwg.mxu0
      %2026 = vmatprep.subr.mxu0 0.0
      %v2027 = vand.u32 %v856, 4294901760
      %v2028 = vsub.f32 %v856, %v2027
      %v2029 = vand.u32 %v2028, 4294901760
      %2030 = vmatpush1.msra.mxu0 %v2029
      %2031 = vmatprep.subr.mxu0 0.0
      %v2032 = vand.u32 %v855, 4294901760
      %v2033 = vsub.f32 %v855, %v2032
      %v2034 = vand.u32 %v2033, 4294901760
      %2035 = vmatpush1.msra.mxu0 %v2034
      %2036 = vmatprep.subr.mxu0 0.0
      %v2037 = vand.u32 %v854, 4294901760
      %v2038 = vsub.f32 %v854, %v2037
      %v2039 = vand.u32 %v2038, 4294901760
      %2040 = vmatpush1.msra.mxu0 %v2039
      %2041 = vmatprep.subr.mxu0 0.0
      %v2042 = vand.u32 %v853, 4294901760
      %v2043 = vsub.f32 %v853, %v2042
      %v2044 = vand.u32 %v2043, 4294901760
      %2045 = vmatpush1.msra.mxu0 %v2044
      %2046 = vmatprep.subr.mxu0 0.0
      %v2047 = vand.u32 %v852, 4294901760
      %v2048 = vsub.f32 %v852, %v2047
      %v2049 = vand.u32 %v2048, 4294901760
      %2050 = vmatpush1.msra.mxu0 %v2049
      %2051 = vmatprep.subr.mxu0 0.0
      %v2052 = vand.u32 %v851, 4294901760
      %v2053 = vsub.f32 %v851, %v2052
      %v2054 = vand.u32 %v2053, 4294901760
      %2055 = vmatpush1.msra.mxu0 %v2054
      %2056 = vmatprep.subr.mxu0 0.0
      %v2057 = vand.u32 %v850, 4294901760
      %v2058 = vsub.f32 %v850, %v2057
      %v2059 = vand.u32 %v2058, 4294901760
      %2060 = vmatpush1.msra.mxu0 %v2059
      %2061 = vmatprep.subr.mxu0 0.0
      %v2062 = vand.u32 %v849, 4294901760
      %v2063 = vsub.f32 %v849, %v2062
      %v2064 = vand.u32 %v2063, 4294901760
      %2065 = vmatpush1.msra.mxu0 %v2064
      %2066 = vmatprep.subr.mxu0 0.0
      %v2067 = vand.u32 %v848, 4294901760
      %v2068 = vsub.f32 %v848, %v2067
      %v2069 = vand.u32 %v2068, 4294901760
      %2070 = vmatpush1.msra.mxu0 %v2069
      %2071 = vmatprep.subr.mxu0 0.0
      %v2072 = vand.u32 %v847, 4294901760
      %v2073 = vsub.f32 %v847, %v2072
      %v2074 = vand.u32 %v2073, 4294901760
      %2075 = vmatpush1.msra.mxu0 %v2074
      %2076 = vmatprep.subr.mxu0 0.0
      %v2077 = vand.u32 %v846, 4294901760
      %v2078 = vsub.f32 %v846, %v2077
      %v2079 = vand.u32 %v2078, 4294901760
      %2080 = vmatpush1.msra.mxu0 %v2079
      %2081 = vmatprep.subr.mxu0 0.0
      %v2082 = vand.u32 %v845, 4294901760
      %v2083 = vsub.f32 %v845, %v2082
      %v2084 = vand.u32 %v2083, 4294901760
      %2085 = vmatpush1.msra.mxu0 %v2084
      %2086 = vmatprep.subr.mxu0 0.0
      %v2087 = vand.u32 %v844, 4294901760
      %v2088 = vsub.f32 %v844, %v2087
      %v2089 = vand.u32 %v2088, 4294901760
      %2090 = vmatpush1.msra.mxu0 %v2089
      %2091 = vmatprep.subr.mxu0 0.0
      %v2092 = vand.u32 %v843, 4294901760
      %v2093 = vsub.f32 %v843, %v2092
      %v2094 = vand.u32 %v2093, 4294901760
      %2095 = vmatpush1.msra.mxu0 %v2094
      %2096 = vmatprep.subr.mxu0 0.0
      %v2097 = vand.u32 %v842, 4294901760
      %v2098 = vsub.f32 %v842, %v2097
      %v2099 = vand.u32 %v2098, 4294901760
      %2100 = vmatpush1.msra.mxu0 %v2099
      %2101 = vmatprep.subr.mxu0 0.0
      %v2102 = vand.u32 %v841, 4294901760
      %v2103 = vsub.f32 %v841, %v2102
      %v2104 = vand.u32 %v2103, 4294901760
      %2105 = vmatpush1.msra.mxu0 %v2104
      %2106 = vmatprep.subr.mxu0 0.0
      %2107 = vmatpush2.msra.mxu0 0.0
      %2108 = vmatprep.subr.mxu0 0.0
      %2109 = vmatpush2.msra.mxu0 0.0
      %2110 = vmatprep.subr.mxu0 0.0
      %2111 = vmatpush2.msra.mxu0 0.0
      %2112 = vmatprep.subr.mxu0 0.0
      %2113 = vmatpush2.msra.mxu0 0.0
      %2114 = vmatprep.subr.mxu0 0.0
      %2115 = vmatpush2.msra.mxu0 0.0
      %2116 = vmatprep.subr.mxu0 0.0
      %2117 = vmatpush2.msra.mxu0 0.0
      %2118 = vmatprep.subr.mxu0 0.0
      %2119 = vmatpush2.msra.mxu0 0.0
      %2120 = vmatprep.subr.mxu0 0.0
      %2121 = vmatpush2.msra.mxu0 0.0
      %2122 = vmatprep.subr.mxu0 0.0
      %2123 = vmatpush2.msra.mxu0 0.0
      %2124 = vmatprep.subr.mxu0 0.0
      %2125 = vmatpush2.msra.mxu0 0.0
      %2126 = vmatprep.subr.mxu0 0.0
      %2127 = vmatpush2.msra.mxu0 0.0
      %2128 = vmatprep.subr.mxu0 0.0
      %2129 = vmatpush2.msra.mxu0 0.0
      %2130 = vmatprep.subr.mxu0 0.0
      %2131 = vmatpush2.msra.mxu0 0.0
      %2132 = vmatprep.subr.mxu0 0.0
      %2133 = vmatpush2.msra.mxu0 0.0
      %2134 = vmatprep.subr.mxu0 0.0
      %2135 = vmatpush2.msra.mxu0 0.0
      %2136 = vmatprep.subr.mxu0 0.0
      %2137 = vmatpush2.msra.mxu0 0.0
      %2138 = vmatprep.mubr.f32.mxu0 0.0
      %v2139 = vand.u32 %v839, 4294901760
      %2140 = vmatmul.mubr.f32.gmra.mxu0 %v2139
      %v2141 = vpop.f32.mrf.mxu0
      %v2142 = vadd.f32 %v2015, %v2141
      %v2143 = vpop.f32.mrf.mxu0
      %2144 = vmatprep.mubr.f32.mxu0 0.0
      %v2145 = vand.u32 %v840, 4294901760
      %2146 = vmatmul.mubr.f32.gmra.mxu0 %v2145
      %v2147 = vpop.f32.mrf.mxu0
      %v2148 = vadd.f32 %v2023, %v2147
      %v2149 = vpop.f32.mrf.mxu0
      %2150 = vdwg.mxu0
      %2151 = vmatprep.subr.mxu0 0.0
      %v2152 = vand.u32 %v856, 4294901760
      %2153 = vmatpush1.msra.mxu0 %v2152
      %2154 = vmatprep.subr.mxu0 0.0
      %v2155 = vand.u32 %v855, 4294901760
      %2156 = vmatpush1.msra.mxu0 %v2155
      %2157 = vmatprep.subr.mxu0 0.0
      %v2158 = vand.u32 %v854, 4294901760
      %2159 = vmatpush1.msra.mxu0 %v2158
      %2160 = vmatprep.subr.mxu0 0.0
      %v2161 = vand.u32 %v853, 4294901760
      %2162 = vmatpush1.msra.mxu0 %v2161
      %2163 = vmatprep.subr.mxu0 0.0
      %v2164 = vand.u32 %v852, 4294901760
      %2165 = vmatpush1.msra.mxu0 %v2164
      %2166 = vmatprep.subr.mxu0 0.0
      %v2167 = vand.u32 %v851, 4294901760
      %2168 = vmatpush1.msra.mxu0 %v2167
      %2169 = vmatprep.subr.mxu0 0.0
      %v2170 = vand.u32 %v850, 4294901760
      %2171 = vmatpush1.msra.mxu0 %v2170
      %2172 = vmatprep.subr.mxu0 0.0
      %v2173 = vand.u32 %v849, 4294901760
      %2174 = vmatpush1.msra.mxu0 %v2173
      %2175 = vmatprep.subr.mxu0 0.0
      %v2176 = vand.u32 %v848, 4294901760
      %2177 = vmatpush1.msra.mxu0 %v2176
      %2178 = vmatprep.subr.mxu0 0.0
      %v2179 = vand.u32 %v847, 4294901760
      %2180 = vmatpush1.msra.mxu0 %v2179
      %2181 = vmatprep.subr.mxu0 0.0
      %v2182 = vand.u32 %v846, 4294901760
      %2183 = vmatpush1.msra.mxu0 %v2182
      %2184 = vmatprep.subr.mxu0 0.0
      %v2185 = vand.u32 %v845, 4294901760
      %2186 = vmatpush1.msra.mxu0 %v2185
      %2187 = vmatprep.subr.mxu0 0.0
      %v2188 = vand.u32 %v844, 4294901760
      %2189 = vmatpush1.msra.mxu0 %v2188
      %2190 = vmatprep.subr.mxu0 0.0
      %v2191 = vand.u32 %v843, 4294901760
      %2192 = vmatpush1.msra.mxu0 %v2191
      %2193 = vmatprep.subr.mxu0 0.0
      %v2194 = vand.u32 %v842, 4294901760
      %2195 = vmatpush1.msra.mxu0 %v2194
      %2196 = vmatprep.subr.mxu0 0.0
      %v2197 = vand.u32 %v841, 4294901760
      %2198 = vmatpush1.msra.mxu0 %v2197
      %2199 = vmatprep.subr.mxu0 0.0
      %2200 = vmatpush2.msra.mxu0 0.0
      %2201 = vmatprep.subr.mxu0 0.0
      %2202 = vmatpush2.msra.mxu0 0.0
      %2203 = vmatprep.subr.mxu0 0.0
      %2204 = vmatpush2.msra.mxu0 0.0
      %2205 = vmatprep.subr.mxu0 0.0
      %2206 = vmatpush2.msra.mxu0 0.0
      %2207 = vmatprep.subr.mxu0 0.0
      %2208 = vmatpush2.msra.mxu0 0.0
      %2209 = vmatprep.subr.mxu0 0.0
      %2210 = vmatpush2.msra.mxu0 0.0
      %2211 = vmatprep.subr.mxu0 0.0
      %2212 = vmatpush2.msra.mxu0 0.0
      %2213 = vmatprep.subr.mxu0 0.0
      %2214 = vmatpush2.msra.mxu0 0.0
      %2215 = vmatprep.subr.mxu0 0.0
      %2216 = vmatpush2.msra.mxu0 0.0
      %2217 = vmatprep.subr.mxu0 0.0
      %2218 = vmatpush2.msra.mxu0 0.0
      %2219 = vmatprep.subr.mxu0 0.0
      %2220 = vmatpush2.msra.mxu0 0.0
      %2221 = vmatprep.subr.mxu0 0.0
      %2222 = vmatpush2.msra.mxu0 0.0
      %2223 = vmatprep.subr.mxu0 0.0
      %2224 = vmatpush2.msra.mxu0 0.0
      %2225 = vmatprep.subr.mxu0 0.0
      %2226 = vmatpush2.msra.mxu0 0.0
      %2227 = vmatprep.subr.mxu0 0.0
      %2228 = vmatpush2.msra.mxu0 0.0
      %2229 = vmatprep.subr.mxu0 0.0
      %2230 = vmatpush2.msra.mxu0 0.0
      %2231 = vmatprep.mubr.f32.mxu0 0.0
      %v2232 = vand.u32 %v839, 4294901760
      %2233 = vmatmul.mubr.f32.gmra.mxu0 %v2232
      %v2234 = vpop.f32.mrf.mxu0
      %v2235 = vadd.f32 %v2142, %v2234
      %v2236 = vpop.f32.mrf.mxu0
      %2237 = vmatprep.mubr.f32.mxu0 0.0
      %v2238 = vand.u32 %v840, 4294901760
      %2239 = vmatmul.mubr.f32.gmra.mxu0 %v2238
      %v2240 = vpop.f32.mrf.mxu0
      %v2241 = vadd.f32 %v2148, %v2240
      %v2242 = vpop.f32.mrf.mxu0
      %2243 = vdwg.mxu0
      %v2244 = vld [vmem:[#allocation2 + $0x2] sm:$0xff]
      %v2245 = vld [vmem:[#allocation2 + $0xa] sm:$0xff]
      %s2246 = scalar_lea.vmem %s3, 256
      %v2247 = vld [vmem:[%s2246] sm:$0xff]
      %v2248 = vld [vmem:[%s2246 + $0x8] sm:$0xff]
      %v2249 = vld [vmem:[%s2246 + $0x10] sm:$0xff]
      %v2250 = vld [vmem:[%s2246 + $0x18] sm:$0xff]
      %v2251 = vld [vmem:[%s2246 + $0x20] sm:$0xff]
      %v2252 = vld [vmem:[%s2246 + $0x28] sm:$0xff]
      %v2253 = vld [vmem:[%s2246 + $0x30] sm:$0xff]
      %v2254 = vld [vmem:[%s2246 + $0x38] sm:$0xff]
      %v2255 = vld [vmem:[%s2246 + $0x40] sm:$0xff]
      %v2256 = vld [vmem:[%s2246 + $0x48] sm:$0xff]
      %v2257 = vld [vmem:[%s2246 + $0x50] sm:$0xff]
      %v2258 = vld [vmem:[%s2246 + $0x58] sm:$0xff]
      %v2259 = vld [vmem:[%s2246 + $0x60] sm:$0xff]
      %v2260 = vld [vmem:[%s2246 + $0x68] sm:$0xff]
      %v2261 = vld [vmem:[%s2246 + $0x70] sm:$0xff]
      %v2262 = vld [vmem:[%s2246 + $0x78] sm:$0xff]
      %2263 = vmatprep.subr.mxu0 0.0
      %v2264 = vand.u32 %v2262, 4294901760
      %2265 = vmatpush1.msra.mxu0 %v2264
      %2266 = vmatprep.subr.mxu0 0.0
      %v2267 = vand.u32 %v2261, 4294901760
      %2268 = vmatpush1.msra.mxu0 %v2267
      %2269 = vmatprep.subr.mxu0 0.0
      %v2270 = vand.u32 %v2260, 4294901760
      %2271 = vmatpush1.msra.mxu0 %v2270
      %2272 = vmatprep.subr.mxu0 0.0
      %v2273 = vand.u32 %v2259, 4294901760
      %2274 = vmatpush1.msra.mxu0 %v2273
      %2275 = vmatprep.subr.mxu0 0.0
      %v2276 = vand.u32 %v2258, 4294901760
      %2277 = vmatpush1.msra.mxu0 %v2276
      %2278 = vmatprep.subr.mxu0 0.0
      %v2279 = vand.u32 %v2257, 4294901760
      %2280 = vmatpush1.msra.mxu0 %v2279
      %2281 = vmatprep.subr.mxu0 0.0
      %v2282 = vand.u32 %v2256, 4294901760
      %2283 = vmatpush1.msra.mxu0 %v2282
      %2284 = vmatprep.subr.mxu0 0.0
      %v2285 = vand.u32 %v2255, 4294901760
      %2286 = vmatpush1.msra.mxu0 %v2285
      %2287 = vmatprep.subr.mxu0 0.0
      %v2288 = vand.u32 %v2254, 4294901760
      %2289 = vmatpush1.msra.mxu0 %v2288
      %2290 = vmatprep.subr.mxu0 0.0
      %v2291 = vand.u32 %v2253, 4294901760
      %2292 = vmatpush1.msra.mxu0 %v2291
      %2293 = vmatprep.subr.mxu0 0.0
      %v2294 = vand.u32 %v2252, 4294901760
      %2295 = vmatpush1.msra.mxu0 %v2294
      %2296 = vmatprep.subr.mxu0 0.0
      %v2297 = vand.u32 %v2251, 4294901760
      %2298 = vmatpush1.msra.mxu0 %v2297
      %2299 = vmatprep.subr.mxu0 0.0
      %v2300 = vand.u32 %v2250, 4294901760
      %2301 = vmatpush1.msra.mxu0 %v2300
      %2302 = vmatprep.subr.mxu0 0.0
      %v2303 = vand.u32 %v2249, 4294901760
      %2304 = vmatpush1.msra.mxu0 %v2303
      %2305 = vmatprep.subr.mxu0 0.0
      %v2306 = vand.u32 %v2248, 4294901760
      %2307 = vmatpush1.msra.mxu0 %v2306
      %2308 = vmatprep.subr.mxu0 0.0
      %v2309 = vand.u32 %v2247, 4294901760
      %2310 = vmatpush1.msra.mxu0 %v2309
      %2311 = vmatprep.subr.mxu0 0.0
      %2312 = vmatpush2.msra.mxu0 0.0
      %2313 = vmatprep.subr.mxu0 0.0
      %2314 = vmatpush2.msra.mxu0 0.0
      %2315 = vmatprep.subr.mxu0 0.0
      %2316 = vmatpush2.msra.mxu0 0.0
      %2317 = vmatprep.subr.mxu0 0.0
      %2318 = vmatpush2.msra.mxu0 0.0
      %2319 = vmatprep.subr.mxu0 0.0
      %2320 = vmatpush2.msra.mxu0 0.0
      %2321 = vmatprep.subr.mxu0 0.0
      %2322 = vmatpush2.msra.mxu0 0.0
      %2323 = vmatprep.subr.mxu0 0.0
      %2324 = vmatpush2.msra.mxu0 0.0
      %2325 = vmatprep.subr.mxu0 0.0
      %2326 = vmatpush2.msra.mxu0 0.0
      %2327 = vmatprep.subr.mxu0 0.0
      %2328 = vmatpush2.msra.mxu0 0.0
      %2329 = vmatprep.subr.mxu0 0.0
      %2330 = vmatpush2.msra.mxu0 0.0
      %2331 = vmatprep.subr.mxu0 0.0
      %2332 = vmatpush2.msra.mxu0 0.0
      %2333 = vmatprep.subr.mxu0 0.0
      %2334 = vmatpush2.msra.mxu0 0.0
      %2335 = vmatprep.subr.mxu0 0.0
      %2336 = vmatpush2.msra.mxu0 0.0
      %2337 = vmatprep.subr.mxu0 0.0
      %2338 = vmatpush2.msra.mxu0 0.0
      %2339 = vmatprep.subr.mxu0 0.0
      %2340 = vmatpush2.msra.mxu0 0.0
      %2341 = vmatprep.subr.mxu0 0.0
      %2342 = vmatpush2.msra.mxu0 0.0
      %2343 = vmatprep.mubr.f32.mxu0 0.0
      %v2344 = vand.u32 %v2244, 4294901760
      %v2345 = vsub.f32 %v2244, %v2344
      %v2346 = vand.u32 %v2345, 4294901760
      %v2347 = vsub.f32 %v2345, %v2346
      %v2348 = vand.u32 %v2347, 4294901760
      %2349 = vmatmul.mubr.f32.gmra.mxu0 %v2348
      %v2350 = vpop.f32.mrf.mxu0
      %v2351 = vadd.f32 0.0, %v2350
      %v2352 = vpop.f32.mrf.mxu0
      %2353 = vmatprep.mubr.f32.mxu0 0.0
      %v2354 = vand.u32 %v2245, 4294901760
      %v2355 = vsub.f32 %v2245, %v2354
      %v2356 = vand.u32 %v2355, 4294901760
      %v2357 = vsub.f32 %v2355, %v2356
      %v2358 = vand.u32 %v2357, 4294901760
      %2359 = vmatmul.mubr.f32.gmra.mxu0 %v2358
      %v2360 = vpop.f32.mrf.mxu0
      %v2361 = vadd.f32 0.0, %v2360
      %v2362 = vpop.f32.mrf.mxu0
      %2363 = vdwg.mxu0
      %2364 = vmatprep.subr.mxu0 0.0
      %v2365 = vand.u32 %v2262, 4294901760
      %v2366 = vsub.f32 %v2262, %v2365
      %v2367 = vand.u32 %v2366, 4294901760
      %v2368 = vsub.f32 %v2366, %v2367
      %v2369 = vand.u32 %v2368, 4294901760
      %2370 = vmatpush1.msra.mxu0 %v2369
      %2371 = vmatprep.subr.mxu0 0.0
      %v2372 = vand.u32 %v2261, 4294901760
      %v2373 = vsub.f32 %v2261, %v2372
      %v2374 = vand.u32 %v2373, 4294901760
      %v2375 = vsub.f32 %v2373, %v2374
      %v2376 = vand.u32 %v2375, 4294901760
      %2377 = vmatpush1.msra.mxu0 %v2376
      %2378 = vmatprep.subr.mxu0 0.0
      %v2379 = vand.u32 %v2260, 4294901760
      %v2380 = vsub.f32 %v2260, %v2379
      %v2381 = vand.u32 %v2380, 4294901760
      %v2382 = vsub.f32 %v2380, %v2381
      %v2383 = vand.u32 %v2382, 4294901760
      %2384 = vmatpush1.msra.mxu0 %v2383
      %2385 = vmatprep.subr.mxu0 0.0
      %v2386 = vand.u32 %v2259, 4294901760
      %v2387 = vsub.f32 %v2259, %v2386
      %v2388 = vand.u32 %v2387, 4294901760
      %v2389 = vsub.f32 %v2387, %v2388
      %v2390 = vand.u32 %v2389, 4294901760
      %2391 = vmatpush1.msra.mxu0 %v2390
      %2392 = vmatprep.subr.mxu0 0.0
      %v2393 = vand.u32 %v2258, 4294901760
      %v2394 = vsub.f32 %v2258, %v2393
      %v2395 = vand.u32 %v2394, 4294901760
      %v2396 = vsub.f32 %v2394, %v2395
      %v2397 = vand.u32 %v2396, 4294901760
      %2398 = vmatpush1.msra.mxu0 %v2397
      %2399 = vmatprep.subr.mxu0 0.0
      %v2400 = vand.u32 %v2257, 4294901760
      %v2401 = vsub.f32 %v2257, %v2400
      %v2402 = vand.u32 %v2401, 4294901760
      %v2403 = vsub.f32 %v2401, %v2402
      %v2404 = vand.u32 %v2403, 4294901760
      %2405 = vmatpush1.msra.mxu0 %v2404
      %2406 = vmatprep.subr.mxu0 0.0
      %v2407 = vand.u32 %v2256, 4294901760
      %v2408 = vsub.f32 %v2256, %v2407
      %v2409 = vand.u32 %v2408, 4294901760
      %v2410 = vsub.f32 %v2408, %v2409
      %v2411 = vand.u32 %v2410, 4294901760
      %2412 = vmatpush1.msra.mxu0 %v2411
      %2413 = vmatprep.subr.mxu0 0.0
      %v2414 = vand.u32 %v2255, 4294901760
      %v2415 = vsub.f32 %v2255, %v2414
      %v2416 = vand.u32 %v2415, 4294901760
      %v2417 = vsub.f32 %v2415, %v2416
      %v2418 = vand.u32 %v2417, 4294901760
      %2419 = vmatpush1.msra.mxu0 %v2418
      %2420 = vmatprep.subr.mxu0 0.0
      %v2421 = vand.u32 %v2254, 4294901760
      %v2422 = vsub.f32 %v2254, %v2421
      %v2423 = vand.u32 %v2422, 4294901760
      %v2424 = vsub.f32 %v2422, %v2423
      %v2425 = vand.u32 %v2424, 4294901760
      %2426 = vmatpush1.msra.mxu0 %v2425
      %2427 = vmatprep.subr.mxu0 0.0
      %v2428 = vand.u32 %v2253, 4294901760
      %v2429 = vsub.f32 %v2253, %v2428
      %v2430 = vand.u32 %v2429, 4294901760
      %v2431 = vsub.f32 %v2429, %v2430
      %v2432 = vand.u32 %v2431, 4294901760
      %2433 = vmatpush1.msra.mxu0 %v2432
      %2434 = vmatprep.subr.mxu0 0.0
      %v2435 = vand.u32 %v2252, 4294901760
      %v2436 = vsub.f32 %v2252, %v2435
      %v2437 = vand.u32 %v2436, 4294901760
      %v2438 = vsub.f32 %v2436, %v2437
      %v2439 = vand.u32 %v2438, 4294901760
      %2440 = vmatpush1.msra.mxu0 %v2439
      %2441 = vmatprep.subr.mxu0 0.0
      %v2442 = vand.u32 %v2251, 4294901760
      %v2443 = vsub.f32 %v2251, %v2442
      %v2444 = vand.u32 %v2443, 4294901760
      %v2445 = vsub.f32 %v2443, %v2444
      %v2446 = vand.u32 %v2445, 4294901760
      %2447 = vmatpush1.msra.mxu0 %v2446
      %2448 = vmatprep.subr.mxu0 0.0
      %v2449 = vand.u32 %v2250, 4294901760
      %v2450 = vsub.f32 %v2250, %v2449
      %v2451 = vand.u32 %v2450, 4294901760
      %v2452 = vsub.f32 %v2450, %v2451
      %v2453 = vand.u32 %v2452, 4294901760
      %2454 = vmatpush1.msra.mxu0 %v2453
      %2455 = vmatprep.subr.mxu0 0.0
      %v2456 = vand.u32 %v2249, 4294901760
      %v2457 = vsub.f32 %v2249, %v2456
      %v2458 = vand.u32 %v2457, 4294901760
      %v2459 = vsub.f32 %v2457, %v2458
      %v2460 = vand.u32 %v2459, 4294901760
      %2461 = vmatpush1.msra.mxu0 %v2460
      %2462 = vmatprep.subr.mxu0 0.0
      %v2463 = vand.u32 %v2248, 4294901760
      %v2464 = vsub.f32 %v2248, %v2463
      %v2465 = vand.u32 %v2464, 4294901760
      %v2466 = vsub.f32 %v2464, %v2465
      %v2467 = vand.u32 %v2466, 4294901760
      %2468 = vmatpush1.msra.mxu0 %v2467
      %2469 = vmatprep.subr.mxu0 0.0
      %v2470 = vand.u32 %v2247, 4294901760
      %v2471 = vsub.f32 %v2247, %v2470
      %v2472 = vand.u32 %v2471, 4294901760
      %v2473 = vsub.f32 %v2471, %v2472
      %v2474 = vand.u32 %v2473, 4294901760
      %2475 = vmatpush1.msra.mxu0 %v2474
      %2476 = vmatprep.subr.mxu0 0.0
      %2477 = vmatpush2.msra.mxu0 0.0
      %2478 = vmatprep.subr.mxu0 0.0
      %2479 = vmatpush2.msra.mxu0 0.0
      %2480 = vmatprep.subr.mxu0 0.0
      %2481 = vmatpush2.msra.mxu0 0.0
      %2482 = vmatprep.subr.mxu0 0.0
      %2483 = vmatpush2.msra.mxu0 0.0
      %2484 = vmatprep.subr.mxu0 0.0
      %2485 = vmatpush2.msra.mxu0 0.0
      %2486 = vmatprep.subr.mxu0 0.0
      %2487 = vmatpush2.msra.mxu0 0.0
      %2488 = vmatprep.subr.mxu0 0.0
      %2489 = vmatpush2.msra.mxu0 0.0
      %2490 = vmatprep.subr.mxu0 0.0
      %2491 = vmatpush2.msra.mxu0 0.0
      %2492 = vmatprep.subr.mxu0 0.0
      %2493 = vmatpush2.msra.mxu0 0.0
      %2494 = vmatprep.subr.mxu0 0.0
      %2495 = vmatpush2.msra.mxu0 0.0
      %2496 = vmatprep.subr.mxu0 0.0
      %2497 = vmatpush2.msra.mxu0 0.0
      %2498 = vmatprep.subr.mxu0 0.0
      %2499 = vmatpush2.msra.mxu0 0.0
      %2500 = vmatprep.subr.mxu0 0.0
      %2501 = vmatpush2.msra.mxu0 0.0
      %2502 = vmatprep.subr.mxu0 0.0
      %2503 = vmatpush2.msra.mxu0 0.0
      %2504 = vmatprep.subr.mxu0 0.0
      %2505 = vmatpush2.msra.mxu0 0.0
      %2506 = vmatprep.subr.mxu0 0.0
      %2507 = vmatpush2.msra.mxu0 0.0
      %2508 = vmatprep.mubr.f32.mxu0 0.0
      %v2509 = vand.u32 %v2244, 4294901760
      %2510 = vmatmul.mubr.f32.gmra.mxu0 %v2509
      %v2511 = vpop.f32.mrf.mxu0
      %v2512 = vadd.f32 %v2351, %v2511
      %v2513 = vpop.f32.mrf.mxu0
      %2514 = vmatprep.mubr.f32.mxu0 0.0
      %v2515 = vand.u32 %v2245, 4294901760
      %2516 = vmatmul.mubr.f32.gmra.mxu0 %v2515
      %v2517 = vpop.f32.mrf.mxu0
      %v2518 = vadd.f32 %v2361, %v2517
      %v2519 = vpop.f32.mrf.mxu0
      %2520 = vdwg.mxu0
      %2521 = vmatprep.subr.mxu0 0.0
      %v2522 = vand.u32 %v2262, 4294901760
      %v2523 = vsub.f32 %v2262, %v2522
      %2524 = vmatpush1.msra.mxu0 %v2523
      %2525 = vmatprep.subr.mxu0 0.0
      %v2526 = vand.u32 %v2261, 4294901760
      %v2527 = vsub.f32 %v2261, %v2526
      %2528 = vmatpush1.msra.mxu0 %v2527
      %2529 = vmatprep.subr.mxu0 0.0
      %v2530 = vand.u32 %v2260, 4294901760
      %v2531 = vsub.f32 %v2260, %v2530
      %2532 = vmatpush1.msra.mxu0 %v2531
      %2533 = vmatprep.subr.mxu0 0.0
      %v2534 = vand.u32 %v2259, 4294901760
      %v2535 = vsub.f32 %v2259, %v2534
      %2536 = vmatpush1.msra.mxu0 %v2535
      %2537 = vmatprep.subr.mxu0 0.0
      %v2538 = vand.u32 %v2258, 4294901760
      %v2539 = vsub.f32 %v2258, %v2538
      %2540 = vmatpush1.msra.mxu0 %v2539
      %2541 = vmatprep.subr.mxu0 0.0
      %v2542 = vand.u32 %v2257, 4294901760
      %v2543 = vsub.f32 %v2257, %v2542
      %2544 = vmatpush1.msra.mxu0 %v2543
      %2545 = vmatprep.subr.mxu0 0.0
      %v2546 = vand.u32 %v2256, 4294901760
      %v2547 = vsub.f32 %v2256, %v2546
      %2548 = vmatpush1.msra.mxu0 %v2547
      %2549 = vmatprep.subr.mxu0 0.0
      %v2550 = vand.u32 %v2255, 4294901760
      %v2551 = vsub.f32 %v2255, %v2550
      %2552 = vmatpush1.msra.mxu0 %v2551
      %2553 = vmatprep.subr.mxu0 0.0
      %v2554 = vand.u32 %v2254, 4294901760
      %v2555 = vsub.f32 %v2254, %v2554
      %2556 = vmatpush1.msra.mxu0 %v2555
      %2557 = vmatprep.subr.mxu0 0.0
      %v2558 = vand.u32 %v2253, 4294901760
      %v2559 = vsub.f32 %v2253, %v2558
      %2560 = vmatpush1.msra.mxu0 %v2559
      %2561 = vmatprep.subr.mxu0 0.0
      %v2562 = vand.u32 %v2252, 4294901760
      %v2563 = vsub.f32 %v2252, %v2562
      %2564 = vmatpush1.msra.mxu0 %v2563
      %2565 = vmatprep.subr.mxu0 0.0
      %v2566 = vand.u32 %v2251, 4294901760
      %v2567 = vsub.f32 %v2251, %v2566
      %2568 = vmatpush1.msra.mxu0 %v2567
      %2569 = vmatprep.subr.mxu0 0.0
      %v2570 = vand.u32 %v2250, 4294901760
      %v2571 = vsub.f32 %v2250, %v2570
      %2572 = vmatpush1.msra.mxu0 %v2571
      %2573 = vmatprep.subr.mxu0 0.0
      %v2574 = vand.u32 %v2249, 4294901760
      %v2575 = vsub.f32 %v2249, %v2574
      %2576 = vmatpush1.msra.mxu0 %v2575
      %2577 = vmatprep.subr.mxu0 0.0
      %v2578 = vand.u32 %v2248, 4294901760
      %v2579 = vsub.f32 %v2248, %v2578
      %2580 = vmatpush1.msra.mxu0 %v2579
      %2581 = vmatprep.subr.mxu0 0.0
      %v2582 = vand.u32 %v2247, 4294901760
      %v2583 = vsub.f32 %v2247, %v2582
      %2584 = vmatpush1.msra.mxu0 %v2583
      %2585 = vmatprep.subr.mxu0 0.0
      %2586 = vmatpush2.msra.mxu0 0.0
      %2587 = vmatprep.subr.mxu0 0.0
      %2588 = vmatpush2.msra.mxu0 0.0
      %2589 = vmatprep.subr.mxu0 0.0
      %2590 = vmatpush2.msra.mxu0 0.0
      %2591 = vmatprep.subr.mxu0 0.0
      %2592 = vmatpush2.msra.mxu0 0.0
      %2593 = vmatprep.subr.mxu0 0.0
      %2594 = vmatpush2.msra.mxu0 0.0
      %2595 = vmatprep.subr.mxu0 0.0
      %2596 = vmatpush2.msra.mxu0 0.0
      %2597 = vmatprep.subr.mxu0 0.0
      %2598 = vmatpush2.msra.mxu0 0.0
      %2599 = vmatprep.subr.mxu0 0.0
      %2600 = vmatpush2.msra.mxu0 0.0
      %2601 = vmatprep.subr.mxu0 0.0
      %2602 = vmatpush2.msra.mxu0 0.0
      %2603 = vmatprep.subr.mxu0 0.0
      %2604 = vmatpush2.msra.mxu0 0.0
      %2605 = vmatprep.subr.mxu0 0.0
      %2606 = vmatpush2.msra.mxu0 0.0
      %2607 = vmatprep.subr.mxu0 0.0
      %2608 = vmatpush2.msra.mxu0 0.0
      %2609 = vmatprep.subr.mxu0 0.0
      %2610 = vmatpush2.msra.mxu0 0.0
      %2611 = vmatprep.subr.mxu0 0.0
      %2612 = vmatpush2.msra.mxu0 0.0
      %2613 = vmatprep.subr.mxu0 0.0
      %2614 = vmatpush2.msra.mxu0 0.0
      %2615 = vmatprep.subr.mxu0 0.0
      %2616 = vmatpush2.msra.mxu0 0.0
      %2617 = vmatprep.mubr.f32.mxu0 0.0
      %v2618 = vand.u32 %v2244, 4294901760
      %v2619 = vsub.f32 %v2244, %v2618
      %2620 = vmatmul.mubr.f32.gmra.mxu0 %v2619
      %v2621 = vpop.f32.mrf.mxu0
      %v2622 = vadd.f32 %v2512, %v2621
      %v2623 = vpop.f32.mrf.mxu0
      %2624 = vmatprep.mubr.f32.mxu0 0.0
      %v2625 = vand.u32 %v2245, 4294901760
      %v2626 = vsub.f32 %v2245, %v2625
      %2627 = vmatmul.mubr.f32.gmra.mxu0 %v2626
      %v2628 = vpop.f32.mrf.mxu0
      %v2629 = vadd.f32 %v2518, %v2628
      %v2630 = vpop.f32.mrf.mxu0
      %2631 = vdwg.mxu0
      %2632 = vmatprep.subr.mxu0 0.0
      %v2633 = vand.u32 %v2262, 4294901760
      %2634 = vmatpush1.msra.mxu0 %v2633
      %2635 = vmatprep.subr.mxu0 0.0
      %v2636 = vand.u32 %v2261, 4294901760
      %2637 = vmatpush1.msra.mxu0 %v2636
      %2638 = vmatprep.subr.mxu0 0.0
      %v2639 = vand.u32 %v2260, 4294901760
      %2640 = vmatpush1.msra.mxu0 %v2639
      %2641 = vmatprep.subr.mxu0 0.0
      %v2642 = vand.u32 %v2259, 4294901760
      %2643 = vmatpush1.msra.mxu0 %v2642
      %2644 = vmatprep.subr.mxu0 0.0
      %v2645 = vand.u32 %v2258, 4294901760
      %2646 = vmatpush1.msra.mxu0 %v2645
      %2647 = vmatprep.subr.mxu0 0.0
      %v2648 = vand.u32 %v2257, 4294901760
      %2649 = vmatpush1.msra.mxu0 %v2648
      %2650 = vmatprep.subr.mxu0 0.0
      %v2651 = vand.u32 %v2256, 4294901760
      %2652 = vmatpush1.msra.mxu0 %v2651
      %2653 = vmatprep.subr.mxu0 0.0
      %v2654 = vand.u32 %v2255, 4294901760
      %2655 = vmatpush1.msra.mxu0 %v2654
      %2656 = vmatprep.subr.mxu0 0.0
      %v2657 = vand.u32 %v2254, 4294901760
      %2658 = vmatpush1.msra.mxu0 %v2657
      %2659 = vmatprep.subr.mxu0 0.0
      %v2660 = vand.u32 %v2253, 4294901760
      %2661 = vmatpush1.msra.mxu0 %v2660
      %2662 = vmatprep.subr.mxu0 0.0
      %v2663 = vand.u32 %v2252, 4294901760
      %2664 = vmatpush1.msra.mxu0 %v2663
      %2665 = vmatprep.subr.mxu0 0.0
      %v2666 = vand.u32 %v2251, 4294901760
      %2667 = vmatpush1.msra.mxu0 %v2666
      %2668 = vmatprep.subr.mxu0 0.0
      %v2669 = vand.u32 %v2250, 4294901760
      %2670 = vmatpush1.msra.mxu0 %v2669
      %2671 = vmatprep.subr.mxu0 0.0
      %v2672 = vand.u32 %v2249, 4294901760
      %2673 = vmatpush1.msra.mxu0 %v2672
      %2674 = vmatprep.subr.mxu0 0.0
      %v2675 = vand.u32 %v2248, 4294901760
      %2676 = vmatpush1.msra.mxu0 %v2675
      %2677 = vmatprep.subr.mxu0 0.0
      %v2678 = vand.u32 %v2247, 4294901760
      %2679 = vmatpush1.msra.mxu0 %v2678
      %2680 = vmatprep.subr.mxu0 0.0
      %2681 = vmatpush2.msra.mxu0 0.0
      %2682 = vmatprep.subr.mxu0 0.0
      %2683 = vmatpush2.msra.mxu0 0.0
      %2684 = vmatprep.subr.mxu0 0.0
      %2685 = vmatpush2.msra.mxu0 0.0
      %2686 = vmatprep.subr.mxu0 0.0
      %2687 = vmatpush2.msra.mxu0 0.0
      %2688 = vmatprep.subr.mxu0 0.0
      %2689 = vmatpush2.msra.mxu0 0.0
      %2690 = vmatprep.subr.mxu0 0.0
      %2691 = vmatpush2.msra.mxu0 0.0
      %2692 = vmatprep.subr.mxu0 0.0
      %2693 = vmatpush2.msra.mxu0 0.0
      %2694 = vmatprep.subr.mxu0 0.0
      %2695 = vmatpush2.msra.mxu0 0.0
      %2696 = vmatprep.subr.mxu0 0.0
      %2697 = vmatpush2.msra.mxu0 0.0
      %2698 = vmatprep.subr.mxu0 0.0
      %2699 = vmatpush2.msra.mxu0 0.0
      %2700 = vmatprep.subr.mxu0 0.0
      %2701 = vmatpush2.msra.mxu0 0.0
      %2702 = vmatprep.subr.mxu0 0.0
      %2703 = vmatpush2.msra.mxu0 0.0
      %2704 = vmatprep.subr.mxu0 0.0
      %2705 = vmatpush2.msra.mxu0 0.0
      %2706 = vmatprep.subr.mxu0 0.0
      %2707 = vmatpush2.msra.mxu0 0.0
      %2708 = vmatprep.subr.mxu0 0.0
      %2709 = vmatpush2.msra.mxu0 0.0
      %2710 = vmatprep.subr.mxu0 0.0
      %2711 = vmatpush2.msra.mxu0 0.0
      %2712 = vmatprep.mubr.f32.mxu0 0.0
      %v2713 = vand.u32 %v2244, 4294901760
      %v2714 = vsub.f32 %v2244, %v2713
      %v2715 = vand.u32 %v2714, 4294901760
      %2716 = vmatmul.mubr.f32.gmra.mxu0 %v2715
      %v2717 = vpop.f32.mrf.mxu0
      %v2718 = vadd.f32 %v2622, %v2717
      %v2719 = vpop.f32.mrf.mxu0
      %2720 = vmatprep.mubr.f32.mxu0 0.0
      %v2721 = vand.u32 %v2245, 4294901760
      %v2722 = vsub.f32 %v2245, %v2721
      %v2723 = vand.u32 %v2722, 4294901760
      %2724 = vmatmul.mubr.f32.gmra.mxu0 %v2723
      %v2725 = vpop.f32.mrf.mxu0
      %v2726 = vadd.f32 %v2629, %v2725
      %v2727 = vpop.f32.mrf.mxu0
      %2728 = vdwg.mxu0
      %2729 = vmatprep.subr.mxu0 0.0
      %v2730 = vand.u32 %v2262, 4294901760
      %v2731 = vsub.f32 %v2262, %v2730
      %v2732 = vand.u32 %v2731, 4294901760
      %2733 = vmatpush1.msra.mxu0 %v2732
      %2734 = vmatprep.subr.mxu0 0.0
      %v2735 = vand.u32 %v2261, 4294901760
      %v2736 = vsub.f32 %v2261, %v2735
      %v2737 = vand.u32 %v2736, 4294901760
      %2738 = vmatpush1.msra.mxu0 %v2737
      %2739 = vmatprep.subr.mxu0 0.0
      %v2740 = vand.u32 %v2260, 4294901760
      %v2741 = vsub.f32 %v2260, %v2740
      %v2742 = vand.u32 %v2741, 4294901760
      %2743 = vmatpush1.msra.mxu0 %v2742
      %2744 = vmatprep.subr.mxu0 0.0
      %v2745 = vand.u32 %v2259, 4294901760
      %v2746 = vsub.f32 %v2259, %v2745
      %v2747 = vand.u32 %v2746, 4294901760
      %2748 = vmatpush1.msra.mxu0 %v2747
      %2749 = vmatprep.subr.mxu0 0.0
      %v2750 = vand.u32 %v2258, 4294901760
      %v2751 = vsub.f32 %v2258, %v2750
      %v2752 = vand.u32 %v2751, 4294901760
      %2753 = vmatpush1.msra.mxu0 %v2752
      %2754 = vmatprep.subr.mxu0 0.0
      %v2755 = vand.u32 %v2257, 4294901760
      %v2756 = vsub.f32 %v2257, %v2755
      %v2757 = vand.u32 %v2756, 4294901760
      %2758 = vmatpush1.msra.mxu0 %v2757
      %2759 = vmatprep.subr.mxu0 0.0
      %v2760 = vand.u32 %v2256, 4294901760
      %v2761 = vsub.f32 %v2256, %v2760
      %v2762 = vand.u32 %v2761, 4294901760
      %2763 = vmatpush1.msra.mxu0 %v2762
      %2764 = vmatprep.subr.mxu0 0.0
      %v2765 = vand.u32 %v2255, 4294901760
      %v2766 = vsub.f32 %v2255, %v2765
      %v2767 = vand.u32 %v2766, 4294901760
      %2768 = vmatpush1.msra.mxu0 %v2767
      %2769 = vmatprep.subr.mxu0 0.0
      %v2770 = vand.u32 %v2254, 4294901760
      %v2771 = vsub.f32 %v2254, %v2770
      %v2772 = vand.u32 %v2771, 4294901760
      %2773 = vmatpush1.msra.mxu0 %v2772
      %2774 = vmatprep.subr.mxu0 0.0
      %v2775 = vand.u32 %v2253, 4294901760
      %v2776 = vsub.f32 %v2253, %v2775
      %v2777 = vand.u32 %v2776, 4294901760
      %2778 = vmatpush1.msra.mxu0 %v2777
      %2779 = vmatprep.subr.mxu0 0.0
      %v2780 = vand.u32 %v2252, 4294901760
      %v2781 = vsub.f32 %v2252, %v2780
      %v2782 = vand.u32 %v2781, 4294901760
      %2783 = vmatpush1.msra.mxu0 %v2782
      %2784 = vmatprep.subr.mxu0 0.0
      %v2785 = vand.u32 %v2251, 4294901760
      %v2786 = vsub.f32 %v2251, %v2785
      %v2787 = vand.u32 %v2786, 4294901760
      %2788 = vmatpush1.msra.mxu0 %v2787
      %2789 = vmatprep.subr.mxu0 0.0
      %v2790 = vand.u32 %v2250, 4294901760
      %v2791 = vsub.f32 %v2250, %v2790
      %v2792 = vand.u32 %v2791, 4294901760
      %2793 = vmatpush1.msra.mxu0 %v2792
      %2794 = vmatprep.subr.mxu0 0.0
      %v2795 = vand.u32 %v2249, 4294901760
      %v2796 = vsub.f32 %v2249, %v2795
      %v2797 = vand.u32 %v2796, 4294901760
      %2798 = vmatpush1.msra.mxu0 %v2797
      %2799 = vmatprep.subr.mxu0 0.0
      %v2800 = vand.u32 %v2248, 4294901760
      %v2801 = vsub.f32 %v2248, %v2800
      %v2802 = vand.u32 %v2801, 4294901760
      %2803 = vmatpush1.msra.mxu0 %v2802
      %2804 = vmatprep.subr.mxu0 0.0
      %v2805 = vand.u32 %v2247, 4294901760
      %v2806 = vsub.f32 %v2247, %v2805
      %v2807 = vand.u32 %v2806, 4294901760
      %2808 = vmatpush1.msra.mxu0 %v2807
      %2809 = vmatprep.subr.mxu0 0.0
      %2810 = vmatpush2.msra.mxu0 0.0
      %2811 = vmatprep.subr.mxu0 0.0
      %2812 = vmatpush2.msra.mxu0 0.0
      %2813 = vmatprep.subr.mxu0 0.0
      %2814 = vmatpush2.msra.mxu0 0.0
      %2815 = vmatprep.subr.mxu0 0.0
      %2816 = vmatpush2.msra.mxu0 0.0
      %2817 = vmatprep.subr.mxu0 0.0
      %2818 = vmatpush2.msra.mxu0 0.0
      %2819 = vmatprep.subr.mxu0 0.0
      %2820 = vmatpush2.msra.mxu0 0.0
      %2821 = vmatprep.subr.mxu0 0.0
      %2822 = vmatpush2.msra.mxu0 0.0
      %2823 = vmatprep.subr.mxu0 0.0
      %2824 = vmatpush2.msra.mxu0 0.0
      %2825 = vmatprep.subr.mxu0 0.0
      %2826 = vmatpush2.msra.mxu0 0.0
      %2827 = vmatprep.subr.mxu0 0.0
      %2828 = vmatpush2.msra.mxu0 0.0
      %2829 = vmatprep.subr.mxu0 0.0
      %2830 = vmatpush2.msra.mxu0 0.0
      %2831 = vmatprep.subr.mxu0 0.0
      %2832 = vmatpush2.msra.mxu0 0.0
      %2833 = vmatprep.subr.mxu0 0.0
      %2834 = vmatpush2.msra.mxu0 0.0
      %2835 = vmatprep.subr.mxu0 0.0
      %2836 = vmatpush2.msra.mxu0 0.0
      %2837 = vmatprep.subr.mxu0 0.0
      %2838 = vmatpush2.msra.mxu0 0.0
      %2839 = vmatprep.subr.mxu0 0.0
      %2840 = vmatpush2.msra.mxu0 0.0
      %2841 = vmatprep.mubr.f32.mxu0 0.0
      %v2842 = vand.u32 %v2244, 4294901760
      %2843 = vmatmul.mubr.f32.gmra.mxu0 %v2842
      %v2844 = vpop.f32.mrf.mxu0
      %v2845 = vadd.f32 %v2718, %v2844
      %v2846 = vpop.f32.mrf.mxu0
      %2847 = vmatprep.mubr.f32.mxu0 0.0
      %v2848 = vand.u32 %v2245, 4294901760
      %2849 = vmatmul.mubr.f32.gmra.mxu0 %v2848
      %v2850 = vpop.f32.mrf.mxu0
      %v2851 = vadd.f32 %v2726, %v2850
      %v2852 = vpop.f32.mrf.mxu0
      %2853 = vdwg.mxu0
      %2854 = vmatprep.subr.mxu0 0.0
      %v2855 = vand.u32 %v2262, 4294901760
      %2856 = vmatpush1.msra.mxu0 %v2855
      %2857 = vmatprep.subr.mxu0 0.0
      %v2858 = vand.u32 %v2261, 4294901760
      %2859 = vmatpush1.msra.mxu0 %v2858
      %2860 = vmatprep.subr.mxu0 0.0
      %v2861 = vand.u32 %v2260, 4294901760
      %2862 = vmatpush1.msra.mxu0 %v2861
      %2863 = vmatprep.subr.mxu0 0.0
      %v2864 = vand.u32 %v2259, 4294901760
      %2865 = vmatpush1.msra.mxu0 %v2864
      %2866 = vmatprep.subr.mxu0 0.0
      %v2867 = vand.u32 %v2258, 4294901760
      %2868 = vmatpush1.msra.mxu0 %v2867
      %2869 = vmatprep.subr.mxu0 0.0
      %v2870 = vand.u32 %v2257, 4294901760
      %2871 = vmatpush1.msra.mxu0 %v2870
      %2872 = vmatprep.subr.mxu0 0.0
      %v2873 = vand.u32 %v2256, 4294901760
      %2874 = vmatpush1.msra.mxu0 %v2873
      %2875 = vmatprep.subr.mxu0 0.0
      %v2876 = vand.u32 %v2255, 4294901760
      %2877 = vmatpush1.msra.mxu0 %v2876
      %2878 = vmatprep.subr.mxu0 0.0
      %v2879 = vand.u32 %v2254, 4294901760
      %2880 = vmatpush1.msra.mxu0 %v2879
      %2881 = vmatprep.subr.mxu0 0.0
      %v2882 = vand.u32 %v2253, 4294901760
      %2883 = vmatpush1.msra.mxu0 %v2882
      %2884 = vmatprep.subr.mxu0 0.0
      %v2885 = vand.u32 %v2252, 4294901760
      %2886 = vmatpush1.msra.mxu0 %v2885
      %2887 = vmatprep.subr.mxu0 0.0
      %v2888 = vand.u32 %v2251, 4294901760
      %2889 = vmatpush1.msra.mxu0 %v2888
      %2890 = vmatprep.subr.mxu0 0.0
      %v2891 = vand.u32 %v2250, 4294901760
      %2892 = vmatpush1.msra.mxu0 %v2891
      %2893 = vmatprep.subr.mxu0 0.0
      %v2894 = vand.u32 %v2249, 4294901760
      %2895 = vmatpush1.msra.mxu0 %v2894
      %2896 = vmatprep.subr.mxu0 0.0
      %v2897 = vand.u32 %v2248, 4294901760
      %2898 = vmatpush1.msra.mxu0 %v2897
      %2899 = vmatprep.subr.mxu0 0.0
      %v2900 = vand.u32 %v2247, 4294901760
      %2901 = vmatpush1.msra.mxu0 %v2900
      %2902 = vmatprep.subr.mxu0 0.0
      %2903 = vmatpush2.msra.mxu0 0.0
      %2904 = vmatprep.subr.mxu0 0.0
      %2905 = vmatpush2.msra.mxu0 0.0
      %2906 = vmatprep.subr.mxu0 0.0
      %2907 = vmatpush2.msra.mxu0 0.0
      %2908 = vmatprep.subr.mxu0 0.0
      %2909 = vmatpush2.msra.mxu0 0.0
      %2910 = vmatprep.subr.mxu0 0.0
      %2911 = vmatpush2.msra.mxu0 0.0
      %2912 = vmatprep.subr.mxu0 0.0
      %2913 = vmatpush2.msra.mxu0 0.0
      %2914 = vmatprep.subr.mxu0 0.0
      %2915 = vmatpush2.msra.mxu0 0.0
      %2916 = vmatprep.subr.mxu0 0.0
      %2917 = vmatpush2.msra.mxu0 0.0
      %2918 = vmatprep.subr.mxu0 0.0
      %2919 = vmatpush2.msra.mxu0 0.0
      %2920 = vmatprep.subr.mxu0 0.0
      %2921 = vmatpush2.msra.mxu0 0.0
      %2922 = vmatprep.subr.mxu0 0.0
      %2923 = vmatpush2.msra.mxu0 0.0
      %2924 = vmatprep.subr.mxu0 0.0
      %2925 = vmatpush2.msra.mxu0 0.0
      %2926 = vmatprep.subr.mxu0 0.0
      %2927 = vmatpush2.msra.mxu0 0.0
      %2928 = vmatprep.subr.mxu0 0.0
      %2929 = vmatpush2.msra.mxu0 0.0
      %2930 = vmatprep.subr.mxu0 0.0
      %2931 = vmatpush2.msra.mxu0 0.0
      %2932 = vmatprep.subr.mxu0 0.0
      %2933 = vmatpush2.msra.mxu0 0.0
      %2934 = vmatprep.mubr.f32.mxu0 0.0
      %v2935 = vand.u32 %v2244, 4294901760
      %2936 = vmatmul.mubr.f32.gmra.mxu0 %v2935
      %v2937 = vpop.f32.mrf.mxu0
      %v2938 = vadd.f32 %v2845, %v2937
      %v2939 = vpop.f32.mrf.mxu0
      %2940 = vmatprep.mubr.f32.mxu0 0.0
      %v2941 = vand.u32 %v2245, 4294901760
      %2942 = vmatmul.mubr.f32.gmra.mxu0 %v2941
      %v2943 = vpop.f32.mrf.mxu0
      %v2944 = vadd.f32 %v2851, %v2943
      %v2945 = vpop.f32.mrf.mxu0
      %2946 = vdwg.mxu0
      %v2947 = vadd.f32 %v2235, %v2938
      %v2948 = vadd.f32 %v2241, %v2944
      %v2949 = vld [vmem:[#allocation2 + $0x3] sm:$0xff]
      %v2950 = vld [vmem:[#allocation2 + $0xb] sm:$0xff]
      %s2951 = scalar_lea.vmem %s3, 384
      %v2952 = vld [vmem:[%s2951] sm:$0xff]
      %v2953 = vld [vmem:[%s2951 + $0x8] sm:$0xff]
      %v2954 = vld [vmem:[%s2951 + $0x10] sm:$0xff]
      %v2955 = vld [vmem:[%s2951 + $0x18] sm:$0xff]
      %v2956 = vld [vmem:[%s2951 + $0x20] sm:$0xff]
      %v2957 = vld [vmem:[%s2951 + $0x28] sm:$0xff]
      %v2958 = vld [vmem:[%s2951 + $0x30] sm:$0xff]
      %v2959 = vld [vmem:[%s2951 + $0x38] sm:$0xff]
      %v2960 = vld [vmem:[%s2951 + $0x40] sm:$0xff]
      %v2961 = vld [vmem:[%s2951 + $0x48] sm:$0xff]
      %v2962 = vld [vmem:[%s2951 + $0x50] sm:$0xff]
      %v2963 = vld [vmem:[%s2951 + $0x58] sm:$0xff]
      %v2964 = vld [vmem:[%s2951 + $0x60] sm:$0xff]
      %v2965 = vld [vmem:[%s2951 + $0x68] sm:$0xff]
      %v2966 = vld [vmem:[%s2951 + $0x70] sm:$0xff]
      %v2967 = vld [vmem:[%s2951 + $0x78] sm:$0xff]
      %2968 = vmatprep.subr.mxu0 0.0
      %v2969 = vand.u32 %v2967, 4294901760
      %2970 = vmatpush1.msra.mxu0 %v2969
      %2971 = vmatprep.subr.mxu0 0.0
      %v2972 = vand.u32 %v2966, 4294901760
      %2973 = vmatpush1.msra.mxu0 %v2972
      %2974 = vmatprep.subr.mxu0 0.0
      %v2975 = vand.u32 %v2965, 4294901760
      %2976 = vmatpush1.msra.mxu0 %v2975
      %2977 = vmatprep.subr.mxu0 0.0
      %v2978 = vand.u32 %v2964, 4294901760
      %2979 = vmatpush1.msra.mxu0 %v2978
      %2980 = vmatprep.subr.mxu0 0.0
      %v2981 = vand.u32 %v2963, 4294901760
      %2982 = vmatpush1.msra.mxu0 %v2981
      %2983 = vmatprep.subr.mxu0 0.0
      %v2984 = vand.u32 %v2962, 4294901760
      %2985 = vmatpush1.msra.mxu0 %v2984
      %2986 = vmatprep.subr.mxu0 0.0
      %v2987 = vand.u32 %v2961, 4294901760
      %2988 = vmatpush1.msra.mxu0 %v2987
      %2989 = vmatprep.subr.mxu0 0.0
      %v2990 = vand.u32 %v2960, 4294901760
      %2991 = vmatpush1.msra.mxu0 %v2990
      %2992 = vmatprep.subr.mxu0 0.0
      %v2993 = vand.u32 %v2959, 4294901760
      %2994 = vmatpush1.msra.mxu0 %v2993
      %2995 = vmatprep.subr.mxu0 0.0
      %v2996 = vand.u32 %v2958, 4294901760
      %2997 = vmatpush1.msra.mxu0 %v2996
      %2998 = vmatprep.subr.mxu0 0.0
      %v2999 = vand.u32 %v2957, 4294901760
      %3000 = vmatpush1.msra.mxu0 %v2999
      %3001 = vmatprep.subr.mxu0 0.0
      %v3002 = vand.u32 %v2956, 4294901760
      %3003 = vmatpush1.msra.mxu0 %v3002
      %3004 = vmatprep.subr.mxu0 0.0
      %v3005 = vand.u32 %v2955, 4294901760
      %3006 = vmatpush1.msra.mxu0 %v3005
      %3007 = vmatprep.subr.mxu0 0.0
      %v3008 = vand.u32 %v2954, 4294901760
      %3009 = vmatpush1.msra.mxu0 %v3008
      %3010 = vmatprep.subr.mxu0 0.0
      %v3011 = vand.u32 %v2953, 4294901760
      %3012 = vmatpush1.msra.mxu0 %v3011
      %3013 = vmatprep.subr.mxu0 0.0
      %v3014 = vand.u32 %v2952, 4294901760
      %3015 = vmatpush1.msra.mxu0 %v3014
      %3016 = vmatprep.subr.mxu0 0.0
      %3017 = vmatpush2.msra.mxu0 0.0
      %3018 = vmatprep.subr.mxu0 0.0
      %3019 = vmatpush2.msra.mxu0 0.0
      %3020 = vmatprep.subr.mxu0 0.0
      %3021 = vmatpush2.msra.mxu0 0.0
      %3022 = vmatprep.subr.mxu0 0.0
      %3023 = vmatpush2.msra.mxu0 0.0
      %3024 = vmatprep.subr.mxu0 0.0
      %3025 = vmatpush2.msra.mxu0 0.0
      %3026 = vmatprep.subr.mxu0 0.0
      %3027 = vmatpush2.msra.mxu0 0.0
      %3028 = vmatprep.subr.mxu0 0.0
      %3029 = vmatpush2.msra.mxu0 0.0
      %3030 = vmatprep.subr.mxu0 0.0
      %3031 = vmatpush2.msra.mxu0 0.0
      %3032 = vmatprep.subr.mxu0 0.0
      %3033 = vmatpush2.msra.mxu0 0.0
      %3034 = vmatprep.subr.mxu0 0.0
      %3035 = vmatpush2.msra.mxu0 0.0
      %3036 = vmatprep.subr.mxu0 0.0
      %3037 = vmatpush2.msra.mxu0 0.0
      %3038 = vmatprep.subr.mxu0 0.0
      %3039 = vmatpush2.msra.mxu0 0.0
      %3040 = vmatprep.subr.mxu0 0.0
      %3041 = vmatpush2.msra.mxu0 0.0
      %3042 = vmatprep.subr.mxu0 0.0
      %3043 = vmatpush2.msra.mxu0 0.0
      %3044 = vmatprep.subr.mxu0 0.0
      %3045 = vmatpush2.msra.mxu0 0.0
      %3046 = vmatprep.subr.mxu0 0.0
      %3047 = vmatpush2.msra.mxu0 0.0
      %3048 = vmatprep.mubr.f32.mxu0 0.0
      %v3049 = vand.u32 %v2949, 4294901760
      %v3050 = vsub.f32 %v2949, %v3049
      %v3051 = vand.u32 %v3050, 4294901760
      %v3052 = vsub.f32 %v3050, %v3051
      %v3053 = vand.u32 %v3052, 4294901760
      %3054 = vmatmul.mubr.f32.gmra.mxu0 %v3053
      %v3055 = vpop.f32.mrf.mxu0
      %v3056 = vadd.f32 0.0, %v3055
      %v3057 = vpop.f32.mrf.mxu0
      %3058 = vmatprep.mubr.f32.mxu0 0.0
      %v3059 = vand.u32 %v2950, 4294901760
      %v3060 = vsub.f32 %v2950, %v3059
      %v3061 = vand.u32 %v3060, 4294901760
      %v3062 = vsub.f32 %v3060, %v3061
      %v3063 = vand.u32 %v3062, 4294901760
      %3064 = vmatmul.mubr.f32.gmra.mxu0 %v3063
      %v3065 = vpop.f32.mrf.mxu0
      %v3066 = vadd.f32 0.0, %v3065
      %v3067 = vpop.f32.mrf.mxu0
      %3068 = vdwg.mxu0
      %3069 = vmatprep.subr.mxu0 0.0
      %v3070 = vand.u32 %v2967, 4294901760
      %v3071 = vsub.f32 %v2967, %v3070
      %v3072 = vand.u32 %v3071, 4294901760
      %v3073 = vsub.f32 %v3071, %v3072
      %v3074 = vand.u32 %v3073, 4294901760
      %3075 = vmatpush1.msra.mxu0 %v3074
      %3076 = vmatprep.subr.mxu0 0.0
      %v3077 = vand.u32 %v2966, 4294901760
      %v3078 = vsub.f32 %v2966, %v3077
      %v3079 = vand.u32 %v3078, 4294901760
      %v3080 = vsub.f32 %v3078, %v3079
      %v3081 = vand.u32 %v3080, 4294901760
      %3082 = vmatpush1.msra.mxu0 %v3081
      %3083 = vmatprep.subr.mxu0 0.0
      %v3084 = vand.u32 %v2965, 4294901760
      %v3085 = vsub.f32 %v2965, %v3084
      %v3086 = vand.u32 %v3085, 4294901760
      %v3087 = vsub.f32 %v3085, %v3086
      %v3088 = vand.u32 %v3087, 4294901760
      %3089 = vmatpush1.msra.mxu0 %v3088
      %3090 = vmatprep.subr.mxu0 0.0
      %v3091 = vand.u32 %v2964, 4294901760
      %v3092 = vsub.f32 %v2964, %v3091
      %v3093 = vand.u32 %v3092, 4294901760
      %v3094 = vsub.f32 %v3092, %v3093
      %v3095 = vand.u32 %v3094, 4294901760
      %3096 = vmatpush1.msra.mxu0 %v3095
      %3097 = vmatprep.subr.mxu0 0.0
      %v3098 = vand.u32 %v2963, 4294901760
      %v3099 = vsub.f32 %v2963, %v3098
      %v3100 = vand.u32 %v3099, 4294901760
      %v3101 = vsub.f32 %v3099, %v3100
      %v3102 = vand.u32 %v3101, 4294901760
      %3103 = vmatpush1.msra.mxu0 %v3102
      %3104 = vmatprep.subr.mxu0 0.0
      %v3105 = vand.u32 %v2962, 4294901760
      %v3106 = vsub.f32 %v2962, %v3105
      %v3107 = vand.u32 %v3106, 4294901760
      %v3108 = vsub.f32 %v3106, %v3107
      %v3109 = vand.u32 %v3108, 4294901760
      %3110 = vmatpush1.msra.mxu0 %v3109
      %3111 = vmatprep.subr.mxu0 0.0
      %v3112 = vand.u32 %v2961, 4294901760
      %v3113 = vsub.f32 %v2961, %v3112
      %v3114 = vand.u32 %v3113, 4294901760
      %v3115 = vsub.f32 %v3113, %v3114
      %v3116 = vand.u32 %v3115, 4294901760
      %3117 = vmatpush1.msra.mxu0 %v3116
      %3118 = vmatprep.subr.mxu0 0.0
      %v3119 = vand.u32 %v2960, 4294901760
      %v3120 = vsub.f32 %v2960, %v3119
      %v3121 = vand.u32 %v3120, 4294901760
      %v3122 = vsub.f32 %v3120, %v3121
      %v3123 = vand.u32 %v3122, 4294901760
      %3124 = vmatpush1.msra.mxu0 %v3123
      %3125 = vmatprep.subr.mxu0 0.0
      %v3126 = vand.u32 %v2959, 4294901760
      %v3127 = vsub.f32 %v2959, %v3126
      %v3128 = vand.u32 %v3127, 4294901760
      %v3129 = vsub.f32 %v3127, %v3128
      %v3130 = vand.u32 %v3129, 4294901760
      %3131 = vmatpush1.msra.mxu0 %v3130
      %3132 = vmatprep.subr.mxu0 0.0
      %v3133 = vand.u32 %v2958, 4294901760
      %v3134 = vsub.f32 %v2958, %v3133
      %v3135 = vand.u32 %v3134, 4294901760
      %v3136 = vsub.f32 %v3134, %v3135
      %v3137 = vand.u32 %v3136, 4294901760
      %3138 = vmatpush1.msra.mxu0 %v3137
      %3139 = vmatprep.subr.mxu0 0.0
      %v3140 = vand.u32 %v2957, 4294901760
      %v3141 = vsub.f32 %v2957, %v3140
      %v3142 = vand.u32 %v3141, 4294901760
      %v3143 = vsub.f32 %v3141, %v3142
      %v3144 = vand.u32 %v3143, 4294901760
      %3145 = vmatpush1.msra.mxu0 %v3144
      %3146 = vmatprep.subr.mxu0 0.0
      %v3147 = vand.u32 %v2956, 4294901760
      %v3148 = vsub.f32 %v2956, %v3147
      %v3149 = vand.u32 %v3148, 4294901760
      %v3150 = vsub.f32 %v3148, %v3149
      %v3151 = vand.u32 %v3150, 4294901760
      %3152 = vmatpush1.msra.mxu0 %v3151
      %3153 = vmatprep.subr.mxu0 0.0
      %v3154 = vand.u32 %v2955, 4294901760
      %v3155 = vsub.f32 %v2955, %v3154
      %v3156 = vand.u32 %v3155, 4294901760
      %v3157 = vsub.f32 %v3155, %v3156
      %v3158 = vand.u32 %v3157, 4294901760
      %3159 = vmatpush1.msra.mxu0 %v3158
      %3160 = vmatprep.subr.mxu0 0.0
      %v3161 = vand.u32 %v2954, 4294901760
      %v3162 = vsub.f32 %v2954, %v3161
      %v3163 = vand.u32 %v3162, 4294901760
      %v3164 = vsub.f32 %v3162, %v3163
      %v3165 = vand.u32 %v3164, 4294901760
      %3166 = vmatpush1.msra.mxu0 %v3165
      %3167 = vmatprep.subr.mxu0 0.0
      %v3168 = vand.u32 %v2953, 4294901760
      %v3169 = vsub.f32 %v2953, %v3168
      %v3170 = vand.u32 %v3169, 4294901760
      %v3171 = vsub.f32 %v3169, %v3170
      %v3172 = vand.u32 %v3171, 4294901760
      %3173 = vmatpush1.msra.mxu0 %v3172
      %3174 = vmatprep.subr.mxu0 0.0
      %v3175 = vand.u32 %v2952, 4294901760
      %v3176 = vsub.f32 %v2952, %v3175
      %v3177 = vand.u32 %v3176, 4294901760
      %v3178 = vsub.f32 %v3176, %v3177
      %v3179 = vand.u32 %v3178, 4294901760
      %3180 = vmatpush1.msra.mxu0 %v3179
      %3181 = vmatprep.subr.mxu0 0.0
      %3182 = vmatpush2.msra.mxu0 0.0
      %3183 = vmatprep.subr.mxu0 0.0
      %3184 = vmatpush2.msra.mxu0 0.0
      %3185 = vmatprep.subr.mxu0 0.0
      %3186 = vmatpush2.msra.mxu0 0.0
      %3187 = vmatprep.subr.mxu0 0.0
      %3188 = vmatpush2.msra.mxu0 0.0
      %3189 = vmatprep.subr.mxu0 0.0
      %3190 = vmatpush2.msra.mxu0 0.0
      %3191 = vmatprep.subr.mxu0 0.0
      %3192 = vmatpush2.msra.mxu0 0.0
      %3193 = vmatprep.subr.mxu0 0.0
      %3194 = vmatpush2.msra.mxu0 0.0
      %3195 = vmatprep.subr.mxu0 0.0
      %3196 = vmatpush2.msra.mxu0 0.0
      %3197 = vmatprep.subr.mxu0 0.0
      %3198 = vmatpush2.msra.mxu0 0.0
      %3199 = vmatprep.subr.mxu0 0.0
      %3200 = vmatpush2.msra.mxu0 0.0
      %3201 = vmatprep.subr.mxu0 0.0
      %3202 = vmatpush2.msra.mxu0 0.0
      %3203 = vmatprep.subr.mxu0 0.0
      %3204 = vmatpush2.msra.mxu0 0.0
      %3205 = vmatprep.subr.mxu0 0.0
      %3206 = vmatpush2.msra.mxu0 0.0
      %3207 = vmatprep.subr.mxu0 0.0
      %3208 = vmatpush2.msra.mxu0 0.0
      %3209 = vmatprep.subr.mxu0 0.0
      %3210 = vmatpush2.msra.mxu0 0.0
      %3211 = vmatprep.subr.mxu0 0.0
      %3212 = vmatpush2.msra.mxu0 0.0
      %3213 = vmatprep.mubr.f32.mxu0 0.0
      %v3214 = vand.u32 %v2949, 4294901760
      %3215 = vmatmul.mubr.f32.gmra.mxu0 %v3214
      %v3216 = vpop.f32.mrf.mxu0
      %v3217 = vadd.f32 %v3056, %v3216
      %v3218 = vpop.f32.mrf.mxu0
      %3219 = vmatprep.mubr.f32.mxu0 0.0
      %v3220 = vand.u32 %v2950, 4294901760
      %3221 = vmatmul.mubr.f32.gmra.mxu0 %v3220
      %v3222 = vpop.f32.mrf.mxu0
      %v3223 = vadd.f32 %v3066, %v3222
      %v3224 = vpop.f32.mrf.mxu0
      %3225 = vdwg.mxu0
      %3226 = vmatprep.subr.mxu0 0.0
      %v3227 = vand.u32 %v2967, 4294901760
      %v3228 = vsub.f32 %v2967, %v3227
      %3229 = vmatpush1.msra.mxu0 %v3228
      %3230 = vmatprep.subr.mxu0 0.0
      %v3231 = vand.u32 %v2966, 4294901760
      %v3232 = vsub.f32 %v2966, %v3231
      %3233 = vmatpush1.msra.mxu0 %v3232
      %3234 = vmatprep.subr.mxu0 0.0
      %v3235 = vand.u32 %v2965, 4294901760
      %v3236 = vsub.f32 %v2965, %v3235
      %3237 = vmatpush1.msra.mxu0 %v3236
      %3238 = vmatprep.subr.mxu0 0.0
      %v3239 = vand.u32 %v2964, 4294901760
      %v3240 = vsub.f32 %v2964, %v3239
      %3241 = vmatpush1.msra.mxu0 %v3240
      %3242 = vmatprep.subr.mxu0 0.0
      %v3243 = vand.u32 %v2963, 4294901760
      %v3244 = vsub.f32 %v2963, %v3243
      %3245 = vmatpush1.msra.mxu0 %v3244
      %3246 = vmatprep.subr.mxu0 0.0
      %v3247 = vand.u32 %v2962, 4294901760
      %v3248 = vsub.f32 %v2962, %v3247
      %3249 = vmatpush1.msra.mxu0 %v3248
      %3250 = vmatprep.subr.mxu0 0.0
      %v3251 = vand.u32 %v2961, 4294901760
      %v3252 = vsub.f32 %v2961, %v3251
      %3253 = vmatpush1.msra.mxu0 %v3252
      %3254 = vmatprep.subr.mxu0 0.0
      %v3255 = vand.u32 %v2960, 4294901760
      %v3256 = vsub.f32 %v2960, %v3255
      %3257 = vmatpush1.msra.mxu0 %v3256
      %3258 = vmatprep.subr.mxu0 0.0
      %v3259 = vand.u32 %v2959, 4294901760
      %v3260 = vsub.f32 %v2959, %v3259
      %3261 = vmatpush1.msra.mxu0 %v3260
      %3262 = vmatprep.subr.mxu0 0.0
      %v3263 = vand.u32 %v2958, 4294901760
      %v3264 = vsub.f32 %v2958, %v3263
      %3265 = vmatpush1.msra.mxu0 %v3264
      %3266 = vmatprep.subr.mxu0 0.0
      %v3267 = vand.u32 %v2957, 4294901760
      %v3268 = vsub.f32 %v2957, %v3267
      %3269 = vmatpush1.msra.mxu0 %v3268
      %3270 = vmatprep.subr.mxu0 0.0
      %v3271 = vand.u32 %v2956, 4294901760
      %v3272 = vsub.f32 %v2956, %v3271
      %3273 = vmatpush1.msra.mxu0 %v3272
      %3274 = vmatprep.subr.mxu0 0.0
      %v3275 = vand.u32 %v2955, 4294901760
      %v3276 = vsub.f32 %v2955, %v3275
      %3277 = vmatpush1.msra.mxu0 %v3276
      %3278 = vmatprep.subr.mxu0 0.0
      %v3279 = vand.u32 %v2954, 4294901760
      %v3280 = vsub.f32 %v2954, %v3279
      %3281 = vmatpush1.msra.mxu0 %v3280
      %3282 = vmatprep.subr.mxu0 0.0
      %v3283 = vand.u32 %v2953, 4294901760
      %v3284 = vsub.f32 %v2953, %v3283
      %3285 = vmatpush1.msra.mxu0 %v3284
      %3286 = vmatprep.subr.mxu0 0.0
      %v3287 = vand.u32 %v2952, 4294901760
      %v3288 = vsub.f32 %v2952, %v3287
      %3289 = vmatpush1.msra.mxu0 %v3288
      %3290 = vmatprep.subr.mxu0 0.0
      %3291 = vmatpush2.msra.mxu0 0.0
      %3292 = vmatprep.subr.mxu0 0.0
      %3293 = vmatpush2.msra.mxu0 0.0
      %3294 = vmatprep.subr.mxu0 0.0
      %3295 = vmatpush2.msra.mxu0 0.0
      %3296 = vmatprep.subr.mxu0 0.0
      %3297 = vmatpush2.msra.mxu0 0.0
      %3298 = vmatprep.subr.mxu0 0.0
      %3299 = vmatpush2.msra.mxu0 0.0
      %3300 = vmatprep.subr.mxu0 0.0
      %3301 = vmatpush2.msra.mxu0 0.0
      %3302 = vmatprep.subr.mxu0 0.0
      %3303 = vmatpush2.msra.mxu0 0.0
      %3304 = vmatprep.subr.mxu0 0.0
      %3305 = vmatpush2.msra.mxu0 0.0
      %3306 = vmatprep.subr.mxu0 0.0
      %3307 = vmatpush2.msra.mxu0 0.0
      %3308 = vmatprep.subr.mxu0 0.0
      %3309 = vmatpush2.msra.mxu0 0.0
      %3310 = vmatprep.subr.mxu0 0.0
      %3311 = vmatpush2.msra.mxu0 0.0
      %3312 = vmatprep.subr.mxu0 0.0
      %3313 = vmatpush2.msra.mxu0 0.0
      %3314 = vmatprep.subr.mxu0 0.0
      %3315 = vmatpush2.msra.mxu0 0.0
      %3316 = vmatprep.subr.mxu0 0.0
      %3317 = vmatpush2.msra.mxu0 0.0
      %3318 = vmatprep.subr.mxu0 0.0
      %3319 = vmatpush2.msra.mxu0 0.0
      %3320 = vmatprep.subr.mxu0 0.0
      %3321 = vmatpush2.msra.mxu0 0.0
      %3322 = vmatprep.mubr.f32.mxu0 0.0
      %v3323 = vand.u32 %v2949, 4294901760
      %v3324 = vsub.f32 %v2949, %v3323
      %3325 = vmatmul.mubr.f32.gmra.mxu0 %v3324
      %v3326 = vpop.f32.mrf.mxu0
      %v3327 = vadd.f32 %v3217, %v3326
      %v3328 = vpop.f32.mrf.mxu0
      %3329 = vmatprep.mubr.f32.mxu0 0.0
      %v3330 = vand.u32 %v2950, 4294901760
      %v3331 = vsub.f32 %v2950, %v3330
      %3332 = vmatmul.mubr.f32.gmra.mxu0 %v3331
      %v3333 = vpop.f32.mrf.mxu0
      %v3334 = vadd.f32 %v3223, %v3333
      %v3335 = vpop.f32.mrf.mxu0
      %3336 = vdwg.mxu0
      %3337 = vmatprep.subr.mxu0 0.0
      %v3338 = vand.u32 %v2967, 4294901760
      %3339 = vmatpush1.msra.mxu0 %v3338
      %3340 = vmatprep.subr.mxu0 0.0
      %v3341 = vand.u32 %v2966, 4294901760
      %3342 = vmatpush1.msra.mxu0 %v3341
      %3343 = vmatprep.subr.mxu0 0.0
      %v3344 = vand.u32 %v2965, 4294901760
      %3345 = vmatpush1.msra.mxu0 %v3344
      %3346 = vmatprep.subr.mxu0 0.0
      %v3347 = vand.u32 %v2964, 4294901760
      %3348 = vmatpush1.msra.mxu0 %v3347
      %3349 = vmatprep.subr.mxu0 0.0
      %v3350 = vand.u32 %v2963, 4294901760
      %3351 = vmatpush1.msra.mxu0 %v3350
      %3352 = vmatprep.subr.mxu0 0.0
      %v3353 = vand.u32 %v2962, 4294901760
      %3354 = vmatpush1.msra.mxu0 %v3353
      %3355 = vmatprep.subr.mxu0 0.0
      %v3356 = vand.u32 %v2961, 4294901760
      %3357 = vmatpush1.msra.mxu0 %v3356
      %3358 = vmatprep.subr.mxu0 0.0
      %v3359 = vand.u32 %v2960, 4294901760
      %3360 = vmatpush1.msra.mxu0 %v3359
      %3361 = vmatprep.subr.mxu0 0.0
      %v3362 = vand.u32 %v2959, 4294901760
      %3363 = vmatpush1.msra.mxu0 %v3362
      %3364 = vmatprep.subr.mxu0 0.0
      %v3365 = vand.u32 %v2958, 4294901760
      %3366 = vmatpush1.msra.mxu0 %v3365
      %3367 = vmatprep.subr.mxu0 0.0
      %v3368 = vand.u32 %v2957, 4294901760
      %3369 = vmatpush1.msra.mxu0 %v3368
      %3370 = vmatprep.subr.mxu0 0.0
      %v3371 = vand.u32 %v2956, 4294901760
      %3372 = vmatpush1.msra.mxu0 %v3371
      %3373 = vmatprep.subr.mxu0 0.0
      %v3374 = vand.u32 %v2955, 4294901760
      %3375 = vmatpush1.msra.mxu0 %v3374
      %3376 = vmatprep.subr.mxu0 0.0
      %v3377 = vand.u32 %v2954, 4294901760
      %3378 = vmatpush1.msra.mxu0 %v3377
      %3379 = vmatprep.subr.mxu0 0.0
      %v3380 = vand.u32 %v2953, 4294901760
      %3381 = vmatpush1.msra.mxu0 %v3380
      %3382 = vmatprep.subr.mxu0 0.0
      %v3383 = vand.u32 %v2952, 4294901760
      %3384 = vmatpush1.msra.mxu0 %v3383
      %3385 = vmatprep.subr.mxu0 0.0
      %3386 = vmatpush2.msra.mxu0 0.0
      %3387 = vmatprep.subr.mxu0 0.0
      %3388 = vmatpush2.msra.mxu0 0.0
      %3389 = vmatprep.subr.mxu0 0.0
      %3390 = vmatpush2.msra.mxu0 0.0
      %3391 = vmatprep.subr.mxu0 0.0
      %3392 = vmatpush2.msra.mxu0 0.0
      %3393 = vmatprep.subr.mxu0 0.0
      %3394 = vmatpush2.msra.mxu0 0.0
      %3395 = vmatprep.subr.mxu0 0.0
      %3396 = vmatpush2.msra.mxu0 0.0
      %3397 = vmatprep.subr.mxu0 0.0
      %3398 = vmatpush2.msra.mxu0 0.0
      %3399 = vmatprep.subr.mxu0 0.0
      %3400 = vmatpush2.msra.mxu0 0.0
      %3401 = vmatprep.subr.mxu0 0.0
      %3402 = vmatpush2.msra.mxu0 0.0
      %3403 = vmatprep.subr.mxu0 0.0
      %3404 = vmatpush2.msra.mxu0 0.0
      %3405 = vmatprep.subr.mxu0 0.0
      %3406 = vmatpush2.msra.mxu0 0.0
      %3407 = vmatprep.subr.mxu0 0.0
      %3408 = vmatpush2.msra.mxu0 0.0
      %3409 = vmatprep.subr.mxu0 0.0
      %3410 = vmatpush2.msra.mxu0 0.0
      %3411 = vmatprep.subr.mxu0 0.0
      %3412 = vmatpush2.msra.mxu0 0.0
      %3413 = vmatprep.subr.mxu0 0.0
      %3414 = vmatpush2.msra.mxu0 0.0
      %3415 = vmatprep.subr.mxu0 0.0
      %3416 = vmatpush2.msra.mxu0 0.0
      %3417 = vmatprep.mubr.f32.mxu0 0.0
      %v3418 = vand.u32 %v2949, 4294901760
      %v3419 = vsub.f32 %v2949, %v3418
      %v3420 = vand.u32 %v3419, 4294901760
      %3421 = vmatmul.mubr.f32.gmra.mxu0 %v3420
      %v3422 = vpop.f32.mrf.mxu0
      %v3423 = vadd.f32 %v3327, %v3422
      %v3424 = vpop.f32.mrf.mxu0
      %3425 = vmatprep.mubr.f32.mxu0 0.0
      %v3426 = vand.u32 %v2950, 4294901760
      %v3427 = vsub.f32 %v2950, %v3426
      %v3428 = vand.u32 %v3427, 4294901760
      %3429 = vmatmul.mubr.f32.gmra.mxu0 %v3428
      %v3430 = vpop.f32.mrf.mxu0
      %v3431 = vadd.f32 %v3334, %v3430
      %v3432 = vpop.f32.mrf.mxu0
      %3433 = vdwg.mxu0
      %3434 = vmatprep.subr.mxu0 0.0
      %v3435 = vand.u32 %v2967, 4294901760
      %v3436 = vsub.f32 %v2967, %v3435
      %v3437 = vand.u32 %v3436, 4294901760
      %3438 = vmatpush1.msra.mxu0 %v3437
      %3439 = vmatprep.subr.mxu0 0.0
      %v3440 = vand.u32 %v2966, 4294901760
      %v3441 = vsub.f32 %v2966, %v3440
      %v3442 = vand.u32 %v3441, 4294901760
      %3443 = vmatpush1.msra.mxu0 %v3442
      %3444 = vmatprep.subr.mxu0 0.0
      %v3445 = vand.u32 %v2965, 4294901760
      %v3446 = vsub.f32 %v2965, %v3445
      %v3447 = vand.u32 %v3446, 4294901760
      %3448 = vmatpush1.msra.mxu0 %v3447
      %3449 = vmatprep.subr.mxu0 0.0
      %v3450 = vand.u32 %v2964, 4294901760
      %v3451 = vsub.f32 %v2964, %v3450
      %v3452 = vand.u32 %v3451, 4294901760
      %3453 = vmatpush1.msra.mxu0 %v3452
      %3454 = vmatprep.subr.mxu0 0.0
      %v3455 = vand.u32 %v2963, 4294901760
      %v3456 = vsub.f32 %v2963, %v3455
      %v3457 = vand.u32 %v3456, 4294901760
      %3458 = vmatpush1.msra.mxu0 %v3457
      %3459 = vmatprep.subr.mxu0 0.0
      %v3460 = vand.u32 %v2962, 4294901760
      %v3461 = vsub.f32 %v2962, %v3460
      %v3462 = vand.u32 %v3461, 4294901760
      %3463 = vmatpush1.msra.mxu0 %v3462
      %3464 = vmatprep.subr.mxu0 0.0
      %v3465 = vand.u32 %v2961, 4294901760
      %v3466 = vsub.f32 %v2961, %v3465
      %v3467 = vand.u32 %v3466, 4294901760
      %3468 = vmatpush1.msra.mxu0 %v3467
      %3469 = vmatprep.subr.mxu0 0.0
      %v3470 = vand.u32 %v2960, 4294901760
      %v3471 = vsub.f32 %v2960, %v3470
      %v3472 = vand.u32 %v3471, 4294901760
      %3473 = vmatpush1.msra.mxu0 %v3472
      %3474 = vmatprep.subr.mxu0 0.0
      %v3475 = vand.u32 %v2959, 4294901760
      %v3476 = vsub.f32 %v2959, %v3475
      %v3477 = vand.u32 %v3476, 4294901760
      %3478 = vmatpush1.msra.mxu0 %v3477
      %3479 = vmatprep.subr.mxu0 0.0
      %v3480 = vand.u32 %v2958, 4294901760
      %v3481 = vsub.f32 %v2958, %v3480
      %v3482 = vand.u32 %v3481, 4294901760
      %3483 = vmatpush1.msra.mxu0 %v3482
      %3484 = vmatprep.subr.mxu0 0.0
      %v3485 = vand.u32 %v2957, 4294901760
      %v3486 = vsub.f32 %v2957, %v3485
      %v3487 = vand.u32 %v3486, 4294901760
      %3488 = vmatpush1.msra.mxu0 %v3487
      %3489 = vmatprep.subr.mxu0 0.0
      %v3490 = vand.u32 %v2956, 4294901760
      %v3491 = vsub.f32 %v2956, %v3490
      %v3492 = vand.u32 %v3491, 4294901760
      %3493 = vmatpush1.msra.mxu0 %v3492
      %3494 = vmatprep.subr.mxu0 0.0
      %v3495 = vand.u32 %v2955, 4294901760
      %v3496 = vsub.f32 %v2955, %v3495
      %v3497 = vand.u32 %v3496, 4294901760
      %3498 = vmatpush1.msra.mxu0 %v3497
      %3499 = vmatprep.subr.mxu0 0.0
      %v3500 = vand.u32 %v2954, 4294901760
      %v3501 = vsub.f32 %v2954, %v3500
      %v3502 = vand.u32 %v3501, 4294901760
      %3503 = vmatpush1.msra.mxu0 %v3502
      %3504 = vmatprep.subr.mxu0 0.0
      %v3505 = vand.u32 %v2953, 4294901760
      %v3506 = vsub.f32 %v2953, %v3505
      %v3507 = vand.u32 %v3506, 4294901760
      %3508 = vmatpush1.msra.mxu0 %v3507
      %3509 = vmatprep.subr.mxu0 0.0
      %v3510 = vand.u32 %v2952, 4294901760
      %v3511 = vsub.f32 %v2952, %v3510
      %v3512 = vand.u32 %v3511, 4294901760
      %3513 = vmatpush1.msra.mxu0 %v3512
      %3514 = vmatprep.subr.mxu0 0.0
      %3515 = vmatpush2.msra.mxu0 0.0
      %3516 = vmatprep.subr.mxu0 0.0
      %3517 = vmatpush2.msra.mxu0 0.0
      %3518 = vmatprep.subr.mxu0 0.0
      %3519 = vmatpush2.msra.mxu0 0.0
      %3520 = vmatprep.subr.mxu0 0.0
      %3521 = vmatpush2.msra.mxu0 0.0
      %3522 = vmatprep.subr.mxu0 0.0
      %3523 = vmatpush2.msra.mxu0 0.0
      %3524 = vmatprep.subr.mxu0 0.0
      %3525 = vmatpush2.msra.mxu0 0.0
      %3526 = vmatprep.subr.mxu0 0.0
      %3527 = vmatpush2.msra.mxu0 0.0
      %3528 = vmatprep.subr.mxu0 0.0
      %3529 = vmatpush2.msra.mxu0 0.0
      %3530 = vmatprep.subr.mxu0 0.0
      %3531 = vmatpush2.msra.mxu0 0.0
      %3532 = vmatprep.subr.mxu0 0.0
      %3533 = vmatpush2.msra.mxu0 0.0
      %3534 = vmatprep.subr.mxu0 0.0
      %3535 = vmatpush2.msra.mxu0 0.0
      %3536 = vmatprep.subr.mxu0 0.0
      %3537 = vmatpush2.msra.mxu0 0.0
      %3538 = vmatprep.subr.mxu0 0.0
      %3539 = vmatpush2.msra.mxu0 0.0
      %3540 = vmatprep.subr.mxu0 0.0
      %3541 = vmatpush2.msra.mxu0 0.0
      %3542 = vmatprep.subr.mxu0 0.0
      %3543 = vmatpush2.msra.mxu0 0.0
      %3544 = vmatprep.subr.mxu0 0.0
      %3545 = vmatpush2.msra.mxu0 0.0
      %3546 = vmatprep.mubr.f32.mxu0 0.0
      %v3547 = vand.u32 %v2949, 4294901760
      %3548 = vmatmul.mubr.f32.gmra.mxu0 %v3547
      %v3549 = vpop.f32.mrf.mxu0
      %v3550 = vadd.f32 %v3423, %v3549
      %v3551 = vpop.f32.mrf.mxu0
      %3552 = vmatprep.mubr.f32.mxu0 0.0
      %v3553 = vand.u32 %v2950, 4294901760
      %3554 = vmatmul.mubr.f32.gmra.mxu0 %v3553
      %v3555 = vpop.f32.mrf.mxu0
      %v3556 = vadd.f32 %v3431, %v3555
      %v3557 = vpop.f32.mrf.mxu0
      %3558 = vdwg.mxu0
      %3559 = vmatprep.subr.mxu0 0.0
      %v3560 = vand.u32 %v2967, 4294901760
      %3561 = vmatpush1.msra.mxu0 %v3560
      %3562 = vmatprep.subr.mxu0 0.0
      %v3563 = vand.u32 %v2966, 4294901760
      %3564 = vmatpush1.msra.mxu0 %v3563
      %3565 = vmatprep.subr.mxu0 0.0
      %v3566 = vand.u32 %v2965, 4294901760
      %3567 = vmatpush1.msra.mxu0 %v3566
      %3568 = vmatprep.subr.mxu0 0.0
      %v3569 = vand.u32 %v2964, 4294901760
      %3570 = vmatpush1.msra.mxu0 %v3569
      %3571 = vmatprep.subr.mxu0 0.0
      %v3572 = vand.u32 %v2963, 4294901760
      %3573 = vmatpush1.msra.mxu0 %v3572
      %3574 = vmatprep.subr.mxu0 0.0
      %v3575 = vand.u32 %v2962, 4294901760
      %3576 = vmatpush1.msra.mxu0 %v3575
      %3577 = vmatprep.subr.mxu0 0.0
      %v3578 = vand.u32 %v2961, 4294901760
      %3579 = vmatpush1.msra.mxu0 %v3578
      %3580 = vmatprep.subr.mxu0 0.0
      %v3581 = vand.u32 %v2960, 4294901760
      %3582 = vmatpush1.msra.mxu0 %v3581
      %3583 = vmatprep.subr.mxu0 0.0
      %v3584 = vand.u32 %v2959, 4294901760
      %3585 = vmatpush1.msra.mxu0 %v3584
      %3586 = vmatprep.subr.mxu0 0.0
      %v3587 = vand.u32 %v2958, 4294901760
      %3588 = vmatpush1.msra.mxu0 %v3587
      %3589 = vmatprep.subr.mxu0 0.0
      %v3590 = vand.u32 %v2957, 4294901760
      %3591 = vmatpush1.msra.mxu0 %v3590
      %3592 = vmatprep.subr.mxu0 0.0
      %v3593 = vand.u32 %v2956, 4294901760
      %3594 = vmatpush1.msra.mxu0 %v3593
      %3595 = vmatprep.subr.mxu0 0.0
      %v3596 = vand.u32 %v2955, 4294901760
      %3597 = vmatpush1.msra.mxu0 %v3596
      %3598 = vmatprep.subr.mxu0 0.0
      %v3599 = vand.u32 %v2954, 4294901760
      %3600 = vmatpush1.msra.mxu0 %v3599
      %3601 = vmatprep.subr.mxu0 0.0
      %v3602 = vand.u32 %v2953, 4294901760
      %3603 = vmatpush1.msra.mxu0 %v3602
      %3604 = vmatprep.subr.mxu0 0.0
      %v3605 = vand.u32 %v2952, 4294901760
      %3606 = vmatpush1.msra.mxu0 %v3605
      %3607 = vmatprep.subr.mxu0 0.0
      %3608 = vmatpush2.msra.mxu0 0.0
      %3609 = vmatprep.subr.mxu0 0.0
      %3610 = vmatpush2.msra.mxu0 0.0
      %3611 = vmatprep.subr.mxu0 0.0
      %3612 = vmatpush2.msra.mxu0 0.0
      %3613 = vmatprep.subr.mxu0 0.0
      %3614 = vmatpush2.msra.mxu0 0.0
      %3615 = vmatprep.subr.mxu0 0.0
      %3616 = vmatpush2.msra.mxu0 0.0
      %3617 = vmatprep.subr.mxu0 0.0
      %3618 = vmatpush2.msra.mxu0 0.0
      %3619 = vmatprep.subr.mxu0 0.0
      %3620 = vmatpush2.msra.mxu0 0.0
      %3621 = vmatprep.subr.mxu0 0.0
      %3622 = vmatpush2.msra.mxu0 0.0
      %3623 = vmatprep.subr.mxu0 0.0
      %3624 = vmatpush2.msra.mxu0 0.0
      %3625 = vmatprep.subr.mxu0 0.0
      %3626 = vmatpush2.msra.mxu0 0.0
      %3627 = vmatprep.subr.mxu0 0.0
      %3628 = vmatpush2.msra.mxu0 0.0
      %3629 = vmatprep.subr.mxu0 0.0
      %3630 = vmatpush2.msra.mxu0 0.0
      %3631 = vmatprep.subr.mxu0 0.0
      %3632 = vmatpush2.msra.mxu0 0.0
      %3633 = vmatprep.subr.mxu0 0.0
      %3634 = vmatpush2.msra.mxu0 0.0
      %3635 = vmatprep.subr.mxu0 0.0
      %3636 = vmatpush2.msra.mxu0 0.0
      %3637 = vmatprep.subr.mxu0 0.0
      %3638 = vmatpush2.msra.mxu0 0.0
      %3639 = vmatprep.mubr.f32.mxu0 0.0
      %v3640 = vand.u32 %v2949, 4294901760
      %3641 = vmatmul.mubr.f32.gmra.mxu0 %v3640
      %v3642 = vpop.f32.mrf.mxu0
      %v3643 = vadd.f32 %v3550, %v3642
      %v3644 = vpop.f32.mrf.mxu0
      %3645 = vmatprep.mubr.f32.mxu0 0.0
      %v3646 = vand.u32 %v2950, 4294901760
      %3647 = vmatmul.mubr.f32.gmra.mxu0 %v3646
      %v3648 = vpop.f32.mrf.mxu0
      %v3649 = vadd.f32 %v3556, %v3648
      %v3650 = vpop.f32.mrf.mxu0
      %3651 = vdwg.mxu0
      %v3652 = vadd.f32 %v2947, %v3643
      %v3653 = vadd.f32 %v2948, %v3649
      %v3654 = vld [vmem:[#allocation2 + $0x4] sm:$0xff]
      %v3655 = vld [vmem:[#allocation2 + $0xc] sm:$0xff]
      %s3656 = scalar_lea.vmem %s3, 512
      %v3657 = vld [vmem:[%s3656] sm:$0xff]
      %v3658 = vld [vmem:[%s3656 + $0x8] sm:$0xff]
      %v3659 = vld [vmem:[%s3656 + $0x10] sm:$0xff]
      %v3660 = vld [vmem:[%s3656 + $0x18] sm:$0xff]
      %v3661 = vld [vmem:[%s3656 + $0x20] sm:$0xff]
      %v3662 = vld [vmem:[%s3656 + $0x28] sm:$0xff]
      %v3663 = vld [vmem:[%s3656 + $0x30] sm:$0xff]
      %v3664 = vld [vmem:[%s3656 + $0x38] sm:$0xff]
      %v3665 = vld [vmem:[%s3656 + $0x40] sm:$0xff]
      %v3666 = vld [vmem:[%s3656 + $0x48] sm:$0xff]
      %v3667 = vld [vmem:[%s3656 + $0x50] sm:$0xff]
      %v3668 = vld [vmem:[%s3656 + $0x58] sm:$0xff]
      %v3669 = vld [vmem:[%s3656 + $0x60] sm:$0xff]
      %v3670 = vld [vmem:[%s3656 + $0x68] sm:$0xff]
      %v3671 = vld [vmem:[%s3656 + $0x70] sm:$0xff]
      %v3672 = vld [vmem:[%s3656 + $0x78] sm:$0xff]
      %3673 = vmatprep.subr.mxu0 0.0
      %v3674 = vand.u32 %v3672, 4294901760
      %3675 = vmatpush1.msra.mxu0 %v3674
      %3676 = vmatprep.subr.mxu0 0.0
      %v3677 = vand.u32 %v3671, 4294901760
      %3678 = vmatpush1.msra.mxu0 %v3677
      %3679 = vmatprep.subr.mxu0 0.0
      %v3680 = vand.u32 %v3670, 4294901760
      %3681 = vmatpush1.msra.mxu0 %v3680
      %3682 = vmatprep.subr.mxu0 0.0
      %v3683 = vand.u32 %v3669, 4294901760
      %3684 = vmatpush1.msra.mxu0 %v3683
      %3685 = vmatprep.subr.mxu0 0.0
      %v3686 = vand.u32 %v3668, 4294901760
      %3687 = vmatpush1.msra.mxu0 %v3686
      %3688 = vmatprep.subr.mxu0 0.0
      %v3689 = vand.u32 %v3667, 4294901760
      %3690 = vmatpush1.msra.mxu0 %v3689
      %3691 = vmatprep.subr.mxu0 0.0
      %v3692 = vand.u32 %v3666, 4294901760
      %3693 = vmatpush1.msra.mxu0 %v3692
      %3694 = vmatprep.subr.mxu0 0.0
      %v3695 = vand.u32 %v3665, 4294901760
      %3696 = vmatpush1.msra.mxu0 %v3695
      %3697 = vmatprep.subr.mxu0 0.0
      %v3698 = vand.u32 %v3664, 4294901760
      %3699 = vmatpush1.msra.mxu0 %v3698
      %3700 = vmatprep.subr.mxu0 0.0
      %v3701 = vand.u32 %v3663, 4294901760
      %3702 = vmatpush1.msra.mxu0 %v3701
      %3703 = vmatprep.subr.mxu0 0.0
      %v3704 = vand.u32 %v3662, 4294901760
      %3705 = vmatpush1.msra.mxu0 %v3704
      %3706 = vmatprep.subr.mxu0 0.0
      %v3707 = vand.u32 %v3661, 4294901760
      %3708 = vmatpush1.msra.mxu0 %v3707
      %3709 = vmatprep.subr.mxu0 0.0
      %v3710 = vand.u32 %v3660, 4294901760
      %3711 = vmatpush1.msra.mxu0 %v3710
      %3712 = vmatprep.subr.mxu0 0.0
      %v3713 = vand.u32 %v3659, 4294901760
      %3714 = vmatpush1.msra.mxu0 %v3713
      %3715 = vmatprep.subr.mxu0 0.0
      %v3716 = vand.u32 %v3658, 4294901760
      %3717 = vmatpush1.msra.mxu0 %v3716
      %3718 = vmatprep.subr.mxu0 0.0
      %v3719 = vand.u32 %v3657, 4294901760
      %3720 = vmatpush1.msra.mxu0 %v3719
      %3721 = vmatprep.subr.mxu0 0.0
      %3722 = vmatpush2.msra.mxu0 0.0
      %3723 = vmatprep.subr.mxu0 0.0
      %3724 = vmatpush2.msra.mxu0 0.0
      %3725 = vmatprep.subr.mxu0 0.0
      %3726 = vmatpush2.msra.mxu0 0.0
      %3727 = vmatprep.subr.mxu0 0.0
      %3728 = vmatpush2.msra.mxu0 0.0
      %3729 = vmatprep.subr.mxu0 0.0
      %3730 = vmatpush2.msra.mxu0 0.0
      %3731 = vmatprep.subr.mxu0 0.0
      %3732 = vmatpush2.msra.mxu0 0.0
      %3733 = vmatprep.subr.mxu0 0.0
      %3734 = vmatpush2.msra.mxu0 0.0
      %3735 = vmatprep.subr.mxu0 0.0
      %3736 = vmatpush2.msra.mxu0 0.0
      %3737 = vmatprep.subr.mxu0 0.0
      %3738 = vmatpush2.msra.mxu0 0.0
      %3739 = vmatprep.subr.mxu0 0.0
      %3740 = vmatpush2.msra.mxu0 0.0
      %3741 = vmatprep.subr.mxu0 0.0
      %3742 = vmatpush2.msra.mxu0 0.0
      %3743 = vmatprep.subr.mxu0 0.0
      %3744 = vmatpush2.msra.mxu0 0.0
      %3745 = vmatprep.subr.mxu0 0.0
      %3746 = vmatpush2.msra.mxu0 0.0
      %3747 = vmatprep.subr.mxu0 0.0
      %3748 = vmatpush2.msra.mxu0 0.0
      %3749 = vmatprep.subr.mxu0 0.0
      %3750 = vmatpush2.msra.mxu0 0.0
      %3751 = vmatprep.subr.mxu0 0.0
      %3752 = vmatpush2.msra.mxu0 0.0
      %3753 = vmatprep.mubr.f32.mxu0 0.0
      %v3754 = vand.u32 %v3654, 4294901760
      %v3755 = vsub.f32 %v3654, %v3754
      %v3756 = vand.u32 %v3755, 4294901760
      %v3757 = vsub.f32 %v3755, %v3756
      %v3758 = vand.u32 %v3757, 4294901760
      %3759 = vmatmul.mubr.f32.gmra.mxu0 %v3758
      %v3760 = vpop.f32.mrf.mxu0
      %v3761 = vadd.f32 0.0, %v3760
      %v3762 = vpop.f32.mrf.mxu0
      %3763 = vmatprep.mubr.f32.mxu0 0.0
      %v3764 = vand.u32 %v3655, 4294901760
      %v3765 = vsub.f32 %v3655, %v3764
      %v3766 = vand.u32 %v3765, 4294901760
      %v3767 = vsub.f32 %v3765, %v3766
      %v3768 = vand.u32 %v3767, 4294901760
      %3769 = vmatmul.mubr.f32.gmra.mxu0 %v3768
      %v3770 = vpop.f32.mrf.mxu0
      %v3771 = vadd.f32 0.0, %v3770
      %v3772 = vpop.f32.mrf.mxu0
      %3773 = vdwg.mxu0
      %3774 = vmatprep.subr.mxu0 0.0
      %v3775 = vand.u32 %v3672, 4294901760
      %v3776 = vsub.f32 %v3672, %v3775
      %v3777 = vand.u32 %v3776, 4294901760
      %v3778 = vsub.f32 %v3776, %v3777
      %v3779 = vand.u32 %v3778, 4294901760
      %3780 = vmatpush1.msra.mxu0 %v3779
      %3781 = vmatprep.subr.mxu0 0.0
      %v3782 = vand.u32 %v3671, 4294901760
      %v3783 = vsub.f32 %v3671, %v3782
      %v3784 = vand.u32 %v3783, 4294901760
      %v3785 = vsub.f32 %v3783, %v3784
      %v3786 = vand.u32 %v3785, 4294901760
      %3787 = vmatpush1.msra.mxu0 %v3786
      %3788 = vmatprep.subr.mxu0 0.0
      %v3789 = vand.u32 %v3670, 4294901760
      %v3790 = vsub.f32 %v3670, %v3789
      %v3791 = vand.u32 %v3790, 4294901760
      %v3792 = vsub.f32 %v3790, %v3791
      %v3793 = vand.u32 %v3792, 4294901760
      %3794 = vmatpush1.msra.mxu0 %v3793
      %3795 = vmatprep.subr.mxu0 0.0
      %v3796 = vand.u32 %v3669, 4294901760
      %v3797 = vsub.f32 %v3669, %v3796
      %v3798 = vand.u32 %v3797, 4294901760
      %v3799 = vsub.f32 %v3797, %v3798
      %v3800 = vand.u32 %v3799, 4294901760
      %3801 = vmatpush1.msra.mxu0 %v3800
      %3802 = vmatprep.subr.mxu0 0.0
      %v3803 = vand.u32 %v3668, 4294901760
      %v3804 = vsub.f32 %v3668, %v3803
      %v3805 = vand.u32 %v3804, 4294901760
      %v3806 = vsub.f32 %v3804, %v3805
      %v3807 = vand.u32 %v3806, 4294901760
      %3808 = vmatpush1.msra.mxu0 %v3807
      %3809 = vmatprep.subr.mxu0 0.0
      %v3810 = vand.u32 %v3667, 4294901760
      %v3811 = vsub.f32 %v3667, %v3810
      %v3812 = vand.u32 %v3811, 4294901760
      %v3813 = vsub.f32 %v3811, %v3812
      %v3814 = vand.u32 %v3813, 4294901760
      %3815 = vmatpush1.msra.mxu0 %v3814
      %3816 = vmatprep.subr.mxu0 0.0
      %v3817 = vand.u32 %v3666, 4294901760
      %v3818 = vsub.f32 %v3666, %v3817
      %v3819 = vand.u32 %v3818, 4294901760
      %v3820 = vsub.f32 %v3818, %v3819
      %v3821 = vand.u32 %v3820, 4294901760
      %3822 = vmatpush1.msra.mxu0 %v3821
      %3823 = vmatprep.subr.mxu0 0.0
      %v3824 = vand.u32 %v3665, 4294901760
      %v3825 = vsub.f32 %v3665, %v3824
      %v3826 = vand.u32 %v3825, 4294901760
      %v3827 = vsub.f32 %v3825, %v3826
      %v3828 = vand.u32 %v3827, 4294901760
      %3829 = vmatpush1.msra.mxu0 %v3828
      %3830 = vmatprep.subr.mxu0 0.0
      %v3831 = vand.u32 %v3664, 4294901760
      %v3832 = vsub.f32 %v3664, %v3831
      %v3833 = vand.u32 %v3832, 4294901760
      %v3834 = vsub.f32 %v3832, %v3833
      %v3835 = vand.u32 %v3834, 4294901760
      %3836 = vmatpush1.msra.mxu0 %v3835
      %3837 = vmatprep.subr.mxu0 0.0
      %v3838 = vand.u32 %v3663, 4294901760
      %v3839 = vsub.f32 %v3663, %v3838
      %v3840 = vand.u32 %v3839, 4294901760
      %v3841 = vsub.f32 %v3839, %v3840
      %v3842 = vand.u32 %v3841, 4294901760
      %3843 = vmatpush1.msra.mxu0 %v3842
      %3844 = vmatprep.subr.mxu0 0.0
      %v3845 = vand.u32 %v3662, 4294901760
      %v3846 = vsub.f32 %v3662, %v3845
      %v3847 = vand.u32 %v3846, 4294901760
      %v3848 = vsub.f32 %v3846, %v3847
      %v3849 = vand.u32 %v3848, 4294901760
      %3850 = vmatpush1.msra.mxu0 %v3849
      %3851 = vmatprep.subr.mxu0 0.0
      %v3852 = vand.u32 %v3661, 4294901760
      %v3853 = vsub.f32 %v3661, %v3852
      %v3854 = vand.u32 %v3853, 4294901760
      %v3855 = vsub.f32 %v3853, %v3854
      %v3856 = vand.u32 %v3855, 4294901760
      %3857 = vmatpush1.msra.mxu0 %v3856
      %3858 = vmatprep.subr.mxu0 0.0
      %v3859 = vand.u32 %v3660, 4294901760
      %v3860 = vsub.f32 %v3660, %v3859
      %v3861 = vand.u32 %v3860, 4294901760
      %v3862 = vsub.f32 %v3860, %v3861
      %v3863 = vand.u32 %v3862, 4294901760
      %3864 = vmatpush1.msra.mxu0 %v3863
      %3865 = vmatprep.subr.mxu0 0.0
      %v3866 = vand.u32 %v3659, 4294901760
      %v3867 = vsub.f32 %v3659, %v3866
      %v3868 = vand.u32 %v3867, 4294901760
      %v3869 = vsub.f32 %v3867, %v3868
      %v3870 = vand.u32 %v3869, 4294901760
      %3871 = vmatpush1.msra.mxu0 %v3870
      %3872 = vmatprep.subr.mxu0 0.0
      %v3873 = vand.u32 %v3658, 4294901760
      %v3874 = vsub.f32 %v3658, %v3873
      %v3875 = vand.u32 %v3874, 4294901760
      %v3876 = vsub.f32 %v3874, %v3875
      %v3877 = vand.u32 %v3876, 4294901760
      %3878 = vmatpush1.msra.mxu0 %v3877
      %3879 = vmatprep.subr.mxu0 0.0
      %v3880 = vand.u32 %v3657, 4294901760
      %v3881 = vsub.f32 %v3657, %v3880
      %v3882 = vand.u32 %v3881, 4294901760
      %v3883 = vsub.f32 %v3881, %v3882
      %v3884 = vand.u32 %v3883, 4294901760
      %3885 = vmatpush1.msra.mxu0 %v3884
      %3886 = vmatprep.subr.mxu0 0.0
      %3887 = vmatpush2.msra.mxu0 0.0
      %3888 = vmatprep.subr.mxu0 0.0
      %3889 = vmatpush2.msra.mxu0 0.0
      %3890 = vmatprep.subr.mxu0 0.0
      %3891 = vmatpush2.msra.mxu0 0.0
      %3892 = vmatprep.subr.mxu0 0.0
      %3893 = vmatpush2.msra.mxu0 0.0
      %3894 = vmatprep.subr.mxu0 0.0
      %3895 = vmatpush2.msra.mxu0 0.0
      %3896 = vmatprep.subr.mxu0 0.0
      %3897 = vmatpush2.msra.mxu0 0.0
      %3898 = vmatprep.subr.mxu0 0.0
      %3899 = vmatpush2.msra.mxu0 0.0
      %3900 = vmatprep.subr.mxu0 0.0
      %3901 = vmatpush2.msra.mxu0 0.0
      %3902 = vmatprep.subr.mxu0 0.0
      %3903 = vmatpush2.msra.mxu0 0.0
      %3904 = vmatprep.subr.mxu0 0.0
      %3905 = vmatpush2.msra.mxu0 0.0
      %3906 = vmatprep.subr.mxu0 0.0
      %3907 = vmatpush2.msra.mxu0 0.0
      %3908 = vmatprep.subr.mxu0 0.0
      %3909 = vmatpush2.msra.mxu0 0.0
      %3910 = vmatprep.subr.mxu0 0.0
      %3911 = vmatpush2.msra.mxu0 0.0
      %3912 = vmatprep.subr.mxu0 0.0
      %3913 = vmatpush2.msra.mxu0 0.0
      %3914 = vmatprep.subr.mxu0 0.0
      %3915 = vmatpush2.msra.mxu0 0.0
      %3916 = vmatprep.subr.mxu0 0.0
      %3917 = vmatpush2.msra.mxu0 0.0
      %3918 = vmatprep.mubr.f32.mxu0 0.0
      %v3919 = vand.u32 %v3654, 4294901760
      %3920 = vmatmul.mubr.f32.gmra.mxu0 %v3919
      %v3921 = vpop.f32.mrf.mxu0
      %v3922 = vadd.f32 %v3761, %v3921
      %v3923 = vpop.f32.mrf.mxu0
      %3924 = vmatprep.mubr.f32.mxu0 0.0
      %v3925 = vand.u32 %v3655, 4294901760
      %3926 = vmatmul.mubr.f32.gmra.mxu0 %v3925
      %v3927 = vpop.f32.mrf.mxu0
      %v3928 = vadd.f32 %v3771, %v3927
      %v3929 = vpop.f32.mrf.mxu0
      %3930 = vdwg.mxu0
      %3931 = vmatprep.subr.mxu0 0.0
      %v3932 = vand.u32 %v3672, 4294901760
      %v3933 = vsub.f32 %v3672, %v3932
      %3934 = vmatpush1.msra.mxu0 %v3933
      %3935 = vmatprep.subr.mxu0 0.0
      %v3936 = vand.u32 %v3671, 4294901760
      %v3937 = vsub.f32 %v3671, %v3936
      %3938 = vmatpush1.msra.mxu0 %v3937
      %3939 = vmatprep.subr.mxu0 0.0
      %v3940 = vand.u32 %v3670, 4294901760
      %v3941 = vsub.f32 %v3670, %v3940
      %3942 = vmatpush1.msra.mxu0 %v3941
      %3943 = vmatprep.subr.mxu0 0.0
      %v3944 = vand.u32 %v3669, 4294901760
      %v3945 = vsub.f32 %v3669, %v3944
      %3946 = vmatpush1.msra.mxu0 %v3945
      %3947 = vmatprep.subr.mxu0 0.0
      %v3948 = vand.u32 %v3668, 4294901760
      %v3949 = vsub.f32 %v3668, %v3948
      %3950 = vmatpush1.msra.mxu0 %v3949
      %3951 = vmatprep.subr.mxu0 0.0
      %v3952 = vand.u32 %v3667, 4294901760
      %v3953 = vsub.f32 %v3667, %v3952
      %3954 = vmatpush1.msra.mxu0 %v3953
      %3955 = vmatprep.subr.mxu0 0.0
      %v3956 = vand.u32 %v3666, 4294901760
      %v3957 = vsub.f32 %v3666, %v3956
      %3958 = vmatpush1.msra.mxu0 %v3957
      %3959 = vmatprep.subr.mxu0 0.0
      %v3960 = vand.u32 %v3665, 4294901760
      %v3961 = vsub.f32 %v3665, %v3960
      %3962 = vmatpush1.msra.mxu0 %v3961
      %3963 = vmatprep.subr.mxu0 0.0
      %v3964 = vand.u32 %v3664, 4294901760
      %v3965 = vsub.f32 %v3664, %v3964
      %3966 = vmatpush1.msra.mxu0 %v3965
      %3967 = vmatprep.subr.mxu0 0.0
      %v3968 = vand.u32 %v3663, 4294901760
      %v3969 = vsub.f32 %v3663, %v3968
      %3970 = vmatpush1.msra.mxu0 %v3969
      %3971 = vmatprep.subr.mxu0 0.0
      %v3972 = vand.u32 %v3662, 4294901760
      %v3973 = vsub.f32 %v3662, %v3972
      %3974 = vmatpush1.msra.mxu0 %v3973
      %3975 = vmatprep.subr.mxu0 0.0
      %v3976 = vand.u32 %v3661, 4294901760
      %v3977 = vsub.f32 %v3661, %v3976
      %3978 = vmatpush1.msra.mxu0 %v3977
      %3979 = vmatprep.subr.mxu0 0.0
      %v3980 = vand.u32 %v3660, 4294901760
      %v3981 = vsub.f32 %v3660, %v3980
      %3982 = vmatpush1.msra.mxu0 %v3981
      %3983 = vmatprep.subr.mxu0 0.0
      %v3984 = vand.u32 %v3659, 4294901760
      %v3985 = vsub.f32 %v3659, %v3984
      %3986 = vmatpush1.msra.mxu0 %v3985
      %3987 = vmatprep.subr.mxu0 0.0
      %v3988 = vand.u32 %v3658, 4294901760
      %v3989 = vsub.f32 %v3658, %v3988
      %3990 = vmatpush1.msra.mxu0 %v3989
      %3991 = vmatprep.subr.mxu0 0.0
      %v3992 = vand.u32 %v3657, 4294901760
      %v3993 = vsub.f32 %v3657, %v3992
      %3994 = vmatpush1.msra.mxu0 %v3993
      %3995 = vmatprep.subr.mxu0 0.0
      %3996 = vmatpush2.msra.mxu0 0.0
      %3997 = vmatprep.subr.mxu0 0.0
      %3998 = vmatpush2.msra.mxu0 0.0
      %3999 = vmatprep.subr.mxu0 0.0
      %4000 = vmatpush2.msra.mxu0 0.0
      %4001 = vmatprep.subr.mxu0 0.0
      %4002 = vmatpush2.msra.mxu0 0.0
      %4003 = vmatprep.subr.mxu0 0.0
      %4004 = vmatpush2.msra.mxu0 0.0
      %4005 = vmatprep.subr.mxu0 0.0
      %4006 = vmatpush2.msra.mxu0 0.0
      %4007 = vmatprep.subr.mxu0 0.0
      %4008 = vmatpush2.msra.mxu0 0.0
      %4009 = vmatprep.subr.mxu0 0.0
      %4010 = vmatpush2.msra.mxu0 0.0
      %4011 = vmatprep.subr.mxu0 0.0
      %4012 = vmatpush2.msra.mxu0 0.0
      %4013 = vmatprep.subr.mxu0 0.0
      %4014 = vmatpush2.msra.mxu0 0.0
      %4015 = vmatprep.subr.mxu0 0.0
      %4016 = vmatpush2.msra.mxu0 0.0
      %4017 = vmatprep.subr.mxu0 0.0
      %4018 = vmatpush2.msra.mxu0 0.0
      %4019 = vmatprep.subr.mxu0 0.0
      %4020 = vmatpush2.msra.mxu0 0.0
      %4021 = vmatprep.subr.mxu0 0.0
      %4022 = vmatpush2.msra.mxu0 0.0
      %4023 = vmatprep.subr.mxu0 0.0
      %4024 = vmatpush2.msra.mxu0 0.0
      %4025 = vmatprep.subr.mxu0 0.0
      %4026 = vmatpush2.msra.mxu0 0.0
      %4027 = vmatprep.mubr.f32.mxu0 0.0
      %v4028 = vand.u32 %v3654, 4294901760
      %v4029 = vsub.f32 %v3654, %v4028
      %4030 = vmatmul.mubr.f32.gmra.mxu0 %v4029
      %v4031 = vpop.f32.mrf.mxu0
      %v4032 = vadd.f32 %v3922, %v4031
      %v4033 = vpop.f32.mrf.mxu0
      %4034 = vmatprep.mubr.f32.mxu0 0.0
      %v4035 = vand.u32 %v3655, 4294901760
      %v4036 = vsub.f32 %v3655, %v4035
      %4037 = vmatmul.mubr.f32.gmra.mxu0 %v4036
      %v4038 = vpop.f32.mrf.mxu0
      %v4039 = vadd.f32 %v3928, %v4038
      %v4040 = vpop.f32.mrf.mxu0
      %4041 = vdwg.mxu0
      %4042 = vmatprep.subr.mxu0 0.0
      %v4043 = vand.u32 %v3672, 4294901760
      %4044 = vmatpush1.msra.mxu0 %v4043
      %4045 = vmatprep.subr.mxu0 0.0
      %v4046 = vand.u32 %v3671, 4294901760
      %4047 = vmatpush1.msra.mxu0 %v4046
      %4048 = vmatprep.subr.mxu0 0.0
      %v4049 = vand.u32 %v3670, 4294901760
      %4050 = vmatpush1.msra.mxu0 %v4049
      %4051 = vmatprep.subr.mxu0 0.0
      %v4052 = vand.u32 %v3669, 4294901760
      %4053 = vmatpush1.msra.mxu0 %v4052
      %4054 = vmatprep.subr.mxu0 0.0
      %v4055 = vand.u32 %v3668, 4294901760
      %4056 = vmatpush1.msra.mxu0 %v4055
      %4057 = vmatprep.subr.mxu0 0.0
      %v4058 = vand.u32 %v3667, 4294901760
      %4059 = vmatpush1.msra.mxu0 %v4058
      %4060 = vmatprep.subr.mxu0 0.0
      %v4061 = vand.u32 %v3666, 4294901760
      %4062 = vmatpush1.msra.mxu0 %v4061
      %4063 = vmatprep.subr.mxu0 0.0
      %v4064 = vand.u32 %v3665, 4294901760
      %4065 = vmatpush1.msra.mxu0 %v4064
      %4066 = vmatprep.subr.mxu0 0.0
      %v4067 = vand.u32 %v3664, 4294901760
      %4068 = vmatpush1.msra.mxu0 %v4067
      %4069 = vmatprep.subr.mxu0 0.0
      %v4070 = vand.u32 %v3663, 4294901760
      %4071 = vmatpush1.msra.mxu0 %v4070
      %4072 = vmatprep.subr.mxu0 0.0
      %v4073 = vand.u32 %v3662, 4294901760
      %4074 = vmatpush1.msra.mxu0 %v4073
      %4075 = vmatprep.subr.mxu0 0.0
      %v4076 = vand.u32 %v3661, 4294901760
      %4077 = vmatpush1.msra.mxu0 %v4076
      %4078 = vmatprep.subr.mxu0 0.0
      %v4079 = vand.u32 %v3660, 4294901760
      %4080 = vmatpush1.msra.mxu0 %v4079
      %4081 = vmatprep.subr.mxu0 0.0
      %v4082 = vand.u32 %v3659, 4294901760
      %4083 = vmatpush1.msra.mxu0 %v4082
      %4084 = vmatprep.subr.mxu0 0.0
      %v4085 = vand.u32 %v3658, 4294901760
      %4086 = vmatpush1.msra.mxu0 %v4085
      %4087 = vmatprep.subr.mxu0 0.0
      %v4088 = vand.u32 %v3657, 4294901760
      %4089 = vmatpush1.msra.mxu0 %v4088
      %4090 = vmatprep.subr.mxu0 0.0
      %4091 = vmatpush2.msra.mxu0 0.0
      %4092 = vmatprep.subr.mxu0 0.0
      %4093 = vmatpush2.msra.mxu0 0.0
      %4094 = vmatprep.subr.mxu0 0.0
      %4095 = vmatpush2.msra.mxu0 0.0
      %4096 = vmatprep.subr.mxu0 0.0
      %4097 = vmatpush2.msra.mxu0 0.0
      %4098 = vmatprep.subr.mxu0 0.0
      %4099 = vmatpush2.msra.mxu0 0.0
      %4100 = vmatprep.subr.mxu0 0.0
      %4101 = vmatpush2.msra.mxu0 0.0
      %4102 = vmatprep.subr.mxu0 0.0
      %4103 = vmatpush2.msra.mxu0 0.0
      %4104 = vmatprep.subr.mxu0 0.0
      %4105 = vmatpush2.msra.mxu0 0.0
      %4106 = vmatprep.subr.mxu0 0.0
      %4107 = vmatpush2.msra.mxu0 0.0
      %4108 = vmatprep.subr.mxu0 0.0
      %4109 = vmatpush2.msra.mxu0 0.0
      %4110 = vmatprep.subr.mxu0 0.0
      %4111 = vmatpush2.msra.mxu0 0.0
      %4112 = vmatprep.subr.mxu0 0.0
      %4113 = vmatpush2.msra.mxu0 0.0
      %4114 = vmatprep.subr.mxu0 0.0
      %4115 = vmatpush2.msra.mxu0 0.0
      %4116 = vmatprep.subr.mxu0 0.0
      %4117 = vmatpush2.msra.mxu0 0.0
      %4118 = vmatprep.subr.mxu0 0.0
      %4119 = vmatpush2.msra.mxu0 0.0
      %4120 = vmatprep.subr.mxu0 0.0
      %4121 = vmatpush2.msra.mxu0 0.0
      %4122 = vmatprep.mubr.f32.mxu0 0.0
      %v4123 = vand.u32 %v3654, 4294901760
      %v4124 = vsub.f32 %v3654, %v4123
      %v4125 = vand.u32 %v4124, 4294901760
      %4126 = vmatmul.mubr.f32.gmra.mxu0 %v4125
      %v4127 = vpop.f32.mrf.mxu0
      %v4128 = vadd.f32 %v4032, %v4127
      %v4129 = vpop.f32.mrf.mxu0
      %4130 = vmatprep.mubr.f32.mxu0 0.0
      %v4131 = vand.u32 %v3655, 4294901760
      %v4132 = vsub.f32 %v3655, %v4131
      %v4133 = vand.u32 %v4132, 4294901760
      %4134 = vmatmul.mubr.f32.gmra.mxu0 %v4133
      %v4135 = vpop.f32.mrf.mxu0
      %v4136 = vadd.f32 %v4039, %v4135
      %v4137 = vpop.f32.mrf.mxu0
      %4138 = vdwg.mxu0
      %4139 = vmatprep.subr.mxu0 0.0
      %v4140 = vand.u32 %v3672, 4294901760
      %v4141 = vsub.f32 %v3672, %v4140
      %v4142 = vand.u32 %v4141, 4294901760
      %4143 = vmatpush1.msra.mxu0 %v4142
      %4144 = vmatprep.subr.mxu0 0.0
      %v4145 = vand.u32 %v3671, 4294901760
      %v4146 = vsub.f32 %v3671, %v4145
      %v4147 = vand.u32 %v4146, 4294901760
      %4148 = vmatpush1.msra.mxu0 %v4147
      %4149 = vmatprep.subr.mxu0 0.0
      %v4150 = vand.u32 %v3670, 4294901760
      %v4151 = vsub.f32 %v3670, %v4150
      %v4152 = vand.u32 %v4151, 4294901760
      %4153 = vmatpush1.msra.mxu0 %v4152
      %4154 = vmatprep.subr.mxu0 0.0
      %v4155 = vand.u32 %v3669, 4294901760
      %v4156 = vsub.f32 %v3669, %v4155
      %v4157 = vand.u32 %v4156, 4294901760
      %4158 = vmatpush1.msra.mxu0 %v4157
      %4159 = vmatprep.subr.mxu0 0.0
      %v4160 = vand.u32 %v3668, 4294901760
      %v4161 = vsub.f32 %v3668, %v4160
      %v4162 = vand.u32 %v4161, 4294901760
      %4163 = vmatpush1.msra.mxu0 %v4162
      %4164 = vmatprep.subr.mxu0 0.0
      %v4165 = vand.u32 %v3667, 4294901760
      %v4166 = vsub.f32 %v3667, %v4165
      %v4167 = vand.u32 %v4166, 4294901760
      %4168 = vmatpush1.msra.mxu0 %v4167
      %4169 = vmatprep.subr.mxu0 0.0
      %v4170 = vand.u32 %v3666, 4294901760
      %v4171 = vsub.f32 %v3666, %v4170
      %v4172 = vand.u32 %v4171, 4294901760
      %4173 = vmatpush1.msra.mxu0 %v4172
      %4174 = vmatprep.subr.mxu0 0.0
      %v4175 = vand.u32 %v3665, 4294901760
      %v4176 = vsub.f32 %v3665, %v4175
      %v4177 = vand.u32 %v4176, 4294901760
      %4178 = vmatpush1.msra.mxu0 %v4177
      %4179 = vmatprep.subr.mxu0 0.0
      %v4180 = vand.u32 %v3664, 4294901760
      %v4181 = vsub.f32 %v3664, %v4180
      %v4182 = vand.u32 %v4181, 4294901760
      %4183 = vmatpush1.msra.mxu0 %v4182
      %4184 = vmatprep.subr.mxu0 0.0
      %v4185 = vand.u32 %v3663, 4294901760
      %v4186 = vsub.f32 %v3663, %v4185
      %v4187 = vand.u32 %v4186, 4294901760
      %4188 = vmatpush1.msra.mxu0 %v4187
      %4189 = vmatprep.subr.mxu0 0.0
      %v4190 = vand.u32 %v3662, 4294901760
      %v4191 = vsub.f32 %v3662, %v4190
      %v4192 = vand.u32 %v4191, 4294901760
      %4193 = vmatpush1.msra.mxu0 %v4192
      %4194 = vmatprep.subr.mxu0 0.0
      %v4195 = vand.u32 %v3661, 4294901760
      %v4196 = vsub.f32 %v3661, %v4195
      %v4197 = vand.u32 %v4196, 4294901760
      %4198 = vmatpush1.msra.mxu0 %v4197
      %4199 = vmatprep.subr.mxu0 0.0
      %v4200 = vand.u32 %v3660, 4294901760
      %v4201 = vsub.f32 %v3660, %v4200
      %v4202 = vand.u32 %v4201, 4294901760
      %4203 = vmatpush1.msra.mxu0 %v4202
      %4204 = vmatprep.subr.mxu0 0.0
      %v4205 = vand.u32 %v3659, 4294901760
      %v4206 = vsub.f32 %v3659, %v4205
      %v4207 = vand.u32 %v4206, 4294901760
      %4208 = vmatpush1.msra.mxu0 %v4207
      %4209 = vmatprep.subr.mxu0 0.0
      %v4210 = vand.u32 %v3658, 4294901760
      %v4211 = vsub.f32 %v3658, %v4210
      %v4212 = vand.u32 %v4211, 4294901760
      %4213 = vmatpush1.msra.mxu0 %v4212
      %4214 = vmatprep.subr.mxu0 0.0
      %v4215 = vand.u32 %v3657, 4294901760
      %v4216 = vsub.f32 %v3657, %v4215
      %v4217 = vand.u32 %v4216, 4294901760
      %4218 = vmatpush1.msra.mxu0 %v4217
      %4219 = vmatprep.subr.mxu0 0.0
      %4220 = vmatpush2.msra.mxu0 0.0
      %4221 = vmatprep.subr.mxu0 0.0
      %4222 = vmatpush2.msra.mxu0 0.0
      %4223 = vmatprep.subr.mxu0 0.0
      %4224 = vmatpush2.msra.mxu0 0.0
      %4225 = vmatprep.subr.mxu0 0.0
      %4226 = vmatpush2.msra.mxu0 0.0
      %4227 = vmatprep.subr.mxu0 0.0
      %4228 = vmatpush2.msra.mxu0 0.0
      %4229 = vmatprep.subr.mxu0 0.0
      %4230 = vmatpush2.msra.mxu0 0.0
      %4231 = vmatprep.subr.mxu0 0.0
      %4232 = vmatpush2.msra.mxu0 0.0
      %4233 = vmatprep.subr.mxu0 0.0
      %4234 = vmatpush2.msra.mxu0 0.0
      %4235 = vmatprep.subr.mxu0 0.0
      %4236 = vmatpush2.msra.mxu0 0.0
      %4237 = vmatprep.subr.mxu0 0.0
      %4238 = vmatpush2.msra.mxu0 0.0
      %4239 = vmatprep.subr.mxu0 0.0
      %4240 = vmatpush2.msra.mxu0 0.0
      %4241 = vmatprep.subr.mxu0 0.0
      %4242 = vmatpush2.msra.mxu0 0.0
      %4243 = vmatprep.subr.mxu0 0.0
      %4244 = vmatpush2.msra.mxu0 0.0
      %4245 = vmatprep.subr.mxu0 0.0
      %4246 = vmatpush2.msra.mxu0 0.0
      %4247 = vmatprep.subr.mxu0 0.0
      %4248 = vmatpush2.msra.mxu0 0.0
      %4249 = vmatprep.subr.mxu0 0.0
      %4250 = vmatpush2.msra.mxu0 0.0
      %4251 = vmatprep.mubr.f32.mxu0 0.0
      %v4252 = vand.u32 %v3654, 4294901760
      %4253 = vmatmul.mubr.f32.gmra.mxu0 %v4252
      %v4254 = vpop.f32.mrf.mxu0
      %v4255 = vadd.f32 %v4128, %v4254
      %v4256 = vpop.f32.mrf.mxu0
      %4257 = vmatprep.mubr.f32.mxu0 0.0
      %v4258 = vand.u32 %v3655, 4294901760
      %4259 = vmatmul.mubr.f32.gmra.mxu0 %v4258
      %v4260 = vpop.f32.mrf.mxu0
      %v4261 = vadd.f32 %v4136, %v4260
      %v4262 = vpop.f32.mrf.mxu0
      %4263 = vdwg.mxu0
      %4264 = vmatprep.subr.mxu0 0.0
      %v4265 = vand.u32 %v3672, 4294901760
      %4266 = vmatpush1.msra.mxu0 %v4265
      %4267 = vmatprep.subr.mxu0 0.0
      %v4268 = vand.u32 %v3671, 4294901760
      %4269 = vmatpush1.msra.mxu0 %v4268
      %4270 = vmatprep.subr.mxu0 0.0
      %v4271 = vand.u32 %v3670, 4294901760
      %4272 = vmatpush1.msra.mxu0 %v4271
      %4273 = vmatprep.subr.mxu0 0.0
      %v4274 = vand.u32 %v3669, 4294901760
      %4275 = vmatpush1.msra.mxu0 %v4274
      %4276 = vmatprep.subr.mxu0 0.0
      %v4277 = vand.u32 %v3668, 4294901760
      %4278 = vmatpush1.msra.mxu0 %v4277
      %4279 = vmatprep.subr.mxu0 0.0
      %v4280 = vand.u32 %v3667, 4294901760
      %4281 = vmatpush1.msra.mxu0 %v4280
      %4282 = vmatprep.subr.mxu0 0.0
      %v4283 = vand.u32 %v3666, 4294901760
      %4284 = vmatpush1.msra.mxu0 %v4283
      %4285 = vmatprep.subr.mxu0 0.0
      %v4286 = vand.u32 %v3665, 4294901760
      %4287 = vmatpush1.msra.mxu0 %v4286
      %4288 = vmatprep.subr.mxu0 0.0
      %v4289 = vand.u32 %v3664, 4294901760
      %4290 = vmatpush1.msra.mxu0 %v4289
      %4291 = vmatprep.subr.mxu0 0.0
      %v4292 = vand.u32 %v3663, 4294901760
      %4293 = vmatpush1.msra.mxu0 %v4292
      %4294 = vmatprep.subr.mxu0 0.0
      %v4295 = vand.u32 %v3662, 4294901760
      %4296 = vmatpush1.msra.mxu0 %v4295
      %4297 = vmatprep.subr.mxu0 0.0
      %v4298 = vand.u32 %v3661, 4294901760
      %4299 = vmatpush1.msra.mxu0 %v4298
      %4300 = vmatprep.subr.mxu0 0.0
      %v4301 = vand.u32 %v3660, 4294901760
      %4302 = vmatpush1.msra.mxu0 %v4301
      %4303 = vmatprep.subr.mxu0 0.0
      %v4304 = vand.u32 %v3659, 4294901760
      %4305 = vmatpush1.msra.mxu0 %v4304
      %4306 = vmatprep.subr.mxu0 0.0
      %v4307 = vand.u32 %v3658, 4294901760
      %4308 = vmatpush1.msra.mxu0 %v4307
      %4309 = vmatprep.subr.mxu0 0.0
      %v4310 = vand.u32 %v3657, 4294901760
      %4311 = vmatpush1.msra.mxu0 %v4310
      %4312 = vmatprep.subr.mxu0 0.0
      %4313 = vmatpush2.msra.mxu0 0.0
      %4314 = vmatprep.subr.mxu0 0.0
      %4315 = vmatpush2.msra.mxu0 0.0
      %4316 = vmatprep.subr.mxu0 0.0
      %4317 = vmatpush2.msra.mxu0 0.0
      %4318 = vmatprep.subr.mxu0 0.0
      %4319 = vmatpush2.msra.mxu0 0.0
      %4320 = vmatprep.subr.mxu0 0.0
      %4321 = vmatpush2.msra.mxu0 0.0
      %4322 = vmatprep.subr.mxu0 0.0
      %4323 = vmatpush2.msra.mxu0 0.0
      %4324 = vmatprep.subr.mxu0 0.0
      %4325 = vmatpush2.msra.mxu0 0.0
      %4326 = vmatprep.subr.mxu0 0.0
      %4327 = vmatpush2.msra.mxu0 0.0
      %4328 = vmatprep.subr.mxu0 0.0
      %4329 = vmatpush2.msra.mxu0 0.0
      %4330 = vmatprep.subr.mxu0 0.0
      %4331 = vmatpush2.msra.mxu0 0.0
      %4332 = vmatprep.subr.mxu0 0.0
      %4333 = vmatpush2.msra.mxu0 0.0
      %4334 = vmatprep.subr.mxu0 0.0
      %4335 = vmatpush2.msra.mxu0 0.0
      %4336 = vmatprep.subr.mxu0 0.0
      %4337 = vmatpush2.msra.mxu0 0.0
      %4338 = vmatprep.subr.mxu0 0.0
      %4339 = vmatpush2.msra.mxu0 0.0
      %4340 = vmatprep.subr.mxu0 0.0
      %4341 = vmatpush2.msra.mxu0 0.0
      %4342 = vmatprep.subr.mxu0 0.0
      %4343 = vmatpush2.msra.mxu0 0.0
      %4344 = vmatprep.mubr.f32.mxu0 0.0
      %v4345 = vand.u32 %v3654, 4294901760
      %4346 = vmatmul.mubr.f32.gmra.mxu0 %v4345
      %v4347 = vpop.f32.mrf.mxu0
      %v4348 = vadd.f32 %v4255, %v4347
      %v4349 = vpop.f32.mrf.mxu0
      %4350 = vmatprep.mubr.f32.mxu0 0.0
      %v4351 = vand.u32 %v3655, 4294901760
      %4352 = vmatmul.mubr.f32.gmra.mxu0 %v4351
      %v4353 = vpop.f32.mrf.mxu0
      %v4354 = vadd.f32 %v4261, %v4353
      %v4355 = vpop.f32.mrf.mxu0
      %4356 = vdwg.mxu0
      %v4357 = vadd.f32 %v3652, %v4348
      %v4358 = vadd.f32 %v3653, %v4354
      %v4359 = vld [vmem:[%s4] sm:$0x1]
      %v4361 = vlaneseq
      %v4362 = vshrl.u32 %v4361, 7
      %v4363 = vsub.s32 0, %v4362
      %v4364 = vrot.slane %v4359, %v4363
      %v4366 = vadd.f32 %v4357, %v4364
      %v4367 = vadd.f32 %v4358, %v4364
      %vm4368 = vcmp.ge.f32.partialorder %v4366, 0.0
      %vm4369 = vcmp.ge.f32.partialorder %v4367, 0.0
      %v4370 = vmul.f32 %v4366, 0.01
      %v4371 = vmul.f32 %v4367, 0.01
      %v4372 = vsel %vm4368, %v4366, %v4370
      %v4373 = vsel %vm4369, %v4367, %v4371
      %4374 = vst [vmem:[%s224] sm:$0xff] %v4372
      %4375 = vst [vmem:[%s224 + $0x8] sm:$0xff] %v4373
      %p4376 = scmp.lt.s32.totalorder %s16, 1
      %s4377 = scalar_select %p4376, %s16, 1
      %s4378 = smul.addr %s4377, 2
      %s4379 = smul.addr %s4378, 8
      %s4380 = scalar_lea.vmem %s5, %s4379
      // Predicated region
      $region41: #{ssconv_forward.1} parent=39 // pred_check
        %p4381 = pneg %p144
      $region42: #{ssconv_forward.1} parent=39 // pred_check_branch
        %4383 = sbr.rel (%p4381) target = $region44
      $region43: #{ssconv_forward.1} parent=39 // pred_region
        _
      $region44: #{ssconv_forward.1} parent=39 // pred_fallthru
        _
    $region40: #{ssconv_forward.1} parent=5 // pred_fallthru
      _
    %p4384 = scmp.le.s32.totalorder 2, %s11
    // Predicated region
    $region45: #{ssconv_forward.1} parent=5 // pred_check
      %p4385 = pneg %p4384
    $region46: #{ssconv_forward.1} parent=5 // pred_check_branch
      %4387 = sbr.rel (%p4385) target = $region48
    $region47: #{ssconv_forward.1} parent=5 // pred_region
      %s4388 = ssub.s32 %s11, 2
      // Predicated region
      $region49: #{ssconv_forward.1} parent=47 // pred_check
        %p4389 = pneg %p150
      $region50: #{ssconv_forward.1} parent=47 // pred_check_branch
        %4391 = sbr.rel (%p4389) target = $region52
      $region51: #{ssconv_forward.1} parent=47 // pred_region
        %p4392 = scmp.lt.s32.totalorder %s17, 1
        %s4393 = scalar_select %p4392, %s17, 1
        %s4394 = smul.addr %s4393, 2
        %s4395 = smul.addr %s4394, 8
        %s4396 = scalar_lea.vmem %s5, %s4395
      $region52: #{ssconv_forward.1} parent=47 // pred_fallthru
        _
    $region48: #{ssconv_forward.1} parent=5 // pred_fallthru
      _
  $region6: #{ssconv_forward.1} parent=0 // loop_footer
    %s15 = sadd.s32 1, %s11
  $region7: #{ssconv_forward.1} parent=0 // loop_footer_branch
    %10 = sbr.rel target = $region3
  $region8: #{ssconv_forward.1} parent=0 // loop_exit
    _

</llo_original>
